<compile_context>
chip_gen: v7x
topology: tpu7x:2x2x1
jax: 0.10.0
libtpu: 0.0.40
codegen_flags: <defaults>
</compile_context>

<pallas_src>
import math

import jax
import jax.numpy as jnp
import numpy as np
from jax.experimental import pallas as pl
from jax.experimental.pallas import tpu as pltpu

CIN = 64    # self.filters
COUT = 3    # self.channel


def _make_decoder_kernel(H, W, Wp, Cin, Cout, ksizes, dpads):
    """Build the fused kernel body for fixed static shapes."""
    HWp = H * Wp
    k1, k2, k3 = ksizes
    d1, d2, d3 = dpads

    def _conv(x_ref, w_ref, y_ref, K, d):
        # x_ref: (1, Cin, Hp*Wp)  w_ref: (K*K*Cout, Cin)  y_ref: (K*K*Cout, Hp*Wp)
        # One wide, lane-dense MXU matmul computes every tap's contribution.
        y_ref[...] = jnp.dot(w_ref[...], x_ref[0],
                             preferred_element_type=jnp.float32)
        # Tap reduction: shifted static slices of the small per-tap rows.
        acc = jnp.zeros((Cout, HWp), jnp.float32)
        for kh in range(K):
            for kw in range(K):
                t = kh * K + kw
                s = (kh + d) * Wp + (kw + d)      # lane shift for this tap
                acc = acc + y_ref[t * Cout:(t + 1) * Cout, s:s + HWp]
        return acc

    def kernel(x1_ref, x2_ref, x3_ref, w1_ref, w2_ref, w3_ref,
               o_ref, o1_ref, o2_ref, o3_ref,
               y1_ref, y2_ref, y3_ref):
        r1 = _conv(x1_ref, w1_ref, y1_ref, k1, d1)
        r2 = _conv(x2_ref, w2_ref, y2_ref, k2, d2)
        r3 = _conv(x3_ref, w3_ref, y3_ref, k3, d3)
        o1_ref[0] = r1.astype(o1_ref.dtype)
        o2_ref[0] = r2.astype(o2_ref.dtype)
        o3_ref[0] = r3.astype(o3_ref.dtype)
        o_ref[0] = (r1 + r2 + r3).astype(o_ref.dtype)

    return kernel


@jax.jit
def decoder_forward(z1, z2, z3, w1_hwio, w2_hwio, w3_hwio):
    """Mirrors decoder.forward: returns (rec_x, rec_x1, rec_x2, rec_x3), NCHW."""
    N, Cin, H, W = z1.shape
    Cout = w1_hwio.shape[-1]
    ksizes = (w1_hwio.shape[0], w2_hwio.shape[0], w3_hwio.shape[0])
    P = max(k // 2 for k in ksizes)               # common halo (=3)
    dpads = tuple(P - k // 2 for k in ksizes)     # per-conv offset inside halo

    Hp = H + 2 * P + 1          # +1 extra zero row so tap slices never run OOB
    Wp = W + 2 * P
    HpWp = Hp * Wp
    HWp = H * Wp

    def prep(z):
        # NCHW is consumed directly: only a zero pad + flatten, no transpose.
        zp = jnp.pad(z, ((0, 0), (0, 0), (P, P + 1), (P, P)))
        return zp.reshape(N, Cin, HpWp)

    def pack_w(w):
        # HWIO (K,K,Cin,Cout) -> (K*K*Cout, Cin); row = (kh*K + kw)*Cout + cout
        K = w.shape[0]
        return jnp.transpose(w, (0, 1, 3, 2)).reshape(K * K * Cout, Cin)

    x1, x2, x3 = prep(z1), prep(z2), prep(z3)
    wp1, wp2, wp3 = pack_w(w1_hwio), pack_w(w2_hwio), pack_w(w3_hwio)
    kkc = (wp1.shape[0], wp2.shape[0], wp3.shape[0])

    kernel = _make_decoder_kernel(H, W, Wp, Cin, Cout, ksizes, dpads)

    x_spec = pl.BlockSpec((1, Cin, HpWp), lambda n: (n, 0, 0))

    def w_spec(wpk):
        return pl.BlockSpec(wpk.shape, lambda n: (0, 0))

    out_spec = pl.BlockSpec((1, Cout, HWp), lambda n: (n, 0, 0))
    out_shape = jax.ShapeDtypeStruct((N, Cout, HWp), z1.dtype)

    flops = 2 * N * HpWp * Cin * sum(kkc)
    bytes_accessed = 4 * (3 * N * Cin * HpWp + Cin * sum(kkc)
                          + 4 * N * Cout * HWp)

    outs = pl.pallas_call(
        kernel,
        out_shape=(out_shape,) * 4,
        grid_spec=pltpu.PrefetchScalarGridSpec(
            num_scalar_prefetch=0,
            grid=(N,),
            in_specs=[x_spec, x_spec, x_spec,
                      w_spec(wp1), w_spec(wp2), w_spec(wp3)],
            out_specs=[out_spec] * 4,
            scratch_shapes=[pltpu.VMEM((kkc[0], HpWp), jnp.float32),
                            pltpu.VMEM((kkc[1], HpWp), jnp.float32),
                            pltpu.VMEM((kkc[2], HpWp), jnp.float32)],
        ),
        compiler_params=pltpu.CompilerParams(
            dimension_semantics=("parallel",)),
        cost_estimate=pl.CostEstimate(flops=flops, transcendentals=0,
                                      bytes_accessed=bytes_accessed),
    )(x1, x2, x3, wp1, wp2, wp3)

    # Kernel output is already channel-major (N, Cout, H*Wp): just drop the
    # W-halo columns.  No transpose needed.
    def finish(o):
        return o.reshape(N, Cout, H, Wp)[:, :, :, :W]

    return tuple(finish(o) for o in outs)


def xavier_uniform_hwio(key, K, cin, cout, dtype=jnp.float32):
    # matches nn.init.xavier_uniform_ on a (cout, cin, K, K) conv weight
    fan_in = cin * K * K
    fan_out = cout * K * K
    bound = math.sqrt(6.0 / (fan_in + fan_out))
    return jax.random.uniform(key, (K, K, cin, cout), dtype,
                              minval=-bound, maxval=bound)


def _reference_conv(z_nchw, w_hwio):
    z = jnp.transpose(z_nchw, (0, 2, 3, 1))
    K = w_hwio.shape[0]
    out = jax.lax.conv_general_dilated(
        z, w_hwio, window_strides=(1, 1),
        padding=((K // 2, K // 2), (K // 2, K // 2)),
        dimension_numbers=("NHWC", "HWIO", "NHWC"))
    return jnp.transpose(out, (0, 3, 1, 2))


if __name__ == "__main__":
    key = jax.random.PRNGKey(0)
    k_z1, k_z2, k_z3, k_w1, k_w2, k_w3 = jax.random.split(key, 6)

    N, H, W = 2, 16, 16
    z1 = jax.random.normal(k_z1, (N, CIN, H, W), jnp.float32)
    z2 = jax.random.normal(k_z2, (N, CIN, H, W), jnp.float32)
    z3 = jax.random.normal(k_z3, (N, CIN, H, W), jnp.float32)

    w1 = xavier_uniform_hwio(k_w1, 7, CIN, COUT)
    w2 = xavier_uniform_hwio(k_w2, 5, CIN, COUT)
    w3 = xavier_uniform_hwio(k_w3, 3, CIN, COUT)

    rec_x, rec_x1, rec_x2, rec_x3 = jax.block_until_ready(
        decoder_forward(z1, z2, z3, w1, w2, w3))

    # sanity check against XLA's conv
    ref1 = _reference_conv(z1, w1)
    ref2 = _reference_conv(z2, w2)
    ref3 = _reference_conv(z3, w3)
    np.testing.assert_allclose(np.asarray(rec_x1), np.asarray(ref1), rtol=1e-4, atol=1e-4)
    np.testing.assert_allclose(np.asarray(rec_x2), np.asarray(ref2), rtol=1e-4, atol=1e-4)
    np.testing.assert_allclose(np.asarray(rec_x3), np.asarray(ref3), rtol=1e-4, atol=1e-4)
    np.testing.assert_allclose(np.asarray(rec_x),
                               np.asarray(ref1 + ref2 + ref3), rtol=1e-4, atol=1e-4)

    print("KERNEL_OK")
</pallas_src>

<mosaic_0001>
module attributes {stable_mosaic.version = 11 : i64} {
  func.func @kernel(%arg0: i32, %arg1: memref<1x64x506xf32, #tpu.memory_space<vmem>>, %arg2: memref<1x64x506xf32, #tpu.memory_space<vmem>>, %arg3: memref<1x64x506xf32, #tpu.memory_space<vmem>>, %arg4: memref<147x64xf32, #tpu.memory_space<vmem>>, %arg5: memref<75x64xf32, #tpu.memory_space<vmem>>, %arg6: memref<27x64xf32, #tpu.memory_space<vmem>>, %arg7: memref<1x3x352xf32, #tpu.memory_space<vmem>>, %arg8: memref<1x3x352xf32, #tpu.memory_space<vmem>>, %arg9: memref<1x3x352xf32, #tpu.memory_space<vmem>>, %arg10: memref<1x3x352xf32, #tpu.memory_space<vmem>>, %arg11: memref<147x506xf32, #tpu.memory_space<vmem>>, %arg12: memref<75x506xf32, #tpu.memory_space<vmem>>, %arg13: memref<27x506xf32, #tpu.memory_space<vmem>>) attributes {dimension_semantics = [#tpu.dimension_semantics<parallel>], iteration_bounds = array<i64: 2>, scalar_prefetch = 0 : i64, scratch_operands = 3 : i64, tpu.core_type = #tpu.core_type<tc>, window_params = [{transform_indices = @transform_0, window_bounds = array<i64: 1, 64, 506>}, {transform_indices = @transform_1, window_bounds = array<i64: 1, 64, 506>}, {transform_indices = @transform_2, window_bounds = array<i64: 1, 64, 506>}, {pipeline_mode = #tpu.pipeline_mode<synchronous>, transform_indices = @transform_3, window_bounds = array<i64: 147, 64>}, {pipeline_mode = #tpu.pipeline_mode<synchronous>, transform_indices = @transform_4, window_bounds = array<i64: 75, 64>}, {pipeline_mode = #tpu.pipeline_mode<synchronous>, transform_indices = @transform_5, window_bounds = array<i64: 27, 64>}, {transform_indices = @transform_6, window_bounds = array<i64: 1, 3, 352>}, {transform_indices = @transform_7, window_bounds = array<i64: 1, 3, 352>}, {transform_indices = @transform_8, window_bounds = array<i64: 1, 3, 352>}, {transform_indices = @transform_9, window_bounds = array<i64: 1, 3, 352>}]} {
    %c0 = arith.constant 0 : index
    %c0_0 = arith.constant 0 : index
    %0 = vector.load %arg4[%c0, %c0_0] : memref<147x64xf32, #tpu.memory_space<vmem>>, vector<147x64xf32>
    %c0_1 = arith.constant 0 : index
    %c0_2 = arith.constant 0 : index
    %c0_3 = arith.constant 0 : index
    %1 = vector.load %arg1[%c0_1, %c0_2, %c0_3] : memref<1x64x506xf32, #tpu.memory_space<vmem>>, vector<1x64x506xf32>
    %2 = vector.shape_cast %1 : vector<1x64x506xf32> to vector<64x506xf32>
    %cst = arith.constant dense<0.000000e+00> : vector<147x506xf32>
    %3 = tpu.matmul %0, %2, %cst {dimension_numbers = #tpu.dot_dimension_numbers<[1], [0], [0], [1], [0, 0, 1, 1], [], []>} : vector<147x64xf32>, vector<64x506xf32>, vector<147x506xf32> -> vector<147x506xf32>
    %c0_4 = arith.constant 0 : index
    %c0_5 = arith.constant 0 : index
    %4 = vector.load %arg11[%c0_4, %c0_5] : memref<147x506xf32, #tpu.memory_space<vmem>>, vector<147x506xf32>
    tpu.vector_store %arg11[%c0_4, %c0_5], %3 {strides = array<i32>} : memref<147x506xf32, #tpu.memory_space<vmem>>, vector<147x506xf32>,
    %cst_6 = arith.constant 0.000000e+00 : f32
    %5 = vector.broadcast %cst_6 : f32 to vector<3x352xf32>
    %c0_7 = arith.constant 0 : index
    %c0_8 = arith.constant 0 : index
    %6 = vector.load %arg11[%c0_7, %c0_8] : memref<147x506xf32, #tpu.memory_space<vmem>>, vector<3x352xf32>
    %7 = arith.addf %5, %6 : vector<3x352xf32>
    %c3 = arith.constant 3 : index
    %c1 = arith.constant 1 : index
    %8 = vector.load %arg11[%c3, %c1] : memref<147x506xf32, #tpu.memory_space<vmem>>, vector<3x352xf32>
    %9 = arith.addf %7, %8 : vector<3x352xf32>
    %c6 = arith.constant 6 : index
    %c2 = arith.constant 2 : index
    %10 = vector.load %arg11[%c6, %c2] : memref<147x506xf32, #tpu.memory_space<vmem>>, vector<3x352xf32>
    %11 = arith.addf %9, %10 : vector<3x352xf32>
    %c9 = arith.constant 9 : index
    %c3_9 = arith.constant 3 : index
    %12 = vector.load %arg11[%c9, %c3_9] : memref<147x506xf32, #tpu.memory_space<vmem>>, vector<3x352xf32>
    %13 = arith.addf %11, %12 : vector<3x352xf32>
    %c12 = arith.constant 12 : index
    %c4 = arith.constant 4 : index
    %14 = vector.load %arg11[%c12, %c4] : memref<147x506xf32, #tpu.memory_space<vmem>>, vector<3x352xf32>
    %15 = arith.addf %13, %14 : vector<3x352xf32>
    %c15 = arith.constant 15 : index
    %c5 = arith.constant 5 : index
    %16 = vector.load %arg11[%c15, %c5] : memref<147x506xf32, #tpu.memory_space<vmem>>, vector<3x352xf32>
    %17 = arith.addf %15, %16 : vector<3x352xf32>
    %c18 = arith.constant 18 : index
    %c6_10 = arith.constant 6 : index
    %18 = vector.load %arg11[%c18, %c6_10] : memref<147x506xf32, #tpu.memory_space<vmem>>, vector<3x352xf32>
    %19 = arith.addf %17, %18 : vector<3x352xf32>
    %c21 = arith.constant 21 : index
    %c22 = arith.constant 22 : index
    %20 = vector.load %arg11[%c21, %c22] : memref<147x506xf32, #tpu.memory_space<vmem>>, vector<3x352xf32>
    %21 = arith.addf %19, %20 : vector<3x352xf32>
    %c24 = arith.constant 24 : index
    %c23 = arith.constant 23 : index
    %22 = vector.load %arg11[%c24, %c23] : memref<147x506xf32, #tpu.memory_space<vmem>>, vector<3x352xf32>
    %23 = arith.addf %21, %22 : vector<3x352xf32>
    %c27 = arith.constant 27 : index
    %c24_11 = arith.constant 24 : index
    %24 = vector.load %arg11[%c27, %c24_11] : memref<147x506xf32, #tpu.memory_space<vmem>>, vector<3x352xf32>
    %25 = arith.addf %23, %24 : vector<3x352xf32>
    %c30 = arith.constant 30 : index
    %c25 = arith.constant 25 : index
    %26 = vector.load %arg11[%c30, %c25] : memref<147x506xf32, #tpu.memory_space<vmem>>, vector<3x352xf32>
    %27 = arith.addf %25, %26 : vector<3x352xf32>
    %c33 = arith.constant 33 : index
    %c26 = arith.constant 26 : index
    %28 = vector.load %arg11[%c33, %c26] : memref<147x506xf32, #tpu.memory_space<vmem>>, vector<3x352xf32>
    %29 = arith.addf %27, %28 : vector<3x352xf32>
    %c36 = arith.constant 36 : index
    %c27_12 = arith.constant 27 : index
    %30 = vector.load %arg11[%c36, %c27_12] : memref<147x506xf32, #tpu.memory_space<vmem>>, vector<3x352xf32>
    %31 = arith.addf %29, %30 : vector<3x352xf32>
    %c39 = arith.constant 39 : index
    %c28 = arith.constant 28 : index
    %32 = vector.load %arg11[%c39, %c28] : memref<147x506xf32, #tpu.memory_space<vmem>>, vector<3x352xf32>
    %33 = arith.addf %31, %32 : vector<3x352xf32>
    %c42 = arith.constant 42 : index
    %c44 = arith.constant 44 : index
    %34 = vector.load %arg11[%c42, %c44] : memref<147x506xf32, #tpu.memory_space<vmem>>, vector<3x352xf32>
    %35 = arith.addf %33, %34 : vector<3x352xf32>
    %c45 = arith.constant 45 : index
    %c45_13 = arith.constant 45 : index
    %36 = vector.load %arg11[%c45, %c45_13] : memref<147x506xf32, #tpu.memory_space<vmem>>, vector<3x352xf32>
    %37 = arith.addf %35, %36 : vector<3x352xf32>
    %c48 = arith.constant 48 : index
    %c46 = arith.constant 46 : index
    %38 = vector.load %arg11[%c48, %c46] : memref<147x506xf32, #tpu.memory_space<vmem>>, vector<3x352xf32>
    %39 = arith.addf %37, %38 : vector<3x352xf32>
    %c51 = arith.constant 51 : index
    %c47 = arith.constant 47 : index
    %40 = vector.load %arg11[%c51, %c47] : memref<147x506xf32, #tpu.memory_space<vmem>>, vector<3x352xf32>
    %41 = arith.addf %39, %40 : vector<3x352xf32>
    %c54 = arith.constant 54 : index
    %c48_14 = arith.constant 48 : index
    %42 = vector.load %arg11[%c54, %c48_14] : memref<147x506xf32, #tpu.memory_space<vmem>>, vector<3x352xf32>
    %43 = arith.addf %41, %42 : vector<3x352xf32>
    %c57 = arith.constant 57 : index
    %c49 = arith.constant 49 : index
    %44 = vector.load %arg11[%c57, %c49] : memref<147x506xf32, #tpu.memory_space<vmem>>, vector<3x352xf32>
    %45 = arith.addf %43, %44 : vector<3x352xf32>
    %c60 = arith.constant 60 : index
    %c50 = arith.constant 50 : index
    %46 = vector.load %arg11[%c60, %c50] : memref<147x506xf32, #tpu.memory_space<vmem>>, vector<3x352xf32>
    %47 = arith.addf %45, %46 : vector<3x352xf32>
    %c63 = arith.constant 63 : index
    %c66 = arith.constant 66 : index
    %48 = vector.load %arg11[%c63, %c66] : memref<147x506xf32, #tpu.memory_space<vmem>>, vector<3x352xf32>
    %49 = arith.addf %47, %48 : vector<3x352xf32>
    %c66_15 = arith.constant 66 : index
    %c67 = arith.constant 67 : index
    %50 = vector.load %arg11[%c66_15, %c67] : memref<147x506xf32, #tpu.memory_space<vmem>>, vector<3x352xf32>
    %51 = arith.addf %49, %50 : vector<3x352xf32>
    %c69 = arith.constant 69 : index
    %c68 = arith.constant 68 : index
    %52 = vector.load %arg11[%c69, %c68] : memref<147x506xf32, #tpu.memory_space<vmem>>, vector<3x352xf32>
    %53 = arith.addf %51, %52 : vector<3x352xf32>
    %c72 = arith.constant 72 : index
    %c69_16 = arith.constant 69 : index
    %54 = vector.load %arg11[%c72, %c69_16] : memref<147x506xf32, #tpu.memory_space<vmem>>, vector<3x352xf32>
    %55 = arith.addf %53, %54 : vector<3x352xf32>
    %c75 = arith.constant 75 : index
    %c70 = arith.constant 70 : index
    %56 = vector.load %arg11[%c75, %c70] : memref<147x506xf32, #tpu.memory_space<vmem>>, vector<3x352xf32>
    %57 = arith.addf %55, %56 : vector<3x352xf32>
    %c78 = arith.constant 78 : index
    %c71 = arith.constant 71 : index
    %58 = vector.load %arg11[%c78, %c71] : memref<147x506xf32, #tpu.memory_space<vmem>>, vector<3x352xf32>
    %59 = arith.addf %57, %58 : vector<3x352xf32>
    %c81 = arith.constant 81 : index
    %c72_17 = arith.constant 72 : index
    %60 = vector.load %arg11[%c81, %c72_17] : memref<147x506xf32, #tpu.memory_space<vmem>>, vector<3x352xf32>
    %61 = arith.addf %59, %60 : vector<3x352xf32>
    %c84 = arith.constant 84 : index
    %c88 = arith.constant 88 : index
    %62 = vector.load %arg11[%c84, %c88] : memref<147x506xf32, #tpu.memory_space<vmem>>, vector<3x352xf32>
    %63 = arith.addf %61, %62 : vector<3x352xf32>
    %c87 = arith.constant 87 : index
    %c89 = arith.constant 89 : index
    %64 = vector.load %arg11[%c87, %c89] : memref<147x506xf32, #tpu.memory_space<vmem>>, vector<3x352xf32>
    %65 = arith.addf %63, %64 : vector<3x352xf32>
    %c90 = arith.constant 90 : index
    %c90_18 = arith.constant 90 : index
    %66 = vector.load %arg11[%c90, %c90_18] : memref<147x506xf32, #tpu.memory_space<vmem>>, vector<3x352xf32>
    %67 = arith.addf %65, %66 : vector<3x352xf32>
    %c93 = arith.constant 93 : index
    %c91 = arith.constant 91 : index
    %68 = vector.load %arg11[%c93, %c91] : memref<147x506xf32, #tpu.memory_space<vmem>>, vector<3x352xf32>
    %69 = arith.addf %67, %68 : vector<3x352xf32>
    %c96 = arith.constant 96 : index
    %c92 = arith.constant 92 : index
    %70 = vector.load %arg11[%c96, %c92] : memref<147x506xf32, #tpu.memory_space<vmem>>, vector<3x352xf32>
    %71 = arith.addf %69, %70 : vector<3x352xf32>
    %c99 = arith.constant 99 : index
    %c93_19 = arith.constant 93 : index
    %72 = vector.load %arg11[%c99, %c93_19] : memref<147x506xf32, #tpu.memory_space<vmem>>, vector<3x352xf32>
    %73 = arith.addf %71, %72 : vector<3x352xf32>
    %c102 = arith.constant 102 : index
    %c94 = arith.constant 94 : index
    %74 = vector.load %arg11[%c102, %c94] : memref<147x506xf32, #tpu.memory_space<vmem>>, vector<3x352xf32>
    %75 = arith.addf %73, %74 : vector<3x352xf32>
    %c105 = arith.constant 105 : index
    %c110 = arith.constant 110 : index
    %76 = vector.load %arg11[%c105, %c110] : memref<147x506xf32, #tpu.memory_space<vmem>>, vector<3x352xf32>
    %77 = arith.addf %75, %76 : vector<3x352xf32>
    %c108 = arith.constant 108 : index
    %c111 = arith.constant 111 : index
    %78 = vector.load %arg11[%c108, %c111] : memref<147x506xf32, #tpu.memory_space<vmem>>, vector<3x352xf32>
    %79 = arith.addf %77, %78 : vector<3x352xf32>
    %c111_20 = arith.constant 111 : index
    %c112 = arith.constant 112 : index
    %80 = vector.load %arg11[%c111_20, %c112] : memref<147x506xf32, #tpu.memory_space<vmem>>, vector<3x352xf32>
    %81 = arith.addf %79, %80 : vector<3x352xf32>
    %c114 = arith.constant 114 : index
    %c113 = arith.constant 113 : index
    %82 = vector.load %arg11[%c114, %c113] : memref<147x506xf32, #tpu.memory_space<vmem>>, vector<3x352xf32>
    %83 = arith.addf %81, %82 : vector<3x352xf32>
    %c117 = arith.constant 117 : index
    %c114_21 = arith.constant 114 : index
    %84 = vector.load %arg11[%c117, %c114_21] : memref<147x506xf32, #tpu.memory_space<vmem>>, vector<3x352xf32>
    %85 = arith.addf %83, %84 : vector<3x352xf32>
    %c120 = arith.constant 120 : index
    %c115 = arith.constant 115 : index
    %86 = vector.load %arg11[%c120, %c115] : memref<147x506xf32, #tpu.memory_space<vmem>>, vector<3x352xf32>
    %87 = arith.addf %85, %86 : vector<3x352xf32>
    %c123 = arith.constant 123 : index
    %c116 = arith.constant 116 : index
    %88 = vector.load %arg11[%c123, %c116] : memref<147x506xf32, #tpu.memory_space<vmem>>, vector<3x352xf32>
    %89 = arith.addf %87, %88 : vector<3x352xf32>
    %c126 = arith.constant 126 : index
    %c132 = arith.constant 132 : index
    %90 = vector.load %arg11[%c126, %c132] : memref<147x506xf32, #tpu.memory_space<vmem>>, vector<3x352xf32>
    %91 = arith.addf %89, %90 : vector<3x352xf32>
    %c129 = arith.constant 129 : index
    %c133 = arith.constant 133 : index
    %92 = vector.load %arg11[%c129, %c133] : memref<147x506xf32, #tpu.memory_space<vmem>>, vector<3x352xf32>
    %93 = arith.addf %91, %92 : vector<3x352xf32>
    %c132_22 = arith.constant 132 : index
    %c134 = arith.constant 134 : index
    %94 = vector.load %arg11[%c132_22, %c134] : memref<147x506xf32, #tpu.memory_space<vmem>>, vector<3x352xf32>
    %95 = arith.addf %93, %94 : vector<3x352xf32>
    %c135 = arith.constant 135 : index
    %c135_23 = arith.constant 135 : index
    %96 = vector.load %arg11[%c135, %c135_23] : memref<147x506xf32, #tpu.memory_space<vmem>>, vector<3x352xf32>
    %97 = arith.addf %95, %96 : vector<3x352xf32>
    %c138 = arith.constant 138 : index
    %c136 = arith.constant 136 : index
    %98 = vector.load %arg11[%c138, %c136] : memref<147x506xf32, #tpu.memory_space<vmem>>, vector<3x352xf32>
    %99 = arith.addf %97, %98 : vector<3x352xf32>
    %c141 = arith.constant 141 : index
    %c137 = arith.constant 137 : index
    %100 = vector.load %arg11[%c141, %c137] : memref<147x506xf32, #tpu.memory_space<vmem>>, vector<3x352xf32>
    %101 = arith.addf %99, %100 : vector<3x352xf32>
    %c144 = arith.constant 144 : index
    %c138_24 = arith.constant 138 : index
    %102 = vector.load %arg11[%c144, %c138_24] : memref<147x506xf32, #tpu.memory_space<vmem>>, vector<3x352xf32>
    %103 = arith.addf %101, %102 : vector<3x352xf32>
    %c0_25 = arith.constant 0 : index
    %c0_26 = arith.constant 0 : index
    %104 = vector.load %arg5[%c0_25, %c0_26] : memref<75x64xf32, #tpu.memory_space<vmem>>, vector<75x64xf32>
    %c0_27 = arith.constant 0 : index
    %c0_28 = arith.constant 0 : index
    %c0_29 = arith.constant 0 : index
    %105 = vector.load %arg2[%c0_27, %c0_28, %c0_29] : memref<1x64x506xf32, #tpu.memory_space<vmem>>, vector<1x64x506xf32>
    %106 = vector.shape_cast %105 : vector<1x64x506xf32> to vector<64x506xf32>
    %cst_30 = arith.constant dense<0.000000e+00> : vector<75x506xf32>
    %107 = tpu.matmul %104, %106, %cst_30 {dimension_numbers = #tpu.dot_dimension_numbers<[1], [0], [0], [1], [0, 0, 1, 1], [], []>} : vector<75x64xf32>, vector<64x506xf32>, vector<75x506xf32> -> vector<75x506xf32>
    %c0_31 = arith.constant 0 : index
    %c0_32 = arith.constant 0 : index
    %108 = vector.load %arg12[%c0_31, %c0_32] : memref<75x506xf32, #tpu.memory_space<vmem>>, vector<75x506xf32>
    tpu.vector_store %arg12[%c0_31, %c0_32], %107 {strides = array<i32>} : memref<75x506xf32, #tpu.memory_space<vmem>>, vector<75x506xf32>,
    %cst_33 = arith.constant 0.000000e+00 : f32
    %109 = vector.broadcast %cst_33 : f32 to vector<3x352xf32>
    %c0_34 = arith.constant 0 : index
    %c23_35 = arith.constant 23 : index
    %110 = vector.load %arg12[%c0_34, %c23_35] : memref<75x506xf32, #tpu.memory_space<vmem>>, vector<3x352xf32>
    %111 = arith.addf %109, %110 : vector<3x352xf32>
    %c3_36 = arith.constant 3 : index
    %c24_37 = arith.constant 24 : index
    %112 = vector.load %arg12[%c3_36, %c24_37] : memref<75x506xf32, #tpu.memory_space<vmem>>, vector<3x352xf32>
    %113 = arith.addf %111, %112 : vector<3x352xf32>
    %c6_38 = arith.constant 6 : index
    %c25_39 = arith.constant 25 : index
    %114 = vector.load %arg12[%c6_38, %c25_39] : memref<75x506xf32, #tpu.memory_space<vmem>>, vector<3x352xf32>
    %115 = arith.addf %113, %114 : vector<3x352xf32>
    %c9_40 = arith.constant 9 : index
    %c26_41 = arith.constant 26 : index
    %116 = vector.load %arg12[%c9_40, %c26_41] : memref<75x506xf32, #tpu.memory_space<vmem>>, vector<3x352xf32>
    %117 = arith.addf %115, %116 : vector<3x352xf32>
    %c12_42 = arith.constant 12 : index
    %c27_43 = arith.constant 27 : index
    %118 = vector.load %arg12[%c12_42, %c27_43] : memref<75x506xf32, #tpu.memory_space<vmem>>, vector<3x352xf32>
    %119 = arith.addf %117, %118 : vector<3x352xf32>
    %c15_44 = arith.constant 15 : index
    %c45_45 = arith.constant 45 : index
    %120 = vector.load %arg12[%c15_44, %c45_45] : memref<75x506xf32, #tpu.memory_space<vmem>>, vector<3x352xf32>
    %121 = arith.addf %119, %120 : vector<3x352xf32>
    %c18_46 = arith.constant 18 : index
    %c46_47 = arith.constant 46 : index
    %122 = vector.load %arg12[%c18_46, %c46_47] : memref<75x506xf32, #tpu.memory_space<vmem>>, vector<3x352xf32>
    %123 = arith.addf %121, %122 : vector<3x352xf32>
    %c21_48 = arith.constant 21 : index
    %c47_49 = arith.constant 47 : index
    %124 = vector.load %arg12[%c21_48, %c47_49] : memref<75x506xf32, #tpu.memory_space<vmem>>, vector<3x352xf32>
    %125 = arith.addf %123, %124 : vector<3x352xf32>
    %c24_50 = arith.constant 24 : index
    %c48_51 = arith.constant 48 : index
    %126 = vector.load %arg12[%c24_50, %c48_51] : memref<75x506xf32, #tpu.memory_space<vmem>>, vector<3x352xf32>
    %127 = arith.addf %125, %126 : vector<3x352xf32>
    %c27_52 = arith.constant 27 : index
    %c49_53 = arith.constant 49 : index
    %128 = vector.load %arg12[%c27_52, %c49_53] : memref<75x506xf32, #tpu.memory_space<vmem>>, vector<3x352xf32>
    %129 = arith.addf %127, %128 : vector<3x352xf32>
    %c30_54 = arith.constant 30 : index
    %c67_55 = arith.constant 67 : index
    %130 = vector.load %arg12[%c30_54, %c67_55] : memref<75x506xf32, #tpu.memory_space<vmem>>, vector<3x352xf32>
    %131 = arith.addf %129, %130 : vector<3x352xf32>
    %c33_56 = arith.constant 33 : index
    %c68_57 = arith.constant 68 : index
    %132 = vector.load %arg12[%c33_56, %c68_57] : memref<75x506xf32, #tpu.memory_space<vmem>>, vector<3x352xf32>
    %133 = arith.addf %131, %132 : vector<3x352xf32>
    %c36_58 = arith.constant 36 : index
    %c69_59 = arith.constant 69 : index
    %134 = vector.load %arg12[%c36_58, %c69_59] : memref<75x506xf32, #tpu.memory_space<vmem>>, vector<3x352xf32>
    %135 = arith.addf %133, %134 : vector<3x352xf32>
    %c39_60 = arith.constant 39 : index
    %c70_61 = arith.constant 70 : index
    %136 = vector.load %arg12[%c39_60, %c70_61] : memref<75x506xf32, #tpu.memory_space<vmem>>, vector<3x352xf32>
    %137 = arith.addf %135, %136 : vector<3x352xf32>
    %c42_62 = arith.constant 42 : index
    %c71_63 = arith.constant 71 : index
    %138 = vector.load %arg12[%c42_62, %c71_63] : memref<75x506xf32, #tpu.memory_space<vmem>>, vector<3x352xf32>
    %139 = arith.addf %137, %138 : vector<3x352xf32>
    %c45_64 = arith.constant 45 : index
    %c89_65 = arith.constant 89 : index
    %140 = vector.load %arg12[%c45_64, %c89_65] : memref<75x506xf32, #tpu.memory_space<vmem>>, vector<3x352xf32>
    %141 = arith.addf %139, %140 : vector<3x352xf32>
    %c48_66 = arith.constant 48 : index
    %c90_67 = arith.constant 90 : index
    %142 = vector.load %arg12[%c48_66, %c90_67] : memref<75x506xf32, #tpu.memory_space<vmem>>, vector<3x352xf32>
    %143 = arith.addf %141, %142 : vector<3x352xf32>
    %c51_68 = arith.constant 51 : index
    %c91_69 = arith.constant 91 : index
    %144 = vector.load %arg12[%c51_68, %c91_69] : memref<75x506xf32, #tpu.memory_space<vmem>>, vector<3x352xf32>
    %145 = arith.addf %143, %144 : vector<3x352xf32>
    %c54_70 = arith.constant 54 : index
    %c92_71 = arith.constant 92 : index
    %146 = vector.load %arg12[%c54_70, %c92_71] : memref<75x506xf32, #tpu.memory_space<vmem>>, vector<3x352xf32>
    %147 = arith.addf %145, %146 : vector<3x352xf32>
    %c57_72 = arith.constant 57 : index
    %c93_73 = arith.constant 93 : index
    %148 = vector.load %arg12[%c57_72, %c93_73] : memref<75x506xf32, #tpu.memory_space<vmem>>, vector<3x352xf32>
    %149 = arith.addf %147, %148 : vector<3x352xf32>
    %c60_74 = arith.constant 60 : index
    %c111_75 = arith.constant 111 : index
    %150 = vector.load %arg12[%c60_74, %c111_75] : memref<75x506xf32, #tpu.memory_space<vmem>>, vector<3x352xf32>
    %151 = arith.addf %149, %150 : vector<3x352xf32>
    %c63_76 = arith.constant 63 : index
    %c112_77 = arith.constant 112 : index
    %152 = vector.load %arg12[%c63_76, %c112_77] : memref<75x506xf32, #tpu.memory_space<vmem>>, vector<3x352xf32>
    %153 = arith.addf %151, %152 : vector<3x352xf32>
    %c66_78 = arith.constant 66 : index
    %c113_79 = arith.constant 113 : index
    %154 = vector.load %arg12[%c66_78, %c113_79] : memref<75x506xf32, #tpu.memory_space<vmem>>, vector<3x352xf32>
    %155 = arith.addf %153, %154 : vector<3x352xf32>
    %c69_80 = arith.constant 69 : index
    %c114_81 = arith.constant 114 : index
    %156 = vector.load %arg12[%c69_80, %c114_81] : memref<75x506xf32, #tpu.memory_space<vmem>>, vector<3x352xf32>
    %157 = arith.addf %155, %156 : vector<3x352xf32>
    %c72_82 = arith.constant 72 : index
    %c115_83 = arith.constant 115 : index
    %158 = vector.load %arg12[%c72_82, %c115_83] : memref<75x506xf32, #tpu.memory_space<vmem>>, vector<3x352xf32>
    %159 = arith.addf %157, %158 : vector<3x352xf32>
    %c0_84 = arith.constant 0 : index
    %c0_85 = arith.constant 0 : index
    %160 = vector.load %arg6[%c0_84, %c0_85] : memref<27x64xf32, #tpu.memory_space<vmem>>, vector<27x64xf32>
    %c0_86 = arith.constant 0 : index
    %c0_87 = arith.constant 0 : index
    %c0_88 = arith.constant 0 : index
    %161 = vector.load %arg3[%c0_86, %c0_87, %c0_88] : memref<1x64x506xf32, #tpu.memory_space<vmem>>, vector<1x64x506xf32>
    %162 = vector.shape_cast %161 : vector<1x64x506xf32> to vector<64x506xf32>
    %cst_89 = arith.constant dense<0.000000e+00> : vector<27x506xf32>
    %163 = tpu.matmul %160, %162, %cst_89 {dimension_numbers = #tpu.dot_dimension_numbers<[1], [0], [0], [1], [0, 0, 1, 1], [], []>} : vector<27x64xf32>, vector<64x506xf32>, vector<27x506xf32> -> vector<27x506xf32>
    %c0_90 = arith.constant 0 : index
    %c0_91 = arith.constant 0 : index
    %164 = vector.load %arg13[%c0_90, %c0_91] : memref<27x506xf32, #tpu.memory_space<vmem>>, vector<27x506xf32>
    tpu.vector_store %arg13[%c0_90, %c0_91], %163 {strides = array<i32>} : memref<27x506xf32, #tpu.memory_space<vmem>>, vector<27x506xf32>,
    %cst_92 = arith.constant 0.000000e+00 : f32
    %165 = vector.broadcast %cst_92 : f32 to vector<3x352xf32>
    %c0_93 = arith.constant 0 : index
    %c46_94 = arith.constant 46 : index
    %166 = vector.load %arg13[%c0_93, %c46_94] : memref<27x506xf32, #tpu.memory_space<vmem>>, vector<3x352xf32>
    %167 = arith.addf %165, %166 : vector<3x352xf32>
    %c3_95 = arith.constant 3 : index
    %c47_96 = arith.constant 47 : index
    %168 = vector.load %arg13[%c3_95, %c47_96] : memref<27x506xf32, #tpu.memory_space<vmem>>, vector<3x352xf32>
    %169 = arith.addf %167, %168 : vector<3x352xf32>
    %c6_97 = arith.constant 6 : index
    %c48_98 = arith.constant 48 : index
    %170 = vector.load %arg13[%c6_97, %c48_98] : memref<27x506xf32, #tpu.memory_space<vmem>>, vector<3x352xf32>
    %171 = arith.addf %169, %170 : vector<3x352xf32>
    %c9_99 = arith.constant 9 : index
    %c68_100 = arith.constant 68 : index
    %172 = vector.load %arg13[%c9_99, %c68_100] : memref<27x506xf32, #tpu.memory_space<vmem>>, vector<3x352xf32>
    %173 = arith.addf %171, %172 : vector<3x352xf32>
    %c12_101 = arith.constant 12 : index
    %c69_102 = arith.constant 69 : index
    %174 = vector.load %arg13[%c12_101, %c69_102] : memref<27x506xf32, #tpu.memory_space<vmem>>, vector<3x352xf32>
    %175 = arith.addf %173, %174 : vector<3x352xf32>
    %c15_103 = arith.constant 15 : index
    %c70_104 = arith.constant 70 : index
    %176 = vector.load %arg13[%c15_103, %c70_104] : memref<27x506xf32, #tpu.memory_space<vmem>>, vector<3x352xf32>
    %177 = arith.addf %175, %176 : vector<3x352xf32>
    %c18_105 = arith.constant 18 : index
    %c90_106 = arith.constant 90 : index
    %178 = vector.load %arg13[%c18_105, %c90_106] : memref<27x506xf32, #tpu.memory_space<vmem>>, vector<3x352xf32>
    %179 = arith.addf %177, %178 : vector<3x352xf32>
    %c21_107 = arith.constant 21 : index
    %c91_108 = arith.constant 91 : index
    %180 = vector.load %arg13[%c21_107, %c91_108] : memref<27x506xf32, #tpu.memory_space<vmem>>, vector<3x352xf32>
    %181 = arith.addf %179, %180 : vector<3x352xf32>
    %c24_109 = arith.constant 24 : index
    %c92_110 = arith.constant 92 : index
    %182 = vector.load %arg13[%c24_109, %c92_110] : memref<27x506xf32, #tpu.memory_space<vmem>>, vector<3x352xf32>
    %183 = arith.addf %181, %182 : vector<3x352xf32>
    %c0_111 = arith.constant 0 : index
    %c0_112 = arith.constant 0 : index
    %c0_113 = arith.constant 0 : index
    %184 = vector.load %arg8[%c0_111, %c0_112, %c0_113] : memref<1x3x352xf32, #tpu.memory_space<vmem>>, vector<1x3x352xf32>
    %185 = vector.shape_cast %184 : vector<1x3x352xf32> to vector<3x352xf32>
    %186 = vector.shape_cast %103 : vector<3x352xf32> to vector<1x3x352xf32>
    tpu.vector_store %arg8[%c0_111, %c0_112, %c0_113], %186 {strides = array<i32>} : memref<1x3x352xf32, #tpu.memory_space<vmem>>, vector<1x3x352xf32>,
    %c0_114 = arith.constant 0 : index
    %c0_115 = arith.constant 0 : index
    %c0_116 = arith.constant 0 : index
    %187 = vector.load %arg9[%c0_114, %c0_115, %c0_116] : memref<1x3x352xf32, #tpu.memory_space<vmem>>, vector<1x3x352xf32>
    %188 = vector.shape_cast %187 : vector<1x3x352xf32> to vector<3x352xf32>
    %189 = vector.shape_cast %159 : vector<3x352xf32> to vector<1x3x352xf32>
    tpu.vector_store %arg9[%c0_114, %c0_115, %c0_116], %189 {strides = array<i32>} : memref<1x3x352xf32, #tpu.memory_space<vmem>>, vector<1x3x352xf32>,
    %c0_117 = arith.constant 0 : index
    %c0_118 = arith.constant 0 : index
    %c0_119 = arith.constant 0 : index
    %190 = vector.load %arg10[%c0_117, %c0_118, %c0_119] : memref<1x3x352xf32, #tpu.memory_space<vmem>>, vector<1x3x352xf32>
    %191 = vector.shape_cast %190 : vector<1x3x352xf32> to vector<3x352xf32>
    %192 = vector.shape_cast %183 : vector<3x352xf32> to vector<1x3x352xf32>
    tpu.vector_store %arg10[%c0_117, %c0_118, %c0_119], %192 {strides = array<i32>} : memref<1x3x352xf32, #tpu.memory_space<vmem>>, vector<1x3x352xf32>,
    %193 = arith.addf %103, %159 : vector<3x352xf32>
    %194 = arith.addf %193, %183 : vector<3x352xf32>
    %c0_120 = arith.constant 0 : index
    %c0_121 = arith.constant 0 : index
    %c0_122 = arith.constant 0 : index
    %195 = vector.load %arg7[%c0_120, %c0_121, %c0_122] : memref<1x3x352xf32, #tpu.memory_space<vmem>>, vector<1x3x352xf32>
    %196 = vector.shape_cast %195 : vector<1x3x352xf32> to vector<3x352xf32>
    %197 = vector.shape_cast %194 : vector<3x352xf32> to vector<1x3x352xf32>
    tpu.vector_store %arg7[%c0_120, %c0_121, %c0_122], %197 {strides = array<i32>} : memref<1x3x352xf32, #tpu.memory_space<vmem>>, vector<1x3x352xf32>,
    return
  }
  func.func @transform_0(%arg0: i32) -> (i32, i32, i32) {
    %c0_i32 = arith.constant 0 : i32
    %c0_i32_0 = arith.constant 0 : i32
    %c0_i32_1 = arith.constant 0 : i32
    return %arg0, %c0_i32, %c0_i32_0 : i32, i32, i32
  }
  func.func @transform_1(%arg0: i32) -> (i32, i32, i32) {
    %c0_i32 = arith.constant 0 : i32
    %c0_i32_0 = arith.constant 0 : i32
    %c0_i32_1 = arith.constant 0 : i32
    return %arg0, %c0_i32, %c0_i32_0 : i32, i32, i32
  }
  func.func @transform_2(%arg0: i32) -> (i32, i32, i32) {
    %c0_i32 = arith.constant 0 : i32
    %c0_i32_0 = arith.constant 0 : i32
    %c0_i32_1 = arith.constant 0 : i32
    return %arg0, %c0_i32, %c0_i32_0 : i32, i32, i32
  }
  func.func @transform_3(%arg0: i32) -> (i32, i32) {
    %c0_i32 = arith.constant 0 : i32
    %c0_i32_0 = arith.constant 0 : i32
    %c0_i32_1 = arith.constant 0 : i32
    return %c0_i32, %c0_i32_0 : i32, i32
  }
  func.func @transform_4(%arg0: i32) -> (i32, i32) {
    %c0_i32 = arith.constant 0 : i32
    %c0_i32_0 = arith.constant 0 : i32
    %c0_i32_1 = arith.constant 0 : i32
    return %c0_i32, %c0_i32_0 : i32, i32
  }
  func.func @transform_5(%arg0: i32) -> (i32, i32) {
    %c0_i32 = arith.constant 0 : i32
    %c0_i32_0 = arith.constant 0 : i32
    %c0_i32_1 = arith.constant 0 : i32
    return %c0_i32, %c0_i32_0 : i32, i32
  }
  func.func @transform_6(%arg0: i32) -> (i32, i32, i32) {
    %c0_i32 = arith.constant 0 : i32
    %c0_i32_0 = arith.constant 0 : i32
    %c0_i32_1 = arith.constant 0 : i32
    return %arg0, %c0_i32, %c0_i32_0 : i32, i32, i32
  }
  func.func @transform_7(%arg0: i32) -> (i32, i32, i32) {
    %c0_i32 = arith.constant 0 : i32
    %c0_i32_0 = arith.constant 0 : i32
    %c0_i32_1 = arith.constant 0 : i32
    return %arg0, %c0_i32, %c0_i32_0 : i32, i32, i32
  }
  func.func @transform_8(%arg0: i32) -> (i32, i32, i32) {
    %c0_i32 = arith.constant 0 : i32
    %c0_i32_0 = arith.constant 0 : i32
    %c0_i32_1 = arith.constant 0 : i32
    return %arg0, %c0_i32, %c0_i32_0 : i32, i32, i32
  }
  func.func @transform_9(%arg0: i32) -> (i32, i32, i32) {
    %c0_i32 = arith.constant 0 : i32
    %c0_i32_0 = arith.constant 0 : i32
    %c0_i32_1 = arith.constant 0 : i32
    return %arg0, %c0_i32, %c0_i32_0 : i32, i32, i32
  }
}

</mosaic_0001>

<llo_original>
// kernel: decoder_forward.1
$region0: #{decoder_forward.1}
  #allocation0 [shape = 'u32[]', space=smem, size = 0x4, offset = 0x4, fixed_abs, tag = 'smem constant byte address 0x4 - core index']
  #allocation1 [shape = 'u32[144,128]{1,0:T(1,128)}', space=vmem, size = 0x12000, scoped, tag = 'internal scratch']
  #allocation2 [shape = 'f32[147,506]{1,0:T(8,128)}', space=vmem, size = 0x4c000, scoped, tag = 'scratch operand']
  #allocation3 [shape = 'f32[75,506]{1,0:T(8,128)}', space=vmem, size = 0x28000, scoped, tag = 'scratch operand']
  #allocation4 [shape = 'f32[27,506]{1,0:T(8,128)}', space=vmem, size = 0x10000, scoped, tag = 'scratch operand']
  %s0 = inlined_call_operand.vmem [shape: f32[2,64,506], index: 0, kind: input, shape index: {}]
  %s1 = inlined_call_operand.vmem [shape: f32[2,64,506], index: 1, kind: input, shape index: {}]
  %s2 = inlined_call_operand.vmem [shape: f32[2,64,506], index: 2, kind: input, shape index: {}]
  %s3 = inlined_call_operand.vmem [shape: f32[147,64], index: 3, kind: input, shape index: {}]
  %s4 = inlined_call_operand.vmem [shape: f32[75,64], index: 4, kind: input, shape index: {}]
  %s5 = inlined_call_operand.vmem [shape: f32[27,64], index: 5, kind: input, shape index: {}]
  %s6 = inlined_call_operand.vmem [shape: f32[2,3,352], index: 6, kind: output, shape index: {0}]
  %s7 = inlined_call_operand.vmem [shape: f32[2,3,352], index: 7, kind: output, shape index: {1}]
  %s8 = inlined_call_operand.vmem [shape: f32[2,3,352], index: 8, kind: output, shape index: {2}]
  %s9 = inlined_call_operand.vmem [shape: f32[2,3,352], index: 9, kind: output, shape index: {3}]
  %10 = xla_tuple %s6, %s7, %s8, %s9
  %s11 = sld [smem:[#allocation0]]
  $region81: #{decoder_forward.1} parent=0
    _
  %s13 = ssub.s32 1, %s11
  %s14 = scalar_select 0, %s13, %s11
  loop: start=0, step=1, limit=4
  $region2: #{decoder_forward.1} parent=0 // loop_pre_header
    _
  $region3: #{decoder_forward.1} parent=0 // loop_header
    %s16 = sphi 0, %s20
    %p17 = scmp.ge.s32.totalorder %s16, 4
    %s26 = sphi 0, %s28
    %s29 = sphi 0, %s26
    %s30 = sphi 0, %s29
    %s46 = sphi 0, %s30
    %s52 = sphi 0, %s54
    %s55 = sphi 0, %s52
    %s56 = sphi 0, %s55
    %s72 = sphi 0, %s56
    %s78 = sphi 0, %s80
    %s81 = sphi 0, %s78
    %s82 = sphi 0, %s81
    %s98 = sphi 0, %s82
    %s102 = sphi 0, %s102
    %s104 = sphi 0, %s102
    %s105 = sphi 0, %s104
    %s119 = sphi 0, %s105
    %s123 = sphi 0, %s123
    %s125 = sphi 0, %s123
    %s126 = sphi 0, %s125
    %s140 = sphi 0, %s126
    %s144 = sphi 0, %s144
    %s146 = sphi 0, %s144
    %s147 = sphi 0, %s146
    %s161 = sphi 0, %s147
    %s167 = sphi 0, %s169
    %s170 = sphi 0, %s167
    %s171 = sphi 0, %s170
    %s187 = sphi 0, %s171
    %s193 = sphi 0, %s195
    %s196 = sphi 0, %s193
    %s197 = sphi 0, %s196
    %s213 = sphi 0, %s197
    %s219 = sphi 0, %s221
    %s222 = sphi 0, %s219
    %s223 = sphi 0, %s222
    %s239 = sphi 0, %s223
    %s245 = sphi 0, %s247
    %s248 = sphi 0, %s245
    %s249 = sphi 0, %s248
    %s265 = sphi 0, %s249
  $region4: #{decoder_forward.1} parent=0 // loop_header_branch
    %19 = sbr.rel (%p17) target = $region8
  $region5: #{decoder_forward.1} parent=0 // loop_body
    %s21 = ssub.s32 %s16, 1
    %s22 = ssub.s32 %s16, 2
    %s23 = sadd.s32 %s16, 1
    %s24 = ssub.s32 %s16, %s23
    %p25 = scmp.eq.s32.totalorder %s24, 0
    %s27 = sadd.s32 %s26, 1
    %s28 = scalar_select %p25, %s26, %s27
    %p31 = pneg %p25
    %p32 = scmp.eq.s32.totalorder %s16, 1
    %p33 = por %p31, %p32
    %p34 = scmp.ne.s32.totalorder %s26, %s29
    %p35 = scmp.eq.s32.totalorder %s16, 0
    %p36 = por %p34, %p35
    %p37 = scmp.ne.s32.totalorder %s26, %s29
    %p38 = scmp.eq.s32.totalorder %s21, 1
    %p39 = por %p37, %p38
    %p40 = scmp.ne.s32.totalorder %s29, %s30
    %p41 = scmp.eq.s32.totalorder %s21, 0
    %p42 = por %p40, %p41
    %p43 = scmp.ne.s32.totalorder %s29, %s30
    %p44 = scmp.eq.s32.totalorder %s22, 1
    %p45 = por %p43, %p44
    %p47 = scmp.ne.s32.totalorder %s30, %s46
    %p48 = scmp.eq.s32.totalorder %s22, 0
    %p49 = por %p47, %p48
    %s50 = ssub.s32 %s16, %s23
    %p51 = scmp.eq.s32.totalorder %s50, 0
    %s53 = sadd.s32 %s52, 1
    %s54 = scalar_select %p51, %s52, %s53
    %p57 = pneg %p51
    %p58 = scmp.eq.s32.totalorder %s16, 1
    %p59 = por %p57, %p58
    %p60 = scmp.ne.s32.totalorder %s52, %s55
    %p61 = scmp.eq.s32.totalorder %s16, 0
    %p62 = por %p60, %p61
    %p63 = scmp.ne.s32.totalorder %s52, %s55
    %p64 = scmp.eq.s32.totalorder %s21, 1
    %p65 = por %p63, %p64
    %p66 = scmp.ne.s32.totalorder %s55, %s56
    %p67 = scmp.eq.s32.totalorder %s21, 0
    %p68 = por %p66, %p67
    %p69 = scmp.ne.s32.totalorder %s55, %s56
    %p70 = scmp.eq.s32.totalorder %s22, 1
    %p71 = por %p69, %p70
    %p73 = scmp.ne.s32.totalorder %s56, %s72
    %p74 = scmp.eq.s32.totalorder %s22, 0
    %p75 = por %p73, %p74
    %s76 = ssub.s32 %s16, %s23
    %p77 = scmp.eq.s32.totalorder %s76, 0
    %s79 = sadd.s32 %s78, 1
    %s80 = scalar_select %p77, %s78, %s79
    %p83 = pneg %p77
    %p84 = scmp.eq.s32.totalorder %s16, 1
    %p85 = por %p83, %p84
    %p86 = scmp.ne.s32.totalorder %s78, %s81
    %p87 = scmp.eq.s32.totalorder %s16, 0
    %p88 = por %p86, %p87
    %p89 = scmp.ne.s32.totalorder %s78, %s81
    %p90 = scmp.eq.s32.totalorder %s21, 1
    %p91 = por %p89, %p90
    %p92 = scmp.ne.s32.totalorder %s81, %s82
    %p93 = scmp.eq.s32.totalorder %s21, 0
    %p94 = por %p92, %p93
    %p95 = scmp.ne.s32.totalorder %s81, %s82
    %p96 = scmp.eq.s32.totalorder %s22, 1
    %p97 = por %p95, %p96
    %p99 = scmp.ne.s32.totalorder %s82, %s98
    %p100 = scmp.eq.s32.totalorder %s22, 0
    %p101 = por %p99, %p100
    %s103 = sadd.s32 %s102, 1
    %p106 = scmp.eq.s32.totalorder %s16, 1
    %p107 = scmp.ne.s32.totalorder %s102, %s104
    %p108 = scmp.eq.s32.totalorder %s16, 0
    %p109 = por %p107, %p108
    %p110 = scmp.ne.s32.totalorder %s102, %s104
    %p111 = scmp.eq.s32.totalorder %s21, 1
    %p112 = por %p110, %p111
    %p113 = scmp.ne.s32.totalorder %s104, %s105
    %p114 = scmp.eq.s32.totalorder %s21, 0
    %p115 = por %p113, %p114
    %p116 = scmp.ne.s32.totalorder %s104, %s105
    %p117 = scmp.eq.s32.totalorder %s22, 1
    %p118 = por %p116, %p117
    %p120 = scmp.ne.s32.totalorder %s105, %s119
    %p121 = scmp.eq.s32.totalorder %s22, 0
    %p122 = por %p120, %p121
    %s124 = sadd.s32 %s123, 1
    %p127 = scmp.eq.s32.totalorder %s16, 1
    %p128 = scmp.ne.s32.totalorder %s123, %s125
    %p129 = scmp.eq.s32.totalorder %s16, 0
    %p130 = por %p128, %p129
    %p131 = scmp.ne.s32.totalorder %s123, %s125
    %p132 = scmp.eq.s32.totalorder %s21, 1
    %p133 = por %p131, %p132
    %p134 = scmp.ne.s32.totalorder %s125, %s126
    %p135 = scmp.eq.s32.totalorder %s21, 0
    %p136 = por %p134, %p135
    %p137 = scmp.ne.s32.totalorder %s125, %s126
    %p138 = scmp.eq.s32.totalorder %s22, 1
    %p139 = por %p137, %p138
    %p141 = scmp.ne.s32.totalorder %s126, %s140
    %p142 = scmp.eq.s32.totalorder %s22, 0
    %p143 = por %p141, %p142
    %s145 = sadd.s32 %s144, 1
    %p148 = scmp.eq.s32.totalorder %s16, 1
    %p149 = scmp.ne.s32.totalorder %s144, %s146
    %p150 = scmp.eq.s32.totalorder %s16, 0
    %p151 = por %p149, %p150
    %p152 = scmp.ne.s32.totalorder %s144, %s146
    %p153 = scmp.eq.s32.totalorder %s21, 1
    %p154 = por %p152, %p153
    %p155 = scmp.ne.s32.totalorder %s146, %s147
    %p156 = scmp.eq.s32.totalorder %s21, 0
    %p157 = por %p155, %p156
    %p158 = scmp.ne.s32.totalorder %s146, %s147
    %p159 = scmp.eq.s32.totalorder %s22, 1
    %p160 = por %p158, %p159
    %p162 = scmp.ne.s32.totalorder %s147, %s161
    %p163 = scmp.eq.s32.totalorder %s22, 0
    %p164 = por %p162, %p163
    %s165 = ssub.s32 %s16, %s23
    %p166 = scmp.eq.s32.totalorder %s165, 0
    %s168 = sadd.s32 %s167, 1
    %s169 = scalar_select %p166, %s167, %s168
    %p172 = pneg %p166
    %p173 = scmp.eq.s32.totalorder %s16, 1
    %p174 = por %p172, %p173
    %p175 = scmp.ne.s32.totalorder %s167, %s170
    %p176 = scmp.eq.s32.totalorder %s16, 0
    %p177 = por %p175, %p176
    %p178 = scmp.ne.s32.totalorder %s167, %s170
    %p179 = scmp.eq.s32.totalorder %s21, 1
    %p180 = por %p178, %p179
    %p181 = scmp.ne.s32.totalorder %s170, %s171
    %p182 = scmp.eq.s32.totalorder %s21, 0
    %p183 = por %p181, %p182
    %p184 = scmp.ne.s32.totalorder %s170, %s171
    %p185 = scmp.eq.s32.totalorder %s22, 1
    %p186 = por %p184, %p185
    %p188 = scmp.ne.s32.totalorder %s171, %s187
    %p189 = scmp.eq.s32.totalorder %s22, 0
    %p190 = por %p188, %p189
    %s191 = ssub.s32 %s16, %s23
    %p192 = scmp.eq.s32.totalorder %s191, 0
    %s194 = sadd.s32 %s193, 1
    %s195 = scalar_select %p192, %s193, %s194
    %p198 = pneg %p192
    %p199 = scmp.eq.s32.totalorder %s16, 1
    %p200 = por %p198, %p199
    %p201 = scmp.ne.s32.totalorder %s193, %s196
    %p202 = scmp.eq.s32.totalorder %s16, 0
    %p203 = por %p201, %p202
    %p204 = scmp.ne.s32.totalorder %s193, %s196
    %p205 = scmp.eq.s32.totalorder %s21, 1
    %p206 = por %p204, %p205
    %p207 = scmp.ne.s32.totalorder %s196, %s197
    %p208 = scmp.eq.s32.totalorder %s21, 0
    %p209 = por %p207, %p208
    %p210 = scmp.ne.s32.totalorder %s196, %s197
    %p211 = scmp.eq.s32.totalorder %s22, 1
    %p212 = por %p210, %p211
    %p214 = scmp.ne.s32.totalorder %s197, %s213
    %p215 = scmp.eq.s32.totalorder %s22, 0
    %p216 = por %p214, %p215
    %s217 = ssub.s32 %s16, %s23
    %p218 = scmp.eq.s32.totalorder %s217, 0
    %s220 = sadd.s32 %s219, 1
    %s221 = scalar_select %p218, %s219, %s220
    %p224 = pneg %p218
    %p225 = scmp.eq.s32.totalorder %s16, 1
    %p226 = por %p224, %p225
    %p227 = scmp.ne.s32.totalorder %s219, %s222
    %p228 = scmp.eq.s32.totalorder %s16, 0
    %p229 = por %p227, %p228
    %p230 = scmp.ne.s32.totalorder %s219, %s222
    %p231 = scmp.eq.s32.totalorder %s21, 1
    %p232 = por %p230, %p231
    %p233 = scmp.ne.s32.totalorder %s222, %s223
    %p234 = scmp.eq.s32.totalorder %s21, 0
    %p235 = por %p233, %p234
    %p236 = scmp.ne.s32.totalorder %s222, %s223
    %p237 = scmp.eq.s32.totalorder %s22, 1
    %p238 = por %p236, %p237
    %p240 = scmp.ne.s32.totalorder %s223, %s239
    %p241 = scmp.eq.s32.totalorder %s22, 0
    %p242 = por %p240, %p241
    %s243 = ssub.s32 %s16, %s23
    %p244 = scmp.eq.s32.totalorder %s243, 0
    %s246 = sadd.s32 %s245, 1
    %s247 = scalar_select %p244, %s245, %s246
    %p250 = pneg %p244
    %p251 = scmp.eq.s32.totalorder %s16, 1
    %p252 = por %p250, %p251
    %p253 = scmp.ne.s32.totalorder %s245, %s248
    %p254 = scmp.eq.s32.totalorder %s16, 0
    %p255 = por %p253, %p254
    %p256 = scmp.ne.s32.totalorder %s245, %s248
    %p257 = scmp.eq.s32.totalorder %s21, 1
    %p258 = por %p256, %p257
    %p259 = scmp.ne.s32.totalorder %s248, %s249
    %p260 = scmp.eq.s32.totalorder %s21, 0
    %p261 = por %p259, %p260
    %p262 = scmp.ne.s32.totalorder %s248, %s249
    %p263 = scmp.eq.s32.totalorder %s22, 1
    %p264 = por %p262, %p263
    %p266 = scmp.ne.s32.totalorder %s249, %s265
    %p267 = scmp.eq.s32.totalorder %s22, 0
    %p268 = por %p266, %p267
    %p269 = scmp.le.s32.totalorder 1, %s16
    %p270 = scmp.lt.s32.totalorder %s16, 3
    %p271 = pnand %p269, %p270
    %p272 = pneg %p271
    // Predicated region
    $region9: #{decoder_forward.1} parent=5 // pred_check
      _
    $region10: #{decoder_forward.1} parent=5 // pred_check_branch
      %274 = sbr.rel (%p271) target = $region12
    $region11: #{decoder_forward.1} parent=5 // pred_region
      %s275 = ssub.s32 %s16, 1
      // Predicated region
      $region13: #{decoder_forward.1} parent=11 // pred_check
        %p276 = pneg %p115
      $region14: #{decoder_forward.1} parent=11 // pred_check_branch
        %278 = sbr.rel (%p276) target = $region16
      $region15: #{decoder_forward.1} parent=11 // pred_region
        _
      $region16: #{decoder_forward.1} parent=11 // pred_fallthru
        _
      // Predicated region
      $region17: #{decoder_forward.1} parent=11 // pred_check
        %p279 = pneg %p136
      $region18: #{decoder_forward.1} parent=11 // pred_check_branch
        %281 = sbr.rel (%p279) target = $region20
      $region19: #{decoder_forward.1} parent=11 // pred_region
        _
      $region20: #{decoder_forward.1} parent=11 // pred_fallthru
        _
      // Predicated region
      $region21: #{decoder_forward.1} parent=11 // pred_check
        %p282 = pneg %p157
      $region22: #{decoder_forward.1} parent=11 // pred_check_branch
        %284 = sbr.rel (%p282) target = $region24
      $region23: #{decoder_forward.1} parent=11 // pred_region
        _
      $region24: #{decoder_forward.1} parent=11 // pred_fallthru
        _
    $region12: #{decoder_forward.1} parent=5 // pred_fallthru
      _
    %p285 = scmp.lt.s32.totalorder %s16, 2
    // Predicated region
    $region25: #{decoder_forward.1} parent=5 // pred_check
      %p286 = pneg %p285
    $region26: #{decoder_forward.1} parent=5 // pred_check_branch
      %288 = sbr.rel (%p286) target = $region28
    $region27: #{decoder_forward.1} parent=5 // pred_region
      // Predicated region
      $region29: #{decoder_forward.1} parent=27 // pred_check
        %p289 = pneg %p36
      $region30: #{decoder_forward.1} parent=27 // pred_check_branch
        %291 = sbr.rel (%p289) target = $region32
      $region31: #{decoder_forward.1} parent=27 // pred_region
        %p292 = scmp.lt.s32.totalorder %s16, 1
        %s293 = scalar_select %p292, %s16, 1
        %s294 = smul.addr %s293, 32
        %s295 = smul.addr %s294, 8
        %s296 = scalar_lea.vmem %s0, %s295
      $region32: #{decoder_forward.1} parent=27 // pred_fallthru
        _
      // Predicated region
      $region33: #{decoder_forward.1} parent=27 // pred_check
        %p297 = pneg %p62
      $region34: #{decoder_forward.1} parent=27 // pred_check_branch
        %299 = sbr.rel (%p297) target = $region36
      $region35: #{decoder_forward.1} parent=27 // pred_region
        %p300 = scmp.lt.s32.totalorder %s16, 1
        %s301 = scalar_select %p300, %s16, 1
        %s302 = smul.addr %s301, 32
        %s303 = smul.addr %s302, 8
        %s304 = scalar_lea.vmem %s1, %s303
      $region36: #{decoder_forward.1} parent=27 // pred_fallthru
        _
      // Predicated region
      $region37: #{decoder_forward.1} parent=27 // pred_check
        %p305 = pneg %p88
      $region38: #{decoder_forward.1} parent=27 // pred_check_branch
        %307 = sbr.rel (%p305) target = $region40
      $region39: #{decoder_forward.1} parent=27 // pred_region
        %p308 = scmp.lt.s32.totalorder %s16, 1
        %s309 = scalar_select %p308, %s16, 1
        %s310 = smul.addr %s309, 32
        %s311 = smul.addr %s310, 8
        %s312 = scalar_lea.vmem %s2, %s311
      $region40: #{decoder_forward.1} parent=27 // pred_fallthru
        _
    $region28: #{decoder_forward.1} parent=5 // pred_fallthru
      _
    %p313 = scmp.le.s32.totalorder 1, %s16
    %p314 = scmp.lt.s32.totalorder %s16, 3
    %p315 = pnand %p313, %p314
    %p316 = pneg %p315
    // Predicated region
    $region41: #{decoder_forward.1} parent=5 // pred_check
      _
    $region42: #{decoder_forward.1} parent=5 // pred_check_branch
      %318 = sbr.rel (%p315) target = $region44
    $region43: #{decoder_forward.1} parent=5 // pred_region
      %s319 = ssub.s32 %s16, 1
      %p320 = scmp.lt.s32.totalorder %s21, 1
      %s321 = scalar_select %p320, %s21, 1
      %s322 = smul.addr %s321, 32
      %s323 = smul.addr %s322, 8
      %s324 = scalar_lea.vmem %s0, %s323
      %p325 = pneg %p42
      %p326 = pneg %p39
      %p327 = scmp.lt.s32.totalorder %s21, 1
      %s328 = scalar_select %p327, %s21, 1
      %s329 = smul.addr %s328, 32
      %s330 = smul.addr %s329, 8
      %s331 = scalar_lea.vmem %s1, %s330
      %p332 = pneg %p68
      %p333 = pneg %p65
      %p334 = scmp.lt.s32.totalorder %s21, 1
      %s335 = scalar_select %p334, %s21, 1
      %s336 = smul.addr %s335, 32
      %s337 = smul.addr %s336, 8
      %s338 = scalar_lea.vmem %s2, %s337
      %p339 = pneg %p94
      %p340 = pneg %p91
      %p341 = pneg %p115
      %p342 = pneg %p112
      %p343 = pneg %p136
      %p344 = pneg %p133
      %p345 = pneg %p157
      %p346 = pneg %p154
      %p347 = pneg %p183
      %p348 = pneg %p180
      %p349 = scmp.lt.s32.totalorder %s21, 1
      %s350 = scalar_select %p349, %s21, 1
      %s351 = smul.addr %s350, 3
      %s352 = smul.addr %s351, 4
      %s353 = scalar_lea.vmem %s6, %s352
      %p354 = pneg %p209
      %p355 = pneg %p206
      %p356 = scmp.lt.s32.totalorder %s21, 1
      %s357 = scalar_select %p356, %s21, 1
      %s358 = smul.addr %s357, 3
      %s359 = smul.addr %s358, 4
      %s360 = scalar_lea.vmem %s7, %s359
      %p361 = pneg %p235
      %p362 = pneg %p232
      %p363 = scmp.lt.s32.totalorder %s21, 1
      %s364 = scalar_select %p363, %s21, 1
      %s365 = smul.addr %s364, 3
      %s366 = smul.addr %s365, 4
      %s367 = scalar_lea.vmem %s8, %s366
      %p368 = pneg %p261
      %p369 = pneg %p258
      %p370 = scmp.lt.s32.totalorder %s21, 1
      %s371 = scalar_select %p370, %s21, 1
      %s372 = smul.addr %s371, 3
      %s373 = smul.addr %s372, 4
      %s374 = scalar_lea.vmem %s9, %s373
      %p375 = scmp.lt.s32.totalorder %s21, 1
      %s376 = scalar_select %p375, %s21, 1
      %s377 = smul.addr %s376, 32
      %s378 = smul.addr %s377, 8
      %s379 = scalar_lea.vmem %s0, %s378
      %p380 = scmp.lt.s32.totalorder %s21, 1
      %s381 = scalar_select %p380, %s21, 1
      %s382 = smul.addr %s381, 32
      %s383 = smul.addr %s382, 8
      %s384 = scalar_lea.vmem %s1, %s383
      %p385 = scmp.lt.s32.totalorder %s21, 1
      %s386 = scalar_select %p385, %s21, 1
      %s387 = smul.addr %s386, 32
      %s388 = smul.addr %s387, 8
      %s389 = scalar_lea.vmem %s2, %s388
      %p390 = scmp.lt.s32.totalorder %s21, 1
      %s391 = scalar_select %p390, %s21, 1
      %s392 = smul.addr %s391, 3
      %s393 = smul.addr %s392, 4
      %s394 = scalar_lea.vmem %s6, %s393
      %p395 = scmp.lt.s32.totalorder %s21, 1
      %s396 = scalar_select %p395, %s21, 1
      %s397 = smul.addr %s396, 3
      %s398 = smul.addr %s397, 4
      %s399 = scalar_lea.vmem %s7, %s398
      %p400 = scmp.lt.s32.totalorder %s21, 1
      %s401 = scalar_select %p400, %s21, 1
      %s402 = smul.addr %s401, 3
      %s403 = smul.addr %s402, 4
      %s404 = scalar_lea.vmem %s8, %s403
      %p405 = scmp.lt.s32.totalorder %s21, 1
      %s406 = scalar_select %p405, %s21, 1
      %s407 = smul.addr %s406, 3
      %s408 = smul.addr %s407, 4
      %s409 = scalar_lea.vmem %s9, %s408
      %v410 = vld [vmem:[%s3] sm:$0xff]
      %v411 = vld [vmem:[%s3 + $0x8] sm:$0xff]
      %v412 = vld [vmem:[%s3 + $0x10] sm:$0xff]
      %v413 = vld [vmem:[%s3 + $0x18] sm:$0xff]
      %v414 = vld [vmem:[%s3 + $0x20] sm:$0xff]
      %v415 = vld [vmem:[%s3 + $0x28] sm:$0xff]
      %v416 = vld [vmem:[%s3 + $0x30] sm:$0xff]
      %v417 = vld [vmem:[%s3 + $0x38] sm:$0xff]
      %v418 = vld [vmem:[%s3 + $0x40] sm:$0xff]
      %v419 = vld [vmem:[%s3 + $0x48] sm:$0xff]
      %v420 = vld [vmem:[%s3 + $0x50] sm:$0xff]
      %v421 = vld [vmem:[%s3 + $0x58] sm:$0xff]
      %v422 = vld [vmem:[%s3 + $0x60] sm:$0xff]
      %v423 = vld [vmem:[%s3 + $0x68] sm:$0xff]
      %v424 = vld [vmem:[%s3 + $0x70] sm:$0xff]
      %v425 = vld [vmem:[%s3 + $0x78] sm:$0xff]
      %v426 = vld [vmem:[%s3 + $0x80] sm:$0xff]
      %v427 = vld [vmem:[%s3 + $0x88] sm:$0xff]
      %v428 = vld [vmem:[%s3 + $0x90] sm:$0x7]
      %v429 = vld [vmem:[%s379] sm:$0xff]
      %v430 = vld [vmem:[%s379 + $0x8] sm:$0xff]
      %v431 = vld [vmem:[%s379 + $0x10] sm:$0xff]
      %v432 = vld [vmem:[%s379 + $0x18] sm:$0xff]
      %v433 = vld [vmem:[%s379 + $0x20] sm:$0xff]
      %v434 = vld [vmem:[%s379 + $0x28] sm:$0xff]
      %v435 = vld [vmem:[%s379 + $0x30] sm:$0xff]
      %v436 = vld [vmem:[%s379 + $0x38] sm:$0xff]
      %v437 = vld [vmem:[%s379 + $0x40] sm:$0xff]
      %v438 = vld [vmem:[%s379 + $0x48] sm:$0xff]
      %v439 = vld [vmem:[%s379 + $0x50] sm:$0xff]
      %v440 = vld [vmem:[%s379 + $0x58] sm:$0xff]
      %v441 = vld [vmem:[%s379 + $0x60] sm:$0xff]
      %v442 = vld [vmem:[%s379 + $0x68] sm:$0xff]
      %v443 = vld [vmem:[%s379 + $0x70] sm:$0xff]
      %v444 = vld [vmem:[%s379 + $0x78] sm:$0xff]
      %v445 = vld [vmem:[%s379 + $0x80] sm:$0xff]
      %v446 = vld [vmem:[%s379 + $0x88] sm:$0xff]
      %v447 = vld [vmem:[%s379 + $0x90] sm:$0xff]
      %v448 = vld [vmem:[%s379 + $0x98] sm:$0xff]
      %v449 = vld [vmem:[%s379 + $0xa0] sm:$0xff]
      %v450 = vld [vmem:[%s379 + $0xa8] sm:$0xff]
      %v451 = vld [vmem:[%s379 + $0xb0] sm:$0xff]
      %v452 = vld [vmem:[%s379 + $0xb8] sm:$0xff]
      %v453 = vld [vmem:[%s379 + $0xc0] sm:$0xff]
      %v454 = vld [vmem:[%s379 + $0xc8] sm:$0xff]
      %v455 = vld [vmem:[%s379 + $0xd0] sm:$0xff]
      %v456 = vld [vmem:[%s379 + $0xd8] sm:$0xff]
      %v457 = vld [vmem:[%s379 + $0xe0] sm:$0xff]
      %v458 = vld [vmem:[%s379 + $0xe8] sm:$0xff]
      %v459 = vld [vmem:[%s379 + $0xf0] sm:$0xff]
      %v460 = vld [vmem:[%s379 + $0xf8] sm:$0xff]
      %vm461 = vcmask 523264
      %v463 = vsel %vm461, %v410, 0
      %v466 = vsel %vm461, %v411, 0
      %v469 = vsel %vm461, %v412, 0
      %v472 = vsel %vm461, %v413, 0
      %v475 = vsel %vm461, %v414, 0
      %v478 = vsel %vm461, %v415, 0
      %v481 = vsel %vm461, %v416, 0
      %v484 = vsel %vm461, %v417, 0
      %v487 = vsel %vm461, %v418, 0
      %v490 = vsel %vm461, %v419, 0
      %v493 = vsel %vm461, %v420, 0
      %v496 = vsel %vm461, %v421, 0
      %v499 = vsel %vm461, %v422, 0
      %v502 = vsel %vm461, %v423, 0
      %v505 = vsel %vm461, %v424, 0
      %v508 = vsel %vm461, %v425, 0
      %v511 = vsel %vm461, %v426, 0
      %v514 = vsel %vm461, %v427, 0
      %v517 = vsel %vm461, %v428, 0
      %519 = vmatprep.subr.mxu0 %v430
      %520 = vmatpush1.msra.mxu0 %v429
      %521 = vmatprep.subr.mxu0 %v434
      %522 = vmatpush1.msra.mxu0 %v433
      %523 = vmatprep.subr.mxu0 %v438
      %524 = vmatpush1.msra.mxu0 %v437
      %525 = vmatprep.subr.mxu0 %v442
      %526 = vmatpush1.msra.mxu0 %v441
      %527 = vmatprep.subr.mxu0 %v446
      %528 = vmatpush1.msra.mxu0 %v445
      %529 = vmatprep.subr.mxu0 %v450
      %530 = vmatpush1.msra.mxu0 %v449
      %531 = vmatprep.subr.mxu0 %v454
      %532 = vmatpush1.msra.mxu0 %v453
      %533 = vmatprep.subr.mxu0 %v458
      %534 = vmatpush1.msra.mxu0 %v457
      %535 = vmatprep.subr.mxu0 0.0
      %536 = vmatpush1.msra.mxu0 0.0
      %537 = vmatprep.subr.mxu0 0.0
      %538 = vmatpush1.msra.mxu0 0.0
      %539 = vmatprep.subr.mxu0 0.0
      %540 = vmatpush1.msra.mxu0 0.0
      %541 = vmatprep.subr.mxu0 0.0
      %542 = vmatpush1.msra.mxu0 0.0
      %543 = vmatprep.subr.mxu0 0.0
      %544 = vmatpush1.msra.mxu0 0.0
      %545 = vmatprep.subr.mxu0 0.0
      %546 = vmatpush1.msra.mxu0 0.0
      %547 = vmatprep.subr.mxu0 0.0
      %548 = vmatpush1.msra.mxu0 0.0
      %549 = vmatprep.subr.mxu0 0.0
      %550 = vmatpush1.msra.mxu0 0.0
      %551 = vmatprep.subr.mxu0 0.0
      %552 = vmatpush1.msra.mxu0 0.0
      %553 = vmatprep.subr.mxu0 0.0
      %554 = vmatpush1.msra.mxu0 0.0
      %555 = vmatprep.subr.mxu0 0.0
      %556 = vmatpush1.msra.mxu0 0.0
      %557 = vmatprep.subr.mxu0 0.0
      %558 = vmatpush1.msra.mxu0 0.0
      %559 = vmatprep.subr.mxu0 0.0
      %560 = vmatpush1.msra.mxu0 0.0
      %561 = vmatprep.subr.mxu0 0.0
      %562 = vmatpush1.msra.mxu0 0.0
      %563 = vmatprep.subr.mxu0 0.0
      %564 = vmatpush1.msra.mxu0 0.0
      %565 = vmatprep.subr.mxu0 0.0
      %566 = vmatpush1.msra.mxu0 0.0
      %567 = vmatprep.subr.mxu0 0.0
      %568 = vmatpush1.msra.mxu0 0.0
      %569 = vmatprep.subr.mxu0 0.0
      %570 = vmatpush1.msra.mxu0 0.0
      %571 = vmatprep.subr.mxu0 0.0
      %572 = vmatpush1.msra.mxu0 0.0
      %573 = vmatprep.subr.mxu0 0.0
      %574 = vmatpush1.msra.mxu0 0.0
      %575 = vmatprep.subr.mxu0 0.0
      %576 = vmatpush1.msra.mxu0 0.0
      %577 = vmatprep.subr.mxu0 0.0
      %578 = vmatpush1.msra.mxu0 0.0
      %579 = vmatprep.subr.mxu0 0.0
      %580 = vmatpush1.msra.mxu0 0.0
      %581 = vmatprep.subr.mxu0 0.0
      %582 = vmatpush1.msra.mxu0 0.0
      %583 = vmatprep.mubr.f32.mxu0 0.0
      %584 = vmatmul.mubr.f32.gmra.mrb[0].mxu0 %v463
      %v585 = vpop.f32.mrb[0].mxu0
      %v586 = vadd.f32 0.0, %v585
      %v587 = vpop.f32.mrb[0].mxu0
      %v588 = vadd.f32 0.0, %v587
      %589 = vmatprep.mubr.f32.mxu0 0.0
      %590 = vmatmul.mubr.f32.gmra.mrb[0].mxu0 %v466
      %v591 = vpop.f32.mrb[0].mxu0
      %v592 = vadd.f32 0.0, %v591
      %v593 = vpop.f32.mrb[0].mxu0
      %v594 = vadd.f32 0.0, %v593
      %595 = vmatprep.mubr.f32.mxu0 0.0
      %596 = vmatmul.mubr.f32.gmra.mrb[0].mxu0 %v469
      %v597 = vpop.f32.mrb[0].mxu0
      %v598 = vadd.f32 0.0, %v597
      %v599 = vpop.f32.mrb[0].mxu0
      %v600 = vadd.f32 0.0, %v599
      %601 = vmatprep.mubr.f32.mxu0 0.0
      %602 = vmatmul.mubr.f32.gmra.mrb[0].mxu0 %v472
      %v603 = vpop.f32.mrb[0].mxu0
      %v604 = vadd.f32 0.0, %v603
      %v605 = vpop.f32.mrb[0].mxu0
      %v606 = vadd.f32 0.0, %v605
      %607 = vmatprep.mubr.f32.mxu0 0.0
      %608 = vmatmul.mubr.f32.gmra.mrb[0].mxu0 %v475
      %v609 = vpop.f32.mrb[0].mxu0
      %v610 = vadd.f32 0.0, %v609
      %v611 = vpop.f32.mrb[0].mxu0
      %v612 = vadd.f32 0.0, %v611
      %613 = vmatprep.mubr.f32.mxu0 0.0
      %614 = vmatmul.mubr.f32.gmra.mrb[0].mxu0 %v478
      %v615 = vpop.f32.mrb[0].mxu0
      %v616 = vadd.f32 0.0, %v615
      %v617 = vpop.f32.mrb[0].mxu0
      %v618 = vadd.f32 0.0, %v617
      %619 = vmatprep.mubr.f32.mxu0 0.0
      %620 = vmatmul.mubr.f32.gmra.mrb[0].mxu0 %v481
      %v621 = vpop.f32.mrb[0].mxu0
      %v622 = vadd.f32 0.0, %v621
      %v623 = vpop.f32.mrb[0].mxu0
      %v624 = vadd.f32 0.0, %v623
      %625 = vmatprep.mubr.f32.mxu0 0.0
      %626 = vmatmul.mubr.f32.gmra.mrb[0].mxu0 %v484
      %v627 = vpop.f32.mrb[0].mxu0
      %v628 = vadd.f32 0.0, %v627
      %v629 = vpop.f32.mrb[0].mxu0
      %v630 = vadd.f32 0.0, %v629
      %631 = vmatprep.mubr.f32.mxu0 0.0
      %632 = vmatmul.mubr.f32.gmra.mrb[0].mxu0 %v487
      %v633 = vpop.f32.mrb[0].mxu0
      %v634 = vadd.f32 0.0, %v633
      %v635 = vpop.f32.mrb[0].mxu0
      %v636 = vadd.f32 0.0, %v635
      %637 = vmatprep.mubr.f32.mxu0 0.0
      %638 = vmatmul.mubr.f32.gmra.mrb[0].mxu0 %v490
      %v639 = vpop.f32.mrb[0].mxu0
      %v640 = vadd.f32 0.0, %v639
      %v641 = vpop.f32.mrb[0].mxu0
      %v642 = vadd.f32 0.0, %v641
      %643 = vmatprep.mubr.f32.mxu0 0.0
      %644 = vmatmul.mubr.f32.gmra.mrb[0].mxu0 %v493
      %v645 = vpop.f32.mrb[0].mxu0
      %v646 = vadd.f32 0.0, %v645
      %v647 = vpop.f32.mrb[0].mxu0
      %v648 = vadd.f32 0.0, %v647
      %649 = vmatprep.mubr.f32.mxu0 0.0
      %650 = vmatmul.mubr.f32.gmra.mrb[0].mxu0 %v496
      %v651 = vpop.f32.mrb[0].mxu0
      %v652 = vadd.f32 0.0, %v651
      %v653 = vpop.f32.mrb[0].mxu0
      %v654 = vadd.f32 0.0, %v653
      %655 = vmatprep.mubr.f32.mxu0 0.0
      %656 = vmatmul.mubr.f32.gmra.mrb[0].mxu0 %v499
      %v657 = vpop.f32.mrb[0].mxu0
      %v658 = vadd.f32 0.0, %v657
      %v659 = vpop.f32.mrb[0].mxu0
      %v660 = vadd.f32 0.0, %v659
      %661 = vmatprep.mubr.f32.mxu0 0.0
      %662 = vmatmul.mubr.f32.gmra.mrb[0].mxu0 %v502
      %v663 = vpop.f32.mrb[0].mxu0
      %v664 = vadd.f32 0.0, %v663
      %v665 = vpop.f32.mrb[0].mxu0
      %v666 = vadd.f32 0.0, %v665
      %667 = vmatprep.mubr.f32.mxu0 0.0
      %668 = vmatmul.mubr.f32.gmra.mrb[0].mxu0 %v505
      %v669 = vpop.f32.mrb[0].mxu0
      %v670 = vadd.f32 0.0, %v669
      %v671 = vpop.f32.mrb[0].mxu0
      %v672 = vadd.f32 0.0, %v671
      %673 = vmatprep.mubr.f32.mxu0 0.0
      %674 = vmatmul.mubr.f32.gmra.mrb[0].mxu0 %v508
      %v675 = vpop.f32.mrb[0].mxu0
      %v676 = vadd.f32 0.0, %v675
      %v677 = vpop.f32.mrb[0].mxu0
      %v678 = vadd.f32 0.0, %v677
      %679 = vmatprep.mubr.f32.mxu0 0.0
      %680 = vmatmul.mubr.f32.gmra.mrb[0].mxu0 %v511
      %v681 = vpop.f32.mrb[0].mxu0
      %v682 = vadd.f32 0.0, %v681
      %v683 = vpop.f32.mrb[0].mxu0
      %v684 = vadd.f32 0.0, %v683
      %685 = vmatprep.mubr.f32.mxu0 0.0
      %686 = vmatmul.mubr.f32.gmra.mrb[0].mxu0 %v514
      %v687 = vpop.f32.mrb[0].mxu0
      %v688 = vadd.f32 0.0, %v687
      %v689 = vpop.f32.mrb[0].mxu0
      %v690 = vadd.f32 0.0, %v689
      %691 = vmatprep.mubr.f32.mxu0 0.0
      %692 = vmatmul.mubr.f32.gmra.mrb[0].mxu0 %v517
      %v693 = vpop.f32.mrb[0].mxu0
      %v694 = vadd.f32 0.0, %v693
      %v695 = vpop.f32.mrb[0].mxu0
      %v696 = vadd.f32 0.0, %v695
      %697 = vdwg.mxu0
      %698 = vmatprep.subr.mxu0 %v432
      %699 = vmatpush1.msra.mxu0 %v431
      %700 = vmatprep.subr.mxu0 %v436
      %701 = vmatpush1.msra.mxu0 %v435
      %702 = vmatprep.subr.mxu0 %v440
      %703 = vmatpush1.msra.mxu0 %v439
      %704 = vmatprep.subr.mxu0 %v444
      %705 = vmatpush1.msra.mxu0 %v443
      %706 = vmatprep.subr.mxu0 %v448
      %707 = vmatpush1.msra.mxu0 %v447
      %708 = vmatprep.subr.mxu0 %v452
      %709 = vmatpush1.msra.mxu0 %v451
      %710 = vmatprep.subr.mxu0 %v456
      %711 = vmatpush1.msra.mxu0 %v455
      %712 = vmatprep.subr.mxu0 %v460
      %713 = vmatpush1.msra.mxu0 %v459
      %714 = vmatprep.subr.mxu0 0.0
      %715 = vmatpush1.msra.mxu0 0.0
      %716 = vmatprep.subr.mxu0 0.0
      %717 = vmatpush1.msra.mxu0 0.0
      %718 = vmatprep.subr.mxu0 0.0
      %719 = vmatpush1.msra.mxu0 0.0
      %720 = vmatprep.subr.mxu0 0.0
      %721 = vmatpush1.msra.mxu0 0.0
      %722 = vmatprep.subr.mxu0 0.0
      %723 = vmatpush1.msra.mxu0 0.0
      %724 = vmatprep.subr.mxu0 0.0
      %725 = vmatpush1.msra.mxu0 0.0
      %726 = vmatprep.subr.mxu0 0.0
      %727 = vmatpush1.msra.mxu0 0.0
      %728 = vmatprep.subr.mxu0 0.0
      %729 = vmatpush1.msra.mxu0 0.0
      %730 = vmatprep.subr.mxu0 0.0
      %731 = vmatpush1.msra.mxu0 0.0
      %732 = vmatprep.subr.mxu0 0.0
      %733 = vmatpush1.msra.mxu0 0.0
      %734 = vmatprep.subr.mxu0 0.0
      %735 = vmatpush1.msra.mxu0 0.0
      %736 = vmatprep.subr.mxu0 0.0
      %737 = vmatpush1.msra.mxu0 0.0
      %738 = vmatprep.subr.mxu0 0.0
      %739 = vmatpush1.msra.mxu0 0.0
      %740 = vmatprep.subr.mxu0 0.0
      %741 = vmatpush1.msra.mxu0 0.0
      %742 = vmatprep.subr.mxu0 0.0
      %743 = vmatpush1.msra.mxu0 0.0
      %744 = vmatprep.subr.mxu0 0.0
      %745 = vmatpush1.msra.mxu0 0.0
      %746 = vmatprep.subr.mxu0 0.0
      %747 = vmatpush1.msra.mxu0 0.0
      %748 = vmatprep.subr.mxu0 0.0
      %749 = vmatpush1.msra.mxu0 0.0
      %750 = vmatprep.subr.mxu0 0.0
      %751 = vmatpush1.msra.mxu0 0.0
      %752 = vmatprep.subr.mxu0 0.0
      %753 = vmatpush1.msra.mxu0 0.0
      %754 = vmatprep.subr.mxu0 0.0
      %755 = vmatpush1.msra.mxu0 0.0
      %756 = vmatprep.subr.mxu0 0.0
      %757 = vmatpush1.msra.mxu0 0.0
      %758 = vmatprep.subr.mxu0 0.0
      %759 = vmatpush1.msra.mxu0 0.0
      %760 = vmatprep.subr.mxu0 0.0
      %761 = vmatpush1.msra.mxu0 0.0
      %762 = vmatprep.mubr.f32.mxu0 0.0
      %763 = vmatmul.mubr.f32.gmra.mrb[0].mxu0 %v463
      %v764 = vpop.f32.mrb[0].mxu0
      %v765 = vadd.f32 0.0, %v764
      %v766 = vpop.f32.mrb[0].mxu0
      %v767 = vadd.f32 0.0, %v766
      %768 = vmatprep.mubr.f32.mxu0 0.0
      %769 = vmatmul.mubr.f32.gmra.mrb[0].mxu0 %v466
      %v770 = vpop.f32.mrb[0].mxu0
      %v771 = vadd.f32 0.0, %v770
      %v772 = vpop.f32.mrb[0].mxu0
      %v773 = vadd.f32 0.0, %v772
      %774 = vmatprep.mubr.f32.mxu0 0.0
      %775 = vmatmul.mubr.f32.gmra.mrb[0].mxu0 %v469
      %v776 = vpop.f32.mrb[0].mxu0
      %v777 = vadd.f32 0.0, %v776
      %v778 = vpop.f32.mrb[0].mxu0
      %v779 = vadd.f32 0.0, %v778
      %780 = vmatprep.mubr.f32.mxu0 0.0
      %781 = vmatmul.mubr.f32.gmra.mrb[0].mxu0 %v472
      %v782 = vpop.f32.mrb[0].mxu0
      %v783 = vadd.f32 0.0, %v782
      %v784 = vpop.f32.mrb[0].mxu0
      %v785 = vadd.f32 0.0, %v784
      %786 = vmatprep.mubr.f32.mxu0 0.0
      %787 = vmatmul.mubr.f32.gmra.mrb[0].mxu0 %v475
      %v788 = vpop.f32.mrb[0].mxu0
      %v789 = vadd.f32 0.0, %v788
      %v790 = vpop.f32.mrb[0].mxu0
      %v791 = vadd.f32 0.0, %v790
      %792 = vmatprep.mubr.f32.mxu0 0.0
      %793 = vmatmul.mubr.f32.gmra.mrb[0].mxu0 %v478
      %v794 = vpop.f32.mrb[0].mxu0
      %v795 = vadd.f32 0.0, %v794
      %v796 = vpop.f32.mrb[0].mxu0
      %v797 = vadd.f32 0.0, %v796
      %798 = vmatprep.mubr.f32.mxu0 0.0
      %799 = vmatmul.mubr.f32.gmra.mrb[0].mxu0 %v481
      %v800 = vpop.f32.mrb[0].mxu0
      %v801 = vadd.f32 0.0, %v800
      %v802 = vpop.f32.mrb[0].mxu0
      %v803 = vadd.f32 0.0, %v802
      %804 = vmatprep.mubr.f32.mxu0 0.0
      %805 = vmatmul.mubr.f32.gmra.mrb[0].mxu0 %v484
      %v806 = vpop.f32.mrb[0].mxu0
      %v807 = vadd.f32 0.0, %v806
      %v808 = vpop.f32.mrb[0].mxu0
      %v809 = vadd.f32 0.0, %v808
      %810 = vmatprep.mubr.f32.mxu0 0.0
      %811 = vmatmul.mubr.f32.gmra.mrb[0].mxu0 %v487
      %v812 = vpop.f32.mrb[0].mxu0
      %v813 = vadd.f32 0.0, %v812
      %v814 = vpop.f32.mrb[0].mxu0
      %v815 = vadd.f32 0.0, %v814
      %816 = vmatprep.mubr.f32.mxu0 0.0
      %817 = vmatmul.mubr.f32.gmra.mrb[0].mxu0 %v490
      %v818 = vpop.f32.mrb[0].mxu0
      %v819 = vadd.f32 0.0, %v818
      %v820 = vpop.f32.mrb[0].mxu0
      %v821 = vadd.f32 0.0, %v820
      %822 = vmatprep.mubr.f32.mxu0 0.0
      %823 = vmatmul.mubr.f32.gmra.mrb[0].mxu0 %v493
      %v824 = vpop.f32.mrb[0].mxu0
      %v825 = vadd.f32 0.0, %v824
      %v826 = vpop.f32.mrb[0].mxu0
      %v827 = vadd.f32 0.0, %v826
      %828 = vmatprep.mubr.f32.mxu0 0.0
      %829 = vmatmul.mubr.f32.gmra.mrb[0].mxu0 %v496
      %v830 = vpop.f32.mrb[0].mxu0
      %v831 = vadd.f32 0.0, %v830
      %v832 = vpop.f32.mrb[0].mxu0
      %v833 = vadd.f32 0.0, %v832
      %834 = vmatprep.mubr.f32.mxu0 0.0
      %835 = vmatmul.mubr.f32.gmra.mrb[0].mxu0 %v499
      %v836 = vpop.f32.mrb[0].mxu0
      %v837 = vadd.f32 0.0, %v836
      %v838 = vpop.f32.mrb[0].mxu0
      %v839 = vadd.f32 0.0, %v838
      %840 = vmatprep.mubr.f32.mxu0 0.0
      %841 = vmatmul.mubr.f32.gmra.mrb[0].mxu0 %v502
      %v842 = vpop.f32.mrb[0].mxu0
      %v843 = vadd.f32 0.0, %v842
      %v844 = vpop.f32.mrb[0].mxu0
      %v845 = vadd.f32 0.0, %v844
      %846 = vmatprep.mubr.f32.mxu0 0.0
      %847 = vmatmul.mubr.f32.gmra.mrb[0].mxu0 %v505
      %v848 = vpop.f32.mrb[0].mxu0
      %v849 = vadd.f32 0.0, %v848
      %v850 = vpop.f32.mrb[0].mxu0
      %v851 = vadd.f32 0.0, %v850
      %852 = vmatprep.mubr.f32.mxu0 0.0
      %853 = vmatmul.mubr.f32.gmra.mrb[0].mxu0 %v508
      %v854 = vpop.f32.mrb[0].mxu0
      %v855 = vadd.f32 0.0, %v854
      %v856 = vpop.f32.mrb[0].mxu0
      %v857 = vadd.f32 0.0, %v856
      %858 = vmatprep.mubr.f32.mxu0 0.0
      %859 = vmatmul.mubr.f32.gmra.mrb[0].mxu0 %v511
      %v860 = vpop.f32.mrb[0].mxu0
      %v861 = vadd.f32 0.0, %v860
      %v862 = vpop.f32.mrb[0].mxu0
      %v863 = vadd.f32 0.0, %v862
      %864 = vmatprep.mubr.f32.mxu0 0.0
      %865 = vmatmul.mubr.f32.gmra.mrb[0].mxu0 %v514
      %v866 = vpop.f32.mrb[0].mxu0
      %v867 = vadd.f32 0.0, %v866
      %v868 = vpop.f32.mrb[0].mxu0
      %v869 = vadd.f32 0.0, %v868
      %870 = vmatprep.mubr.f32.mxu0 0.0
      %871 = vmatmul.mubr.f32.gmra.mrb[0].mxu0 %v517
      %v872 = vpop.f32.mrb[0].mxu0
      %v873 = vadd.f32 0.0, %v872
      %v874 = vpop.f32.mrb[0].mxu0
      %v875 = vadd.f32 0.0, %v874
      %876 = vdwg.mxu0
      %877 = vst [vmem:[#allocation2] sm:$0xff] %v586
      %878 = vst [vmem:[#allocation2 + $0x8] sm:$0xff] %v588
      %879 = vst [vmem:[#allocation2 + $0x10] sm:$0xff] %v765
      %vm880 = vcmask 998400
      %881 = vst.msk [vmem:[#allocation2 + $0x18] sm:$0xff] %vm880, %v767
      %882 = vst [vmem:[#allocation2 + $0x20] sm:$0xff] %v592
      %883 = vst [vmem:[#allocation2 + $0x28] sm:$0xff] %v594
      %884 = vst [vmem:[#allocation2 + $0x30] sm:$0xff] %v771
      %885 = vst.msk [vmem:[#allocation2 + $0x38] sm:$0xff] %vm880, %v773
      %886 = vst [vmem:[#allocation2 + $0x40] sm:$0xff] %v598
      %887 = vst [vmem:[#allocation2 + $0x48] sm:$0xff] %v600
      %888 = vst [vmem:[#allocation2 + $0x50] sm:$0xff] %v777
      %889 = vst.msk [vmem:[#allocation2 + $0x58] sm:$0xff] %vm880, %v779
      %890 = vst [vmem:[#allocation2 + $0x60] sm:$0xff] %v604
      %891 = vst [vmem:[#allocation2 + $0x68] sm:$0xff] %v606
      %892 = vst [vmem:[#allocation2 + $0x70] sm:$0xff] %v783
      %893 = vst.msk [vmem:[#allocation2 + $0x78] sm:$0xff] %vm880, %v785
      %894 = vst [vmem:[#allocation2 + $0x80] sm:$0xff] %v610
      %895 = vst [vmem:[#allocation2 + $0x88] sm:$0xff] %v612
      %896 = vst [vmem:[#allocation2 + $0x90] sm:$0xff] %v789
      %897 = vst.msk [vmem:[#allocation2 + $0x98] sm:$0xff] %vm880, %v791
      %898 = vst [vmem:[#allocation2 + $0xa0] sm:$0xff] %v616
      %899 = vst [vmem:[#allocation2 + $0xa8] sm:$0xff] %v618
      %900 = vst [vmem:[#allocation2 + $0xb0] sm:$0xff] %v795
      %901 = vst.msk [vmem:[#allocation2 + $0xb8] sm:$0xff] %vm880, %v797
      %902 = vst [vmem:[#allocation2 + $0xc0] sm:$0xff] %v622
      %903 = vst [vmem:[#allocation2 + $0xc8] sm:$0xff] %v624
      %904 = vst [vmem:[#allocation2 + $0xd0] sm:$0xff] %v801
      %905 = vst.msk [vmem:[#allocation2 + $0xd8] sm:$0xff] %vm880, %v803
      %906 = vst [vmem:[#allocation2 + $0xe0] sm:$0xff] %v628
      %907 = vst [vmem:[#allocation2 + $0xe8] sm:$0xff] %v630
      %908 = vst [vmem:[#allocation2 + $0xf0] sm:$0xff] %v807
      %909 = vst.msk [vmem:[#allocation2 + $0xf8] sm:$0xff] %vm880, %v809
      %910 = vst [vmem:[#allocation2 + $0x100] sm:$0xff] %v634
      %911 = vst [vmem:[#allocation2 + $0x108] sm:$0xff] %v636
      %912 = vst [vmem:[#allocation2 + $0x110] sm:$0xff] %v813
      %913 = vst.msk [vmem:[#allocation2 + $0x118] sm:$0xff] %vm880, %v815
      %914 = vst [vmem:[#allocation2 + $0x120] sm:$0xff] %v640
      %915 = vst [vmem:[#allocation2 + $0x128] sm:$0xff] %v642
      %916 = vst [vmem:[#allocation2 + $0x130] sm:$0xff] %v819
      %917 = vst.msk [vmem:[#allocation2 + $0x138] sm:$0xff] %vm880, %v821
      %918 = vst [vmem:[#allocation2 + $0x140] sm:$0xff] %v646
      %919 = vst [vmem:[#allocation2 + $0x148] sm:$0xff] %v648
      %920 = vst [vmem:[#allocation2 + $0x150] sm:$0xff] %v825
      %921 = vst.msk [vmem:[#allocation2 + $0x158] sm:$0xff] %vm880, %v827
      %922 = vst [vmem:[#allocation2 + $0x160] sm:$0xff] %v652
      %923 = vst [vmem:[#allocation2 + $0x168] sm:$0xff] %v654
      %924 = vst [vmem:[#allocation2 + $0x170] sm:$0xff] %v831
      %925 = vst.msk [vmem:[#allocation2 + $0x178] sm:$0xff] %vm880, %v833
      %926 = vst [vmem:[#allocation2 + $0x180] sm:$0xff] %v658
      %927 = vst [vmem:[#allocation2 + $0x188] sm:$0xff] %v660
      %928 = vst [vmem:[#allocation2 + $0x190] sm:$0xff] %v837
      %929 = vst.msk [vmem:[#allocation2 + $0x198] sm:$0xff] %vm880, %v839
      %930 = vst [vmem:[#allocation2 + $0x1a0] sm:$0xff] %v664
      %931 = vst [vmem:[#allocation2 + $0x1a8] sm:$0xff] %v666
      %932 = vst [vmem:[#allocation2 + $0x1b0] sm:$0xff] %v843
      %933 = vst.msk [vmem:[#allocation2 + $0x1b8] sm:$0xff] %vm880, %v845
      %934 = vst [vmem:[#allocation2 + $0x1c0] sm:$0xff] %v670
      %935 = vst [vmem:[#allocation2 + $0x1c8] sm:$0xff] %v672
      %936 = vst [vmem:[#allocation2 + $0x1d0] sm:$0xff] %v849
      %937 = vst.msk [vmem:[#allocation2 + $0x1d8] sm:$0xff] %vm880, %v851
      %938 = vst [vmem:[#allocation2 + $0x1e0] sm:$0xff] %v676
      %939 = vst [vmem:[#allocation2 + $0x1e8] sm:$0xff] %v678
      %940 = vst [vmem:[#allocation2 + $0x1f0] sm:$0xff] %v855
      %941 = vst.msk [vmem:[#allocation2 + $0x1f8] sm:$0xff] %vm880, %v857
      %942 = vst [vmem:[#allocation2 + $0x200] sm:$0xff] %v682
      %943 = vst [vmem:[#allocation2 + $0x208] sm:$0xff] %v684
      %944 = vst [vmem:[#allocation2 + $0x210] sm:$0xff] %v861
      %945 = vst.msk [vmem:[#allocation2 + $0x218] sm:$0xff] %vm880, %v863
      %946 = vst [vmem:[#allocation2 + $0x220] sm:$0xff] %v688
      %947 = vst [vmem:[#allocation2 + $0x228] sm:$0xff] %v690
      %948 = vst [vmem:[#allocation2 + $0x230] sm:$0xff] %v867
      %949 = vst.msk [vmem:[#allocation2 + $0x238] sm:$0xff] %vm880, %v869
      %950 = vst [vmem:[#allocation2 + $0x240] sm:$0x7] %v694
      %951 = vst [vmem:[#allocation2 + $0x248] sm:$0x7] %v696
      %952 = vst [vmem:[#allocation2 + $0x250] sm:$0x7] %v873
      %vm953 = vcmask 993280
      %954 = vst.msk [vmem:[#allocation2 + $0x258] sm:$0x7] %vm953, %v875
      %v955 = vld [vmem:[#allocation2] sm:$0x7]
      %v956 = vld [vmem:[#allocation2 + $0x8] sm:$0x7]
      %v957 = vld [vmem:[#allocation2 + $0x10] sm:$0x7]
      %v958 = vadd.f32 %v955, 0.0
      %v959 = vadd.f32 %v956, 0.0
      %v960 = vadd.f32 %v957, 0.0
      %v961 = vld [vmem:[#allocation2] sm:$0x38]
      %v962 = vld [vmem:[#allocation2 + $0x8] sm:$0x38]
      %v963 = vld [vmem:[#allocation2 + $0x10] sm:$0x38]
      %v967 = vrot.slane %v961, 3
      %v968 = vrot.slane %v962, 3
      %v969 = vrot.slane %v963, 3
      %970 = vrot.lane.b32.xlu0 %v967, 127
      %v971 = vpop.permute.xlu0 %970
      %972 = vrot.lane.b32.xlu0 %v968, 127
      %v973 = vpop.permute.xlu0 %972
      %974 = vrot.lane.b32.xlu0 %v969, 127
      %v975 = vpop.permute.xlu0 %974
      %vm976 = vcmask 1039360
      %v977 = vsel %vm976, %v971, %v973
      %v978 = vsel %vm976, %v973, %v975
      %v982 = vadd.f32 %v958, %v977
      %v983 = vadd.f32 %v959, %v978
      %v984 = vadd.f32 %v960, %v975
      %v985 = vld [vmem:[#allocation2] sm:$0xc0]
      %v986 = vld [vmem:[#allocation2 + $0x8] sm:$0xc0]
      %v987 = vld [vmem:[#allocation2 + $0x10] sm:$0xc0]
      %v988 = vld [vmem:[#allocation2 + $0x20] sm:$0x1]
      %v989 = vld [vmem:[#allocation2 + $0x28] sm:$0x1]
      %v990 = vld [vmem:[#allocation2 + $0x30] sm:$0x1]
      %vm997 = vcmask 1041408
      %v998 = vrot.slane %v985, 6
      %v999 = vrot.slane %v988, 6
      %v1000 = vsel %vm997, %v998, %v999
      %v1001 = vrot.slane %v986, 6
      %v1002 = vrot.slane %v989, 6
      %v1003 = vsel %vm997, %v1001, %v1002
      %v1004 = vrot.slane %v987, 6
      %v1005 = vrot.slane %v990, 6
      %v1006 = vsel %vm997, %v1004, %v1005
      %1007 = vrot.lane.b32.xlu0 %v1000, 126
      %v1008 = vpop.permute.xlu0 %1007
      %1009 = vrot.lane.b32.xlu0 %v1003, 126
      %v1010 = vpop.permute.xlu0 %1009
      %1011 = vrot.lane.b32.xlu0 %v1006, 126
      %v1012 = vpop.permute.xlu0 %1011
      %vm1013 = vcmask 1031168
      %v1014 = vsel %vm1013, %v1008, %v1010
      %v1015 = vsel %vm1013, %v1010, %v1012
      %v1019 = vadd.f32 %v982, %v1014
      %v1020 = vadd.f32 %v983, %v1015
      %v1021 = vadd.f32 %v984, %v1012
      %v1022 = vld [vmem:[#allocation2 + $0x20] sm:$0xe]
      %v1023 = vld [vmem:[#allocation2 + $0x28] sm:$0xe]
      %v1024 = vld [vmem:[#allocation2 + $0x30] sm:$0xe]
      %v1028 = vrot.slane %v1022, 1
      %v1029 = vrot.slane %v1023, 1
      %v1030 = vrot.slane %v1024, 1
      %1031 = vrot.lane.b32.xlu0 %v1028, 125
      %v1032 = vpop.permute.xlu0 %1031
      %1033 = vrot.lane.b32.xlu0 %v1029, 125
      %v1034 = vpop.permute.xlu0 %1033
      %1035 = vrot.lane.b32.xlu0 %v1030, 125
      %v1036 = vpop.permute.xlu0 %1035
      %vm1037 = vcmask 1022976
      %v1038 = vsel %vm1037, %v1032, %v1034
      %v1039 = vsel %vm1037, %v1034, %v1036
      %v1043 = vadd.f32 %v1019, %v1038
      %v1044 = vadd.f32 %v1020, %v1039
      %v1045 = vadd.f32 %v1021, %v1036
      %v1046 = vld [vmem:[#allocation2 + $0x20] sm:$0x70]
      %v1047 = vld [vmem:[#allocation2 + $0x28] sm:$0x70]
      %v1048 = vld [vmem:[#allocation2 + $0x30] sm:$0x70]
      %v1052 = vrot.slane %v1046, 4
      %v1053 = vrot.slane %v1047, 4
      %v1054 = vrot.slane %v1048, 4
      %1055 = vrot.lane.b32.xlu0 %v1052, 124
      %v1056 = vpop.permute.xlu0 %1055
      %1057 = vrot.lane.b32.xlu0 %v1053, 124
      %v1058 = vpop.permute.xlu0 %1057
      %1059 = vrot.lane.b32.xlu0 %v1054, 124
      %v1060 = vpop.permute.xlu0 %1059
      %vm1061 = vcmask 1014784
      %v1062 = vsel %vm1061, %v1056, %v1058
      %v1063 = vsel %vm1061, %v1058, %v1060
      %v1067 = vadd.f32 %v1043, %v1062
      %v1068 = vadd.f32 %v1044, %v1063
      %v1069 = vadd.f32 %v1045, %v1060
      %v1070 = vld [vmem:[#allocation2 + $0x20] sm:$0x80]
      %v1071 = vld [vmem:[#allocation2 + $0x28] sm:$0x80]
      %v1072 = vld [vmem:[#allocation2 + $0x30] sm:$0x80]
      %v1073 = vld [vmem:[#allocation2 + $0x40] sm:$0x3]
      %v1074 = vld [vmem:[#allocation2 + $0x48] sm:$0x3]
      %v1075 = vld [vmem:[#allocation2 + $0x50] sm:$0x3]
      %vm1082 = vcmask 1040384
      %v1083 = vrot.slane %v1070, 7
      %v1084 = vrot.slane %v1073, 7
      %v1085 = vsel %vm1082, %v1083, %v1084
      %v1086 = vrot.slane %v1071, 7
      %v1087 = vrot.slane %v1074, 7
      %v1088 = vsel %vm1082, %v1086, %v1087
      %v1089 = vrot.slane %v1072, 7
      %v1090 = vrot.slane %v1075, 7
      %v1091 = vsel %vm1082, %v1089, %v1090
      %1092 = vrot.lane.b32.xlu0 %v1085, 123
      %v1093 = vpop.permute.xlu0 %1092
      %1094 = vrot.lane.b32.xlu0 %v1088, 123
      %v1095 = vpop.permute.xlu0 %1094
      %1096 = vrot.lane.b32.xlu0 %v1091, 123
      %v1097 = vpop.permute.xlu0 %1096
      %vm1098 = vcmask 1006592
      %v1099 = vsel %vm1098, %v1093, %v1095
      %v1100 = vsel %vm1098, %v1095, %v1097
      %v1104 = vadd.f32 %v1067, %v1099
      %v1105 = vadd.f32 %v1068, %v1100
      %v1106 = vadd.f32 %v1069, %v1097
      %v1107 = vld [vmem:[#allocation2 + $0x40] sm:$0x1c]
      %v1108 = vld [vmem:[#allocation2 + $0x48] sm:$0x1c]
      %v1109 = vld [vmem:[#allocation2 + $0x50] sm:$0x1c]
      %v1113 = vrot.slane %v1107, 2
      %v1114 = vrot.slane %v1108, 2
      %v1115 = vrot.slane %v1109, 2
      %1116 = vrot.lane.b32.xlu0 %v1113, 122
      %v1117 = vpop.permute.xlu0 %1116
      %1118 = vrot.lane.b32.xlu0 %v1114, 122
      %v1119 = vpop.permute.xlu0 %1118
      %1120 = vrot.lane.b32.xlu0 %v1115, 122
      %v1121 = vpop.permute.xlu0 %1120
      %v1122 = vsel %vm880, %v1117, %v1119
      %v1123 = vsel %vm880, %v1119, %v1121
      %v1127 = vadd.f32 %v1104, %v1122
      %v1128 = vadd.f32 %v1105, %v1123
      %v1129 = vadd.f32 %v1106, %v1121
      %v1130 = vld [vmem:[#allocation2 + $0x40] sm:$0xe0]
      %v1131 = vld [vmem:[#allocation2 + $0x48] sm:$0xe0]
      %v1132 = vld [vmem:[#allocation2 + $0x50] sm:$0xe0]
      %v1136 = vrot.slane %v1130, 5
      %v1137 = vrot.slane %v1131, 5
      %v1138 = vrot.slane %v1132, 5
      %1139 = vrot.lane.b32.xlu0 %v1136, 106
      %v1140 = vpop.permute.xlu0 %1139
      %1141 = vrot.lane.b32.xlu0 %v1137, 106
      %v1142 = vpop.permute.xlu0 %1141
      %1143 = vrot.lane.b32.xlu0 %v1138, 106
      %v1144 = vpop.permute.xlu0 %1143
      %vm1145 = vcmask 867328
      %v1146 = vsel %vm1145, %v1140, %v1142
      %v1147 = vsel %vm1145, %v1142, %v1144
      %v1151 = vadd.f32 %v1127, %v1146
      %v1152 = vadd.f32 %v1128, %v1147
      %v1153 = vadd.f32 %v1129, %v1144
      %v1154 = vld [vmem:[#allocation2 + $0x60] sm:$0x7]
      %v1155 = vld [vmem:[#allocation2 + $0x68] sm:$0x7]
      %v1156 = vld [vmem:[#allocation2 + $0x70] sm:$0x7]
      %1160 = vrot.lane.b32.xlu0 %v1154, 105
      %v1161 = vpop.permute.xlu0 %1160
      %1162 = vrot.lane.b32.xlu0 %v1155, 105
      %v1163 = vpop.permute.xlu0 %1162
      %1164 = vrot.lane.b32.xlu0 %v1156, 105
      %v1165 = vpop.permute.xlu0 %1164
      %vm1166 = vcmask 859136
      %v1167 = vsel %vm1166, %v1161, %v1163
      %v1168 = vsel %vm1166, %v1163, %v1165
      %v1172 = vadd.f32 %v1151, %v1167
      %v1173 = vadd.f32 %v1152, %v1168
      %v1174 = vadd.f32 %v1153, %v1165
      %v1175 = vld [vmem:[#allocation2 + $0x60] sm:$0x38]
      %v1176 = vld [vmem:[#allocation2 + $0x68] sm:$0x38]
      %v1177 = vld [vmem:[#allocation2 + $0x70] sm:$0x38]
      %v1181 = vrot.slane %v1175, 3
      %v1182 = vrot.slane %v1176, 3
      %v1183 = vrot.slane %v1177, 3
      %1184 = vrot.lane.b32.xlu0 %v1181, 104
      %v1185 = vpop.permute.xlu0 %1184
      %1186 = vrot.lane.b32.xlu0 %v1182, 104
      %v1187 = vpop.permute.xlu0 %1186
      %1188 = vrot.lane.b32.xlu0 %v1183, 104
      %v1189 = vpop.permute.xlu0 %1188
      %vm1190 = vcmask 850944
      %v1191 = vsel %vm1190, %v1185, %v1187
      %v1192 = vsel %vm1190, %v1187, %v1189
      %v1196 = vadd.f32 %v1172, %v1191
      %v1197 = vadd.f32 %v1173, %v1192
      %v1198 = vadd.f32 %v1174, %v1189
      %v1199 = vld [vmem:[#allocation2 + $0x60] sm:$0xc0]
      %v1200 = vld [vmem:[#allocation2 + $0x68] sm:$0xc0]
      %v1201 = vld [vmem:[#allocation2 + $0x70] sm:$0xc0]
      %v1202 = vld [vmem:[#allocation2 + $0x80] sm:$0x1]
      %v1203 = vld [vmem:[#allocation2 + $0x88] sm:$0x1]
      %v1204 = vld [vmem:[#allocation2 + $0x90] sm:$0x1]
      %v1211 = vrot.slane %v1199, 6
      %v1212 = vrot.slane %v1202, 6
      %v1213 = vsel %vm997, %v1211, %v1212
      %v1214 = vrot.slane %v1200, 6
      %v1215 = vrot.slane %v1203, 6
      %v1216 = vsel %vm997, %v1214, %v1215
      %v1217 = vrot.slane %v1201, 6
      %v1218 = vrot.slane %v1204, 6
      %v1219 = vsel %vm997, %v1217, %v1218
      %1220 = vrot.lane.b32.xlu0 %v1213, 103
      %v1221 = vpop.permute.xlu0 %1220
      %1222 = vrot.lane.b32.xlu0 %v1216, 103
      %v1223 = vpop.permute.xlu0 %1222
      %1224 = vrot.lane.b32.xlu0 %v1219, 103
      %v1225 = vpop.permute.xlu0 %1224
      %vm1226 = vcmask 842752
      %v1227 = vsel %vm1226, %v1221, %v1223
      %v1228 = vsel %vm1226, %v1223, %v1225
      %v1232 = vadd.f32 %v1196, %v1227
      %v1233 = vadd.f32 %v1197, %v1228
      %v1234 = vadd.f32 %v1198, %v1225
      %v1235 = vld [vmem:[#allocation2 + $0x80] sm:$0xe]
      %v1236 = vld [vmem:[#allocation2 + $0x88] sm:$0xe]
      %v1237 = vld [vmem:[#allocation2 + $0x90] sm:$0xe]
      %v1241 = vrot.slane %v1235, 1
      %v1242 = vrot.slane %v1236, 1
      %v1243 = vrot.slane %v1237, 1
      %1244 = vrot.lane.b32.xlu0 %v1241, 102
      %v1245 = vpop.permute.xlu0 %1244
      %1246 = vrot.lane.b32.xlu0 %v1242, 102
      %v1247 = vpop.permute.xlu0 %1246
      %1248 = vrot.lane.b32.xlu0 %v1243, 102
      %v1249 = vpop.permute.xlu0 %1248
      %vm1250 = vcmask 834560
      %v1251 = vsel %vm1250, %v1245, %v1247
      %v1252 = vsel %vm1250, %v1247, %v1249
      %v1256 = vadd.f32 %v1232, %v1251
      %v1257 = vadd.f32 %v1233, %v1252
      %v1258 = vadd.f32 %v1234, %v1249
      %v1259 = vld [vmem:[#allocation2 + $0x80] sm:$0x70]
      %v1260 = vld [vmem:[#allocation2 + $0x88] sm:$0x70]
      %v1261 = vld [vmem:[#allocation2 + $0x90] sm:$0x70]
      %v1265 = vrot.slane %v1259, 4
      %v1266 = vrot.slane %v1260, 4
      %v1267 = vrot.slane %v1261, 4
      %1268 = vrot.lane.b32.xlu0 %v1265, 101
      %v1269 = vpop.permute.xlu0 %1268
      %1270 = vrot.lane.b32.xlu0 %v1266, 101
      %v1271 = vpop.permute.xlu0 %1270
      %1272 = vrot.lane.b32.xlu0 %v1267, 101
      %v1273 = vpop.permute.xlu0 %1272
      %vm1274 = vcmask 826368
      %v1275 = vsel %vm1274, %v1269, %v1271
      %v1276 = vsel %vm1274, %v1271, %v1273
      %v1280 = vadd.f32 %v1256, %v1275
      %v1281 = vadd.f32 %v1257, %v1276
      %v1282 = vadd.f32 %v1258, %v1273
      %v1283 = vld [vmem:[#allocation2 + $0x80] sm:$0x80]
      %v1284 = vld [vmem:[#allocation2 + $0x88] sm:$0x80]
      %v1285 = vld [vmem:[#allocation2 + $0x90] sm:$0x80]
      %v1286 = vld [vmem:[#allocation2 + $0xa0] sm:$0x3]
      %v1287 = vld [vmem:[#allocation2 + $0xa8] sm:$0x3]
      %v1288 = vld [vmem:[#allocation2 + $0xb0] sm:$0x3]
      %v1295 = vrot.slane %v1283, 7
      %v1296 = vrot.slane %v1286, 7
      %v1297 = vsel %vm1082, %v1295, %v1296
      %v1298 = vrot.slane %v1284, 7
      %v1299 = vrot.slane %v1287, 7
      %v1300 = vsel %vm1082, %v1298, %v1299
      %v1301 = vrot.slane %v1285, 7
      %v1302 = vrot.slane %v1288, 7
      %v1303 = vsel %vm1082, %v1301, %v1302
      %1304 = vrot.lane.b32.xlu0 %v1297, 100
      %v1305 = vpop.permute.xlu0 %1304
      %1306 = vrot.lane.b32.xlu0 %v1300, 100
      %v1307 = vpop.permute.xlu0 %1306
      %1308 = vrot.lane.b32.xlu0 %v1303, 100
      %v1309 = vpop.permute.xlu0 %1308
      %vm1310 = vcmask 818176
      %v1311 = vsel %vm1310, %v1305, %v1307
      %v1312 = vsel %vm1310, %v1307, %v1309
      %v1316 = vadd.f32 %v1280, %v1311
      %v1317 = vadd.f32 %v1281, %v1312
      %v1318 = vadd.f32 %v1282, %v1309
      %v1319 = vld [vmem:[#allocation2 + $0xa0] sm:$0x1c]
      %v1320 = vld [vmem:[#allocation2 + $0xa8] sm:$0x1c]
      %v1321 = vld [vmem:[#allocation2 + $0xb0] sm:$0x1c]
      %v1322 = vld [vmem:[#allocation2 + $0xb8] sm:$0x1c]
      %v1327 = vrot.slane %v1319, 2
      %v1328 = vrot.slane %v1320, 2
      %v1329 = vrot.slane %v1321, 2
      %v1330 = vrot.slane %v1322, 2
      %1331 = vrot.lane.b32.xlu0 %v1327, 84
      %v1332 = vpop.permute.xlu0 %1331
      %1333 = vrot.lane.b32.xlu0 %v1328, 84
      %v1334 = vpop.permute.xlu0 %1333
      %1335 = vrot.lane.b32.xlu0 %v1329, 84
      %v1336 = vpop.permute.xlu0 %1335
      %1337 = vrot.lane.b32.xlu0 %v1330, 84
      %v1338 = vpop.permute.xlu0 %1337
      %vm1339 = vcmask 687104
      %v1340 = vsel %vm1339, %v1332, %v1334
      %v1341 = vsel %vm1339, %v1334, %v1336
      %v1342 = vsel %vm1339, %v1336, %v1338
      %v1346 = vadd.f32 %v1316, %v1340
      %v1347 = vadd.f32 %v1317, %v1341
      %v1348 = vadd.f32 %v1318, %v1342
      %v1349 = vld [vmem:[#allocation2 + $0xa0] sm:$0xe0]
      %v1350 = vld [vmem:[#allocation2 + $0xa8] sm:$0xe0]
      %v1351 = vld [vmem:[#allocation2 + $0xb0] sm:$0xe0]
      %v1352 = vld [vmem:[#allocation2 + $0xb8] sm:$0xe0]
      %v1357 = vrot.slane %v1349, 5
      %v1358 = vrot.slane %v1350, 5
      %v1359 = vrot.slane %v1351, 5
      %v1360 = vrot.slane %v1352, 5
      %1361 = vrot.lane.b32.xlu0 %v1357, 83
      %v1362 = vpop.permute.xlu0 %1361
      %1363 = vrot.lane.b32.xlu0 %v1358, 83
      %v1364 = vpop.permute.xlu0 %1363
      %1365 = vrot.lane.b32.xlu0 %v1359, 83
      %v1366 = vpop.permute.xlu0 %1365
      %1367 = vrot.lane.b32.xlu0 %v1360, 83
      %v1368 = vpop.permute.xlu0 %1367
      %vm1369 = vcmask 678912
      %v1370 = vsel %vm1369, %v1362, %v1364
      %v1371 = vsel %vm1369, %v1364, %v1366
      %v1372 = vsel %vm1369, %v1366, %v1368
      %v1376 = vadd.f32 %v1346, %v1370
      %v1377 = vadd.f32 %v1347, %v1371
      %v1378 = vadd.f32 %v1348, %v1372
      %v1379 = vld [vmem:[#allocation2 + $0xc0] sm:$0x7]
      %v1380 = vld [vmem:[#allocation2 + $0xc8] sm:$0x7]
      %v1381 = vld [vmem:[#allocation2 + $0xd0] sm:$0x7]
      %v1382 = vld [vmem:[#allocation2 + $0xd8] sm:$0x7]
      %1387 = vrot.lane.b32.xlu0 %v1379, 82
      %v1388 = vpop.permute.xlu0 %1387
      %1389 = vrot.lane.b32.xlu0 %v1380, 82
      %v1390 = vpop.permute.xlu0 %1389
      %1391 = vrot.lane.b32.xlu0 %v1381, 82
      %v1392 = vpop.permute.xlu0 %1391
      %1393 = vrot.lane.b32.xlu0 %v1382, 82
      %v1394 = vpop.permute.xlu0 %1393
      %vm1395 = vcmask 670720
      %v1396 = vsel %vm1395, %v1388, %v1390
      %v1397 = vsel %vm1395, %v1390, %v1392
      %v1398 = vsel %vm1395, %v1392, %v1394
      %v1402 = vadd.f32 %v1376, %v1396
      %v1403 = vadd.f32 %v1377, %v1397
      %v1404 = vadd.f32 %v1378, %v1398
      %v1405 = vld [vmem:[#allocation2 + $0xc0] sm:$0x38]
      %v1406 = vld [vmem:[#allocation2 + $0xc8] sm:$0x38]
      %v1407 = vld [vmem:[#allocation2 + $0xd0] sm:$0x38]
      %v1408 = vld [vmem:[#allocation2 + $0xd8] sm:$0x38]
      %v1413 = vrot.slane %v1405, 3
      %v1414 = vrot.slane %v1406, 3
      %v1415 = vrot.slane %v1407, 3
      %v1416 = vrot.slane %v1408, 3
      %1417 = vrot.lane.b32.xlu0 %v1413, 81
      %v1418 = vpop.permute.xlu0 %1417
      %1419 = vrot.lane.b32.xlu0 %v1414, 81
      %v1420 = vpop.permute.xlu0 %1419
      %1421 = vrot.lane.b32.xlu0 %v1415, 81
      %v1422 = vpop.permute.xlu0 %1421
      %1423 = vrot.lane.b32.xlu0 %v1416, 81
      %v1424 = vpop.permute.xlu0 %1423
      %vm1425 = vcmask 662528
      %v1426 = vsel %vm1425, %v1418, %v1420
      %v1427 = vsel %vm1425, %v1420, %v1422
      %v1428 = vsel %vm1425, %v1422, %v1424
      %v1432 = vadd.f32 %v1402, %v1426
      %v1433 = vadd.f32 %v1403, %v1427
      %v1434 = vadd.f32 %v1404, %v1428
      %v1435 = vld [vmem:[#allocation2 + $0xc0] sm:$0xc0]
      %v1436 = vld [vmem:[#allocation2 + $0xc8] sm:$0xc0]
      %v1437 = vld [vmem:[#allocation2 + $0xd0] sm:$0xc0]
      %v1438 = vld [vmem:[#allocation2 + $0xd8] sm:$0xc0]
      %v1439 = vld [vmem:[#allocation2 + $0xe0] sm:$0x1]
      %v1440 = vld [vmem:[#allocation2 + $0xe8] sm:$0x1]
      %v1441 = vld [vmem:[#allocation2 + $0xf0] sm:$0x1]
      %v1442 = vld [vmem:[#allocation2 + $0xf8] sm:$0x1]
      %v1451 = vrot.slane %v1435, 6
      %v1452 = vrot.slane %v1439, 6
      %v1453 = vsel %vm997, %v1451, %v1452
      %v1454 = vrot.slane %v1436, 6
      %v1455 = vrot.slane %v1440, 6
      %v1456 = vsel %vm997, %v1454, %v1455
      %v1457 = vrot.slane %v1437, 6
      %v1458 = vrot.slane %v1441, 6
      %v1459 = vsel %vm997, %v1457, %v1458
      %v1460 = vrot.slane %v1438, 6
      %v1461 = vrot.slane %v1442, 6
      %v1462 = vsel %vm997, %v1460, %v1461
      %1463 = vrot.lane.b32.xlu0 %v1453, 80
      %v1464 = vpop.permute.xlu0 %1463
      %1465 = vrot.lane.b32.xlu0 %v1456, 80
      %v1466 = vpop.permute.xlu0 %1465
      %1467 = vrot.lane.b32.xlu0 %v1459, 80
      %v1468 = vpop.permute.xlu0 %1467
      %1469 = vrot.lane.b32.xlu0 %v1462, 80
      %v1470 = vpop.permute.xlu0 %1469
      %vm1471 = vcmask 654336
      %v1472 = vsel %vm1471, %v1464, %v1466
      %v1473 = vsel %vm1471, %v1466, %v1468
      %v1474 = vsel %vm1471, %v1468, %v1470
      %v1478 = vadd.f32 %v1432, %v1472
      %v1479 = vadd.f32 %v1433, %v1473
      %v1480 = vadd.f32 %v1434, %v1474
      %v1481 = vld [vmem:[#allocation2 + $0xe0] sm:$0xe]
      %v1482 = vld [vmem:[#allocation2 + $0xe8] sm:$0xe]
      %v1483 = vld [vmem:[#allocation2 + $0xf0] sm:$0xe]
      %v1484 = vld [vmem:[#allocation2 + $0xf8] sm:$0xe]
      %v1489 = vrot.slane %v1481, 1
      %v1490 = vrot.slane %v1482, 1
      %v1491 = vrot.slane %v1483, 1
      %v1492 = vrot.slane %v1484, 1
      %1493 = vrot.lane.b32.xlu0 %v1489, 79
      %v1494 = vpop.permute.xlu0 %1493
      %1495 = vrot.lane.b32.xlu0 %v1490, 79
      %v1496 = vpop.permute.xlu0 %1495
      %1497 = vrot.lane.b32.xlu0 %v1491, 79
      %v1498 = vpop.permute.xlu0 %1497
      %1499 = vrot.lane.b32.xlu0 %v1492, 79
      %v1500 = vpop.permute.xlu0 %1499
      %vm1501 = vcmask 646144
      %v1502 = vsel %vm1501, %v1494, %v1496
      %v1503 = vsel %vm1501, %v1496, %v1498
      %v1504 = vsel %vm1501, %v1498, %v1500
      %v1508 = vadd.f32 %v1478, %v1502
      %v1509 = vadd.f32 %v1479, %v1503
      %v1510 = vadd.f32 %v1480, %v1504
      %v1511 = vld [vmem:[#allocation2 + $0xe0] sm:$0x70]
      %v1512 = vld [vmem:[#allocation2 + $0xe8] sm:$0x70]
      %v1513 = vld [vmem:[#allocation2 + $0xf0] sm:$0x70]
      %v1514 = vld [vmem:[#allocation2 + $0xf8] sm:$0x70]
      %v1519 = vrot.slane %v1511, 4
      %v1520 = vrot.slane %v1512, 4
      %v1521 = vrot.slane %v1513, 4
      %v1522 = vrot.slane %v1514, 4
      %1523 = vrot.lane.b32.xlu0 %v1519, 78
      %v1524 = vpop.permute.xlu0 %1523
      %1525 = vrot.lane.b32.xlu0 %v1520, 78
      %v1526 = vpop.permute.xlu0 %1525
      %1527 = vrot.lane.b32.xlu0 %v1521, 78
      %v1528 = vpop.permute.xlu0 %1527
      %1529 = vrot.lane.b32.xlu0 %v1522, 78
      %v1530 = vpop.permute.xlu0 %1529
      %vm1531 = vcmask 637952
      %v1532 = vsel %vm1531, %v1524, %v1526
      %v1533 = vsel %vm1531, %v1526, %v1528
      %v1534 = vsel %vm1531, %v1528, %v1530
      %v1538 = vadd.f32 %v1508, %v1532
      %v1539 = vadd.f32 %v1509, %v1533
      %v1540 = vadd.f32 %v1510, %v1534
      %v1541 = vld [vmem:[#allocation2 + $0xe0] sm:$0x80]
      %v1542 = vld [vmem:[#allocation2 + $0xe8] sm:$0x80]
      %v1543 = vld [vmem:[#allocation2 + $0xf0] sm:$0x80]
      %v1544 = vld [vmem:[#allocation2 + $0xf8] sm:$0x80]
      %v1545 = vld [vmem:[#allocation2 + $0x100] sm:$0x3]
      %v1546 = vld [vmem:[#allocation2 + $0x108] sm:$0x3]
      %v1547 = vld [vmem:[#allocation2 + $0x110] sm:$0x3]
      %v1548 = vld [vmem:[#allocation2 + $0x118] sm:$0x3]
      %v1557 = vrot.slane %v1541, 7
      %v1558 = vrot.slane %v1545, 7
      %v1559 = vsel %vm1082, %v1557, %v1558
      %v1560 = vrot.slane %v1542, 7
      %v1561 = vrot.slane %v1546, 7
      %v1562 = vsel %vm1082, %v1560, %v1561
      %v1563 = vrot.slane %v1543, 7
      %v1564 = vrot.slane %v1547, 7
      %v1565 = vsel %vm1082, %v1563, %v1564
      %v1566 = vrot.slane %v1544, 7
      %v1567 = vrot.slane %v1548, 7
      %v1568 = vsel %vm1082, %v1566, %v1567
      %1569 = vrot.lane.b32.xlu0 %v1559, 62
      %v1570 = vpop.permute.xlu0 %1569
      %1571 = vrot.lane.b32.xlu0 %v1562, 62
      %v1572 = vpop.permute.xlu0 %1571
      %1573 = vrot.lane.b32.xlu0 %v1565, 62
      %v1574 = vpop.permute.xlu0 %1573
      %1575 = vrot.lane.b32.xlu0 %v1568, 62
      %v1576 = vpop.permute.xlu0 %1575
      %vm1577 = vcmask 506880
      %v1578 = vsel %vm1577, %v1570, %v1572
      %v1579 = vsel %vm1577, %v1572, %v1574
      %v1580 = vsel %vm1577, %v1574, %v1576
      %v1584 = vadd.f32 %v1538, %v1578
      %v1585 = vadd.f32 %v1539, %v1579
      %v1586 = vadd.f32 %v1540, %v1580
      %v1587 = vld [vmem:[#allocation2 + $0x100] sm:$0x1c]
      %v1588 = vld [vmem:[#allocation2 + $0x108] sm:$0x1c]
      %v1589 = vld [vmem:[#allocation2 + $0x110] sm:$0x1c]
      %v1590 = vld [vmem:[#allocation2 + $0x118] sm:$0x1c]
      %v1595 = vrot.slane %v1587, 2
      %v1596 = vrot.slane %v1588, 2
      %v1597 = vrot.slane %v1589, 2
      %v1598 = vrot.slane %v1590, 2
      %1599 = vrot.lane.b32.xlu0 %v1595, 61
      %v1600 = vpop.permute.xlu0 %1599
      %1601 = vrot.lane.b32.xlu0 %v1596, 61
      %v1602 = vpop.permute.xlu0 %1601
      %1603 = vrot.lane.b32.xlu0 %v1597, 61
      %v1604 = vpop.permute.xlu0 %1603
      %1605 = vrot.lane.b32.xlu0 %v1598, 61
      %v1606 = vpop.permute.xlu0 %1605
      %vm1607 = vcmask 498688
      %v1608 = vsel %vm1607, %v1600, %v1602
      %v1609 = vsel %vm1607, %v1602, %v1604
      %v1610 = vsel %vm1607, %v1604, %v1606
      %v1614 = vadd.f32 %v1584, %v1608
      %v1615 = vadd.f32 %v1585, %v1609
      %v1616 = vadd.f32 %v1586, %v1610
      %v1617 = vld [vmem:[#allocation2 + $0x100] sm:$0xe0]
      %v1618 = vld [vmem:[#allocation2 + $0x108] sm:$0xe0]
      %v1619 = vld [vmem:[#allocation2 + $0x110] sm:$0xe0]
      %v1620 = vld [vmem:[#allocation2 + $0x118] sm:$0xe0]
      %v1625 = vrot.slane %v1617, 5
      %v1626 = vrot.slane %v1618, 5
      %v1627 = vrot.slane %v1619, 5
      %v1628 = vrot.slane %v1620, 5
      %1629 = vrot.lane.b32.xlu0 %v1625, 60
      %v1630 = vpop.permute.xlu0 %1629
      %1631 = vrot.lane.b32.xlu0 %v1626, 60
      %v1632 = vpop.permute.xlu0 %1631
      %1633 = vrot.lane.b32.xlu0 %v1627, 60
      %v1634 = vpop.permute.xlu0 %1633
      %1635 = vrot.lane.b32.xlu0 %v1628, 60
      %v1636 = vpop.permute.xlu0 %1635
      %vm1637 = vcmask 490496
      %v1638 = vsel %vm1637, %v1630, %v1632
      %v1639 = vsel %vm1637, %v1632, %v1634
      %v1640 = vsel %vm1637, %v1634, %v1636
      %v1644 = vadd.f32 %v1614, %v1638
      %v1645 = vadd.f32 %v1615, %v1639
      %v1646 = vadd.f32 %v1616, %v1640
      %v1647 = vld [vmem:[#allocation2 + $0x120] sm:$0x7]
      %v1648 = vld [vmem:[#allocation2 + $0x128] sm:$0x7]
      %v1649 = vld [vmem:[#allocation2 + $0x130] sm:$0x7]
      %v1650 = vld [vmem:[#allocation2 + $0x138] sm:$0x7]
      %1655 = vrot.lane.b32.xlu0 %v1647, 59
      %v1656 = vpop.permute.xlu0 %1655
      %1657 = vrot.lane.b32.xlu0 %v1648, 59
      %v1658 = vpop.permute.xlu0 %1657
      %1659 = vrot.lane.b32.xlu0 %v1649, 59
      %v1660 = vpop.permute.xlu0 %1659
      %1661 = vrot.lane.b32.xlu0 %v1650, 59
      %v1662 = vpop.permute.xlu0 %1661
      %vm1663 = vcmask 482304
      %v1664 = vsel %vm1663, %v1656, %v1658
      %v1665 = vsel %vm1663, %v1658, %v1660
      %v1666 = vsel %vm1663, %v1660, %v1662
      %v1670 = vadd.f32 %v1644, %v1664
      %v1671 = vadd.f32 %v1645, %v1665
      %v1672 = vadd.f32 %v1646, %v1666
      %v1673 = vld [vmem:[#allocation2 + $0x120] sm:$0x38]
      %v1674 = vld [vmem:[#allocation2 + $0x128] sm:$0x38]
      %v1675 = vld [vmem:[#allocation2 + $0x130] sm:$0x38]
      %v1676 = vld [vmem:[#allocation2 + $0x138] sm:$0x38]
      %v1681 = vrot.slane %v1673, 3
      %v1682 = vrot.slane %v1674, 3
      %v1683 = vrot.slane %v1675, 3
      %v1684 = vrot.slane %v1676, 3
      %1685 = vrot.lane.b32.xlu0 %v1681, 58
      %v1686 = vpop.permute.xlu0 %1685
      %1687 = vrot.lane.b32.xlu0 %v1682, 58
      %v1688 = vpop.permute.xlu0 %1687
      %1689 = vrot.lane.b32.xlu0 %v1683, 58
      %v1690 = vpop.permute.xlu0 %1689
      %1691 = vrot.lane.b32.xlu0 %v1684, 58
      %v1692 = vpop.permute.xlu0 %1691
      %vm1693 = vcmask 474112
      %v1694 = vsel %vm1693, %v1686, %v1688
      %v1695 = vsel %vm1693, %v1688, %v1690
      %v1696 = vsel %vm1693, %v1690, %v1692
      %v1700 = vadd.f32 %v1670, %v1694
      %v1701 = vadd.f32 %v1671, %v1695
      %v1702 = vadd.f32 %v1672, %v1696
      %v1703 = vld [vmem:[#allocation2 + $0x120] sm:$0xc0]
      %v1704 = vld [vmem:[#allocation2 + $0x128] sm:$0xc0]
      %v1705 = vld [vmem:[#allocation2 + $0x130] sm:$0xc0]
      %v1706 = vld [vmem:[#allocation2 + $0x138] sm:$0xc0]
      %v1707 = vld [vmem:[#allocation2 + $0x140] sm:$0x1]
      %v1708 = vld [vmem:[#allocation2 + $0x148] sm:$0x1]
      %v1709 = vld [vmem:[#allocation2 + $0x150] sm:$0x1]
      %v1710 = vld [vmem:[#allocation2 + $0x158] sm:$0x1]
      %v1719 = vrot.slane %v1703, 6
      %v1720 = vrot.slane %v1707, 6
      %v1721 = vsel %vm997, %v1719, %v1720
      %v1722 = vrot.slane %v1704, 6
      %v1723 = vrot.slane %v1708, 6
      %v1724 = vsel %vm997, %v1722, %v1723
      %v1725 = vrot.slane %v1705, 6
      %v1726 = vrot.slane %v1709, 6
      %v1727 = vsel %vm997, %v1725, %v1726
      %v1728 = vrot.slane %v1706, 6
      %v1729 = vrot.slane %v1710, 6
      %v1730 = vsel %vm997, %v1728, %v1729
      %1731 = vrot.lane.b32.xlu0 %v1721, 57
      %v1732 = vpop.permute.xlu0 %1731
      %1733 = vrot.lane.b32.xlu0 %v1724, 57
      %v1734 = vpop.permute.xlu0 %1733
      %1735 = vrot.lane.b32.xlu0 %v1727, 57
      %v1736 = vpop.permute.xlu0 %1735
      %1737 = vrot.lane.b32.xlu0 %v1730, 57
      %v1738 = vpop.permute.xlu0 %1737
      %vm1739 = vcmask 465920
      %v1740 = vsel %vm1739, %v1732, %v1734
      %v1741 = vsel %vm1739, %v1734, %v1736
      %v1742 = vsel %vm1739, %v1736, %v1738
      %v1746 = vadd.f32 %v1700, %v1740
      %v1747 = vadd.f32 %v1701, %v1741
      %v1748 = vadd.f32 %v1702, %v1742
      %v1749 = vld [vmem:[#allocation2 + $0x140] sm:$0xe]
      %v1750 = vld [vmem:[#allocation2 + $0x148] sm:$0xe]
      %v1751 = vld [vmem:[#allocation2 + $0x150] sm:$0xe]
      %v1752 = vld [vmem:[#allocation2 + $0x158] sm:$0xe]
      %v1757 = vrot.slane %v1749, 1
      %v1758 = vrot.slane %v1750, 1
      %v1759 = vrot.slane %v1751, 1
      %v1760 = vrot.slane %v1752, 1
      %1761 = vrot.lane.b32.xlu0 %v1757, 56
      %v1762 = vpop.permute.xlu0 %1761
      %1763 = vrot.lane.b32.xlu0 %v1758, 56
      %v1764 = vpop.permute.xlu0 %1763
      %1765 = vrot.lane.b32.xlu0 %v1759, 56
      %v1766 = vpop.permute.xlu0 %1765
      %1767 = vrot.lane.b32.xlu0 %v1760, 56
      %v1768 = vpop.permute.xlu0 %1767
      %vm1769 = vcmask 457728
      %v1770 = vsel %vm1769, %v1762, %v1764
      %v1771 = vsel %vm1769, %v1764, %v1766
      %v1772 = vsel %vm1769, %v1766, %v1768
      %v1776 = vadd.f32 %v1746, %v1770
      %v1777 = vadd.f32 %v1747, %v1771
      %v1778 = vadd.f32 %v1748, %v1772
      %v1779 = vld [vmem:[#allocation2 + $0x140] sm:$0x70]
      %v1780 = vld [vmem:[#allocation2 + $0x148] sm:$0x70]
      %v1781 = vld [vmem:[#allocation2 + $0x150] sm:$0x70]
      %v1782 = vld [vmem:[#allocation2 + $0x158] sm:$0x70]
      %v1787 = vrot.slane %v1779, 4
      %v1788 = vrot.slane %v1780, 4
      %v1789 = vrot.slane %v1781, 4
      %v1790 = vrot.slane %v1782, 4
      %1791 = vrot.lane.b32.xlu0 %v1787, 40
      %v1792 = vpop.permute.xlu0 %1791
      %1793 = vrot.lane.b32.xlu0 %v1788, 40
      %v1794 = vpop.permute.xlu0 %1793
      %1795 = vrot.lane.b32.xlu0 %v1789, 40
      %v1796 = vpop.permute.xlu0 %1795
      %1797 = vrot.lane.b32.xlu0 %v1790, 40
      %v1798 = vpop.permute.xlu0 %1797
      %vm1799 = vcmask 326656
      %v1800 = vsel %vm1799, %v1792, %v1794
      %v1801 = vsel %vm1799, %v1794, %v1796
      %v1802 = vsel %vm1799, %v1796, %v1798
      %v1806 = vadd.f32 %v1776, %v1800
      %v1807 = vadd.f32 %v1777, %v1801
      %v1808 = vadd.f32 %v1778, %v1802
      %v1809 = vld [vmem:[#allocation2 + $0x140] sm:$0x80]
      %v1810 = vld [vmem:[#allocation2 + $0x148] sm:$0x80]
      %v1811 = vld [vmem:[#allocation2 + $0x150] sm:$0x80]
      %v1812 = vld [vmem:[#allocation2 + $0x158] sm:$0x80]
      %v1813 = vld [vmem:[#allocation2 + $0x160] sm:$0x3]
      %v1814 = vld [vmem:[#allocation2 + $0x168] sm:$0x3]
      %v1815 = vld [vmem:[#allocation2 + $0x170] sm:$0x3]
      %v1816 = vld [vmem:[#allocation2 + $0x178] sm:$0x3]
      %v1825 = vrot.slane %v1809, 7
      %v1826 = vrot.slane %v1813, 7
      %v1827 = vsel %vm1082, %v1825, %v1826
      %v1828 = vrot.slane %v1810, 7
      %v1829 = vrot.slane %v1814, 7
      %v1830 = vsel %vm1082, %v1828, %v1829
      %v1831 = vrot.slane %v1811, 7
      %v1832 = vrot.slane %v1815, 7
      %v1833 = vsel %vm1082, %v1831, %v1832
      %v1834 = vrot.slane %v1812, 7
      %v1835 = vrot.slane %v1816, 7
      %v1836 = vsel %vm1082, %v1834, %v1835
      %1837 = vrot.lane.b32.xlu0 %v1827, 39
      %v1838 = vpop.permute.xlu0 %1837
      %1839 = vrot.lane.b32.xlu0 %v1830, 39
      %v1840 = vpop.permute.xlu0 %1839
      %1841 = vrot.lane.b32.xlu0 %v1833, 39
      %v1842 = vpop.permute.xlu0 %1841
      %1843 = vrot.lane.b32.xlu0 %v1836, 39
      %v1844 = vpop.permute.xlu0 %1843
      %vm1845 = vcmask 318464
      %v1846 = vsel %vm1845, %v1838, %v1840
      %v1847 = vsel %vm1845, %v1840, %v1842
      %v1848 = vsel %vm1845, %v1842, %v1844
      %v1852 = vadd.f32 %v1806, %v1846
      %v1853 = vadd.f32 %v1807, %v1847
      %v1854 = vadd.f32 %v1808, %v1848
      %v1855 = vld [vmem:[#allocation2 + $0x160] sm:$0x1c]
      %v1856 = vld [vmem:[#allocation2 + $0x168] sm:$0x1c]
      %v1857 = vld [vmem:[#allocation2 + $0x170] sm:$0x1c]
      %v1858 = vld [vmem:[#allocation2 + $0x178] sm:$0x1c]
      %v1863 = vrot.slane %v1855, 2
      %v1864 = vrot.slane %v1856, 2
      %v1865 = vrot.slane %v1857, 2
      %v1866 = vrot.slane %v1858, 2
      %1867 = vrot.lane.b32.xlu0 %v1863, 38
      %v1868 = vpop.permute.xlu0 %1867
      %1869 = vrot.lane.b32.xlu0 %v1864, 38
      %v1870 = vpop.permute.xlu0 %1869
      %1871 = vrot.lane.b32.xlu0 %v1865, 38
      %v1872 = vpop.permute.xlu0 %1871
      %1873 = vrot.lane.b32.xlu0 %v1866, 38
      %v1874 = vpop.permute.xlu0 %1873
      %vm1875 = vcmask 310272
      %v1876 = vsel %vm1875, %v1868, %v1870
      %v1877 = vsel %vm1875, %v1870, %v1872
      %v1878 = vsel %vm1875, %v1872, %v1874
      %v1882 = vadd.f32 %v1852, %v1876
      %v1883 = vadd.f32 %v1853, %v1877
      %v1884 = vadd.f32 %v1854, %v1878
      %v1885 = vld [vmem:[#allocation2 + $0x160] sm:$0xe0]
      %v1886 = vld [vmem:[#allocation2 + $0x168] sm:$0xe0]
      %v1887 = vld [vmem:[#allocation2 + $0x170] sm:$0xe0]
      %v1888 = vld [vmem:[#allocation2 + $0x178] sm:$0xe0]
      %v1893 = vrot.slane %v1885, 5
      %v1894 = vrot.slane %v1886, 5
      %v1895 = vrot.slane %v1887, 5
      %v1896 = vrot.slane %v1888, 5
      %1897 = vrot.lane.b32.xlu0 %v1893, 37
      %v1898 = vpop.permute.xlu0 %1897
      %1899 = vrot.lane.b32.xlu0 %v1894, 37
      %v1900 = vpop.permute.xlu0 %1899
      %1901 = vrot.lane.b32.xlu0 %v1895, 37
      %v1902 = vpop.permute.xlu0 %1901
      %1903 = vrot.lane.b32.xlu0 %v1896, 37
      %v1904 = vpop.permute.xlu0 %1903
      %vm1905 = vcmask 302080
      %v1906 = vsel %vm1905, %v1898, %v1900
      %v1907 = vsel %vm1905, %v1900, %v1902
      %v1908 = vsel %vm1905, %v1902, %v1904
      %v1912 = vadd.f32 %v1882, %v1906
      %v1913 = vadd.f32 %v1883, %v1907
      %v1914 = vadd.f32 %v1884, %v1908
      %v1915 = vld [vmem:[#allocation2 + $0x180] sm:$0x7]
      %v1916 = vld [vmem:[#allocation2 + $0x188] sm:$0x7]
      %v1917 = vld [vmem:[#allocation2 + $0x190] sm:$0x7]
      %v1918 = vld [vmem:[#allocation2 + $0x198] sm:$0x7]
      %1923 = vrot.lane.b32.xlu0 %v1915, 36
      %v1924 = vpop.permute.xlu0 %1923
      %1925 = vrot.lane.b32.xlu0 %v1916, 36
      %v1926 = vpop.permute.xlu0 %1925
      %1927 = vrot.lane.b32.xlu0 %v1917, 36
      %v1928 = vpop.permute.xlu0 %1927
      %1929 = vrot.lane.b32.xlu0 %v1918, 36
      %v1930 = vpop.permute.xlu0 %1929
      %vm1931 = vcmask 293888
      %v1932 = vsel %vm1931, %v1924, %v1926
      %v1933 = vsel %vm1931, %v1926, %v1928
      %v1934 = vsel %vm1931, %v1928, %v1930
      %v1938 = vadd.f32 %v1912, %v1932
      %v1939 = vadd.f32 %v1913, %v1933
      %v1940 = vadd.f32 %v1914, %v1934
      %v1941 = vld [vmem:[#allocation2 + $0x180] sm:$0x38]
      %v1942 = vld [vmem:[#allocation2 + $0x188] sm:$0x38]
      %v1943 = vld [vmem:[#allocation2 + $0x190] sm:$0x38]
      %v1944 = vld [vmem:[#allocation2 + $0x198] sm:$0x38]
      %v1949 = vrot.slane %v1941, 3
      %v1950 = vrot.slane %v1942, 3
      %v1951 = vrot.slane %v1943, 3
      %v1952 = vrot.slane %v1944, 3
      %1953 = vrot.lane.b32.xlu0 %v1949, 35
      %v1954 = vpop.permute.xlu0 %1953
      %1955 = vrot.lane.b32.xlu0 %v1950, 35
      %v1956 = vpop.permute.xlu0 %1955
      %1957 = vrot.lane.b32.xlu0 %v1951, 35
      %v1958 = vpop.permute.xlu0 %1957
      %1959 = vrot.lane.b32.xlu0 %v1952, 35
      %v1960 = vpop.permute.xlu0 %1959
      %vm1961 = vcmask 285696
      %v1962 = vsel %vm1961, %v1954, %v1956
      %v1963 = vsel %vm1961, %v1956, %v1958
      %v1964 = vsel %vm1961, %v1958, %v1960
      %v1968 = vadd.f32 %v1938, %v1962
      %v1969 = vadd.f32 %v1939, %v1963
      %v1970 = vadd.f32 %v1940, %v1964
      %v1971 = vld [vmem:[#allocation2 + $0x180] sm:$0xc0]
      %v1972 = vld [vmem:[#allocation2 + $0x188] sm:$0xc0]
      %v1973 = vld [vmem:[#allocation2 + $0x190] sm:$0xc0]
      %v1974 = vld [vmem:[#allocation2 + $0x198] sm:$0xc0]
      %v1975 = vld [vmem:[#allocation2 + $0x1a0] sm:$0x1]
      %v1976 = vld [vmem:[#allocation2 + $0x1a8] sm:$0x1]
      %v1977 = vld [vmem:[#allocation2 + $0x1b0] sm:$0x1]
      %v1978 = vld [vmem:[#allocation2 + $0x1b8] sm:$0x1]
      %v1987 = vrot.slane %v1971, 6
      %v1988 = vrot.slane %v1975, 6
      %v1989 = vsel %vm997, %v1987, %v1988
      %v1990 = vrot.slane %v1972, 6
      %v1991 = vrot.slane %v1976, 6
      %v1992 = vsel %vm997, %v1990, %v1991
      %v1993 = vrot.slane %v1973, 6
      %v1994 = vrot.slane %v1977, 6
      %v1995 = vsel %vm997, %v1993, %v1994
      %v1996 = vrot.slane %v1974, 6
      %v1997 = vrot.slane %v1978, 6
      %v1998 = vsel %vm997, %v1996, %v1997
      %1999 = vrot.lane.b32.xlu0 %v1989, 34
      %v2000 = vpop.permute.xlu0 %1999
      %2001 = vrot.lane.b32.xlu0 %v1992, 34
      %v2002 = vpop.permute.xlu0 %2001
      %2003 = vrot.lane.b32.xlu0 %v1995, 34
      %v2004 = vpop.permute.xlu0 %2003
      %2005 = vrot.lane.b32.xlu0 %v1998, 34
      %v2006 = vpop.permute.xlu0 %2005
      %vm2007 = vcmask 277504
      %v2008 = vsel %vm2007, %v2000, %v2002
      %v2009 = vsel %vm2007, %v2002, %v2004
      %v2010 = vsel %vm2007, %v2004, %v2006
      %v2014 = vadd.f32 %v1968, %v2008
      %v2015 = vadd.f32 %v1969, %v2009
      %v2016 = vadd.f32 %v1970, %v2010
      %v2017 = vld [vmem:[#allocation2 + $0x1a0] sm:$0xe]
      %v2018 = vld [vmem:[#allocation2 + $0x1a8] sm:$0xe]
      %v2019 = vld [vmem:[#allocation2 + $0x1b0] sm:$0xe]
      %v2020 = vld [vmem:[#allocation2 + $0x1b8] sm:$0xe]
      %v2025 = vrot.slane %v2017, 1
      %v2026 = vrot.slane %v2018, 1
      %v2027 = vrot.slane %v2019, 1
      %v2028 = vrot.slane %v2020, 1
      %2029 = vrot.lane.b32.xlu0 %v2025, 18
      %v2030 = vpop.permute.xlu0 %2029
      %2031 = vrot.lane.b32.xlu0 %v2026, 18
      %v2032 = vpop.permute.xlu0 %2031
      %2033 = vrot.lane.b32.xlu0 %v2027, 18
      %v2034 = vpop.permute.xlu0 %2033
      %2035 = vrot.lane.b32.xlu0 %v2028, 18
      %v2036 = vpop.permute.xlu0 %2035
      %vm2037 = vcmask 146432
      %v2038 = vsel %vm2037, %v2030, %v2032
      %v2039 = vsel %vm2037, %v2032, %v2034
      %v2040 = vsel %vm2037, %v2034, %v2036
      %v2044 = vadd.f32 %v2014, %v2038
      %v2045 = vadd.f32 %v2015, %v2039
      %v2046 = vadd.f32 %v2016, %v2040
      %v2047 = vld [vmem:[#allocation2 + $0x1a0] sm:$0x70]
      %v2048 = vld [vmem:[#allocation2 + $0x1a8] sm:$0x70]
      %v2049 = vld [vmem:[#allocation2 + $0x1b0] sm:$0x70]
      %v2050 = vld [vmem:[#allocation2 + $0x1b8] sm:$0x70]
      %v2055 = vrot.slane %v2047, 4
      %v2056 = vrot.slane %v2048, 4
      %v2057 = vrot.slane %v2049, 4
      %v2058 = vrot.slane %v2050, 4
      %2059 = vrot.lane.b32.xlu0 %v2055, 17
      %v2060 = vpop.permute.xlu0 %2059
      %2061 = vrot.lane.b32.xlu0 %v2056, 17
      %v2062 = vpop.permute.xlu0 %2061
      %2063 = vrot.lane.b32.xlu0 %v2057, 17
      %v2064 = vpop.permute.xlu0 %2063
      %2065 = vrot.lane.b32.xlu0 %v2058, 17
      %v2066 = vpop.permute.xlu0 %2065
      %vm2067 = vcmask 138240
      %v2068 = vsel %vm2067, %v2060, %v2062
      %v2069 = vsel %vm2067, %v2062, %v2064
      %v2070 = vsel %vm2067, %v2064, %v2066
      %v2074 = vadd.f32 %v2044, %v2068
      %v2075 = vadd.f32 %v2045, %v2069
      %v2076 = vadd.f32 %v2046, %v2070
      %v2077 = vld [vmem:[#allocation2 + $0x1a0] sm:$0x80]
      %v2078 = vld [vmem:[#allocation2 + $0x1a8] sm:$0x80]
      %v2079 = vld [vmem:[#allocation2 + $0x1b0] sm:$0x80]
      %v2080 = vld [vmem:[#allocation2 + $0x1b8] sm:$0x80]
      %v2081 = vld [vmem:[#allocation2 + $0x1c0] sm:$0x3]
      %v2082 = vld [vmem:[#allocation2 + $0x1c8] sm:$0x3]
      %v2083 = vld [vmem:[#allocation2 + $0x1d0] sm:$0x3]
      %v2084 = vld [vmem:[#allocation2 + $0x1d8] sm:$0x3]
      %v2093 = vrot.slane %v2077, 7
      %v2094 = vrot.slane %v2081, 7
      %v2095 = vsel %vm1082, %v2093, %v2094
      %v2096 = vrot.slane %v2078, 7
      %v2097 = vrot.slane %v2082, 7
      %v2098 = vsel %vm1082, %v2096, %v2097
      %v2099 = vrot.slane %v2079, 7
      %v2100 = vrot.slane %v2083, 7
      %v2101 = vsel %vm1082, %v2099, %v2100
      %v2102 = vrot.slane %v2080, 7
      %v2103 = vrot.slane %v2084, 7
      %v2104 = vsel %vm1082, %v2102, %v2103
      %2105 = vrot.lane.b32.xlu0 %v2095, 16
      %v2106 = vpop.permute.xlu0 %2105
      %2107 = vrot.lane.b32.xlu0 %v2098, 16
      %v2108 = vpop.permute.xlu0 %2107
      %2109 = vrot.lane.b32.xlu0 %v2101, 16
      %v2110 = vpop.permute.xlu0 %2109
      %2111 = vrot.lane.b32.xlu0 %v2104, 16
      %v2112 = vpop.permute.xlu0 %2111
      %vm2113 = vcmask 130048
      %v2114 = vsel %vm2113, %v2106, %v2108
      %v2115 = vsel %vm2113, %v2108, %v2110
      %v2116 = vsel %vm2113, %v2110, %v2112
      %v2120 = vadd.f32 %v2074, %v2114
      %v2121 = vadd.f32 %v2075, %v2115
      %v2122 = vadd.f32 %v2076, %v2116
      %v2123 = vld [vmem:[#allocation2 + $0x1c0] sm:$0x1c]
      %v2124 = vld [vmem:[#allocation2 + $0x1c8] sm:$0x1c]
      %v2125 = vld [vmem:[#allocation2 + $0x1d0] sm:$0x1c]
      %v2126 = vld [vmem:[#allocation2 + $0x1d8] sm:$0x1c]
      %v2131 = vrot.slane %v2123, 2
      %v2132 = vrot.slane %v2124, 2
      %v2133 = vrot.slane %v2125, 2
      %v2134 = vrot.slane %v2126, 2
      %2135 = vrot.lane.b32.xlu0 %v2131, 15
      %v2136 = vpop.permute.xlu0 %2135
      %2137 = vrot.lane.b32.xlu0 %v2132, 15
      %v2138 = vpop.permute.xlu0 %2137
      %2139 = vrot.lane.b32.xlu0 %v2133, 15
      %v2140 = vpop.permute.xlu0 %2139
      %2141 = vrot.lane.b32.xlu0 %v2134, 15
      %v2142 = vpop.permute.xlu0 %2141
      %vm2143 = vcmask 121856
      %v2144 = vsel %vm2143, %v2136, %v2138
      %v2145 = vsel %vm2143, %v2138, %v2140
      %v2146 = vsel %vm2143, %v2140, %v2142
      %v2150 = vadd.f32 %v2120, %v2144
      %v2151 = vadd.f32 %v2121, %v2145
      %v2152 = vadd.f32 %v2122, %v2146
      %v2153 = vld [vmem:[#allocation2 + $0x1c0] sm:$0xe0]
      %v2154 = vld [vmem:[#allocation2 + $0x1c8] sm:$0xe0]
      %v2155 = vld [vmem:[#allocation2 + $0x1d0] sm:$0xe0]
      %v2156 = vld [vmem:[#allocation2 + $0x1d8] sm:$0xe0]
      %v2161 = vrot.slane %v2153, 5
      %v2162 = vrot.slane %v2154, 5
      %v2163 = vrot.slane %v2155, 5
      %v2164 = vrot.slane %v2156, 5
      %2165 = vrot.lane.b32.xlu0 %v2161, 14
      %v2166 = vpop.permute.xlu0 %2165
      %2167 = vrot.lane.b32.xlu0 %v2162, 14
      %v2168 = vpop.permute.xlu0 %2167
      %2169 = vrot.lane.b32.xlu0 %v2163, 14
      %v2170 = vpop.permute.xlu0 %2169
      %2171 = vrot.lane.b32.xlu0 %v2164, 14
      %v2172 = vpop.permute.xlu0 %2171
      %vm2173 = vcmask 113664
      %v2174 = vsel %vm2173, %v2166, %v2168
      %v2175 = vsel %vm2173, %v2168, %v2170
      %v2176 = vsel %vm2173, %v2170, %v2172
      %v2180 = vadd.f32 %v2150, %v2174
      %v2181 = vadd.f32 %v2151, %v2175
      %v2182 = vadd.f32 %v2152, %v2176
      %v2183 = vld [vmem:[#allocation2 + $0x1e0] sm:$0x7]
      %v2184 = vld [vmem:[#allocation2 + $0x1e8] sm:$0x7]
      %v2185 = vld [vmem:[#allocation2 + $0x1f0] sm:$0x7]
      %v2186 = vld [vmem:[#allocation2 + $0x1f8] sm:$0x7]
      %2191 = vrot.lane.b32.xlu0 %v2183, 13
      %v2192 = vpop.permute.xlu0 %2191
      %2193 = vrot.lane.b32.xlu0 %v2184, 13
      %v2194 = vpop.permute.xlu0 %2193
      %2195 = vrot.lane.b32.xlu0 %v2185, 13
      %v2196 = vpop.permute.xlu0 %2195
      %2197 = vrot.lane.b32.xlu0 %v2186, 13
      %v2198 = vpop.permute.xlu0 %2197
      %vm2199 = vcmask 105472
      %v2200 = vsel %vm2199, %v2192, %v2194
      %v2201 = vsel %vm2199, %v2194, %v2196
      %v2202 = vsel %vm2199, %v2196, %v2198
      %v2206 = vadd.f32 %v2180, %v2200
      %v2207 = vadd.f32 %v2181, %v2201
      %v2208 = vadd.f32 %v2182, %v2202
      %v2209 = vld [vmem:[#allocation2 + $0x1e0] sm:$0x38]
      %v2210 = vld [vmem:[#allocation2 + $0x1e8] sm:$0x38]
      %v2211 = vld [vmem:[#allocation2 + $0x1f0] sm:$0x38]
      %v2212 = vld [vmem:[#allocation2 + $0x1f8] sm:$0x38]
      %v2217 = vrot.slane %v2209, 3
      %v2218 = vrot.slane %v2210, 3
      %v2219 = vrot.slane %v2211, 3
      %v2220 = vrot.slane %v2212, 3
      %2221 = vrot.lane.b32.xlu0 %v2217, 12
      %v2222 = vpop.permute.xlu0 %2221
      %2223 = vrot.lane.b32.xlu0 %v2218, 12
      %v2224 = vpop.permute.xlu0 %2223
      %2225 = vrot.lane.b32.xlu0 %v2219, 12
      %v2226 = vpop.permute.xlu0 %2225
      %2227 = vrot.lane.b32.xlu0 %v2220, 12
      %v2228 = vpop.permute.xlu0 %2227
      %vm2229 = vcmask 97280
      %v2230 = vsel %vm2229, %v2222, %v2224
      %v2231 = vsel %vm2229, %v2224, %v2226
      %v2232 = vsel %vm2229, %v2226, %v2228
      %v2236 = vadd.f32 %v2206, %v2230
      %v2237 = vadd.f32 %v2207, %v2231
      %v2238 = vadd.f32 %v2208, %v2232
      %v2239 = vld [vmem:[#allocation2 + $0x1e8] sm:$0xc0]
      %v2240 = vld [vmem:[#allocation2 + $0x1f0] sm:$0xc0]
      %v2241 = vld [vmem:[#allocation2 + $0x1f8] sm:$0xc0]
      %v2242 = vld [vmem:[#allocation2 + $0x208] sm:$0x1]
      %v2243 = vld [vmem:[#allocation2 + $0x210] sm:$0x1]
      %v2244 = vld [vmem:[#allocation2 + $0x218] sm:$0x1]
      %v2251 = vrot.slane %v2239, 6
      %v2252 = vrot.slane %v2242, 6
      %v2253 = vsel %vm997, %v2251, %v2252
      %v2254 = vrot.slane %v2240, 6
      %v2255 = vrot.slane %v2243, 6
      %v2256 = vsel %vm997, %v2254, %v2255
      %v2257 = vrot.slane %v2241, 6
      %v2258 = vrot.slane %v2244, 6
      %v2259 = vsel %vm997, %v2257, %v2258
      %2260 = vrot.lane.b32.xlu0 %v2253, 124
      %v2261 = vpop.permute.xlu0 %2260
      %2262 = vrot.lane.b32.xlu0 %v2256, 124
      %v2263 = vpop.permute.xlu0 %2262
      %2264 = vrot.lane.b32.xlu0 %v2259, 124
      %v2265 = vpop.permute.xlu0 %2264
      %v2266 = vsel %vm1061, %v2261, %v2263
      %v2267 = vsel %vm1061, %v2263, %v2265
      %v2271 = vadd.f32 %v2236, %v2266
      %v2272 = vadd.f32 %v2237, %v2267
      %v2273 = vadd.f32 %v2238, %v2265
      %v2274 = vld [vmem:[#allocation2 + $0x208] sm:$0xe]
      %v2275 = vld [vmem:[#allocation2 + $0x210] sm:$0xe]
      %v2276 = vld [vmem:[#allocation2 + $0x218] sm:$0xe]
      %v2280 = vrot.slane %v2274, 1
      %v2281 = vrot.slane %v2275, 1
      %v2282 = vrot.slane %v2276, 1
      %2283 = vrot.lane.b32.xlu0 %v2280, 123
      %v2284 = vpop.permute.xlu0 %2283
      %2285 = vrot.lane.b32.xlu0 %v2281, 123
      %v2286 = vpop.permute.xlu0 %2285
      %2287 = vrot.lane.b32.xlu0 %v2282, 123
      %v2288 = vpop.permute.xlu0 %2287
      %v2289 = vsel %vm1098, %v2284, %v2286
      %v2290 = vsel %vm1098, %v2286, %v2288
      %v2294 = vadd.f32 %v2271, %v2289
      %v2295 = vadd.f32 %v2272, %v2290
      %v2296 = vadd.f32 %v2273, %v2288
      %v2297 = vld [vmem:[#allocation2 + $0x208] sm:$0x70]
      %v2298 = vld [vmem:[#allocation2 + $0x210] sm:$0x70]
      %v2299 = vld [vmem:[#allocation2 + $0x218] sm:$0x70]
      %v2303 = vrot.slane %v2297, 4
      %v2304 = vrot.slane %v2298, 4
      %v2305 = vrot.slane %v2299, 4
      %2306 = vrot.lane.b32.xlu0 %v2303, 122
      %v2307 = vpop.permute.xlu0 %2306
      %2308 = vrot.lane.b32.xlu0 %v2304, 122
      %v2309 = vpop.permute.xlu0 %2308
      %2310 = vrot.lane.b32.xlu0 %v2305, 122
      %v2311 = vpop.permute.xlu0 %2310
      %v2312 = vsel %vm880, %v2307, %v2309
      %v2313 = vsel %vm880, %v2309, %v2311
      %v2317 = vadd.f32 %v2294, %v2312
      %v2318 = vadd.f32 %v2295, %v2313
      %v2319 = vadd.f32 %v2296, %v2311
      %v2320 = vld [vmem:[#allocation2 + $0x208] sm:$0x80]
      %v2321 = vld [vmem:[#allocation2 + $0x210] sm:$0x80]
      %v2322 = vld [vmem:[#allocation2 + $0x218] sm:$0x80]
      %v2323 = vld [vmem:[#allocation2 + $0x228] sm:$0x3]
      %v2324 = vld [vmem:[#allocation2 + $0x230] sm:$0x3]
      %v2325 = vld [vmem:[#allocation2 + $0x238] sm:$0x3]
      %v2332 = vrot.slane %v2320, 7
      %v2333 = vrot.slane %v2323, 7
      %v2334 = vsel %vm1082, %v2332, %v2333
      %v2335 = vrot.slane %v2321, 7
      %v2336 = vrot.slane %v2324, 7
      %v2337 = vsel %vm1082, %v2335, %v2336
      %v2338 = vrot.slane %v2322, 7
      %v2339 = vrot.slane %v2325, 7
      %v2340 = vsel %vm1082, %v2338, %v2339
      %2341 = vrot.lane.b32.xlu0 %v2334, 121
      %v2342 = vpop.permute.xlu0 %2341
      %2343 = vrot.lane.b32.xlu0 %v2337, 121
      %v2344 = vpop.permute.xlu0 %2343
      %2345 = vrot.lane.b32.xlu0 %v2340, 121
      %v2346 = vpop.permute.xlu0 %2345
      %vm2347 = vcmask 990208
      %v2348 = vsel %vm2347, %v2342, %v2344
      %v2349 = vsel %vm2347, %v2344, %v2346
      %v2353 = vadd.f32 %v2317, %v2348
      %v2354 = vadd.f32 %v2318, %v2349
      %v2355 = vadd.f32 %v2319, %v2346
      %v2356 = vld [vmem:[#allocation2 + $0x228] sm:$0x1c]
      %v2357 = vld [vmem:[#allocation2 + $0x230] sm:$0x1c]
      %v2358 = vld [vmem:[#allocation2 + $0x238] sm:$0x1c]
      %v2362 = vrot.slane %v2356, 2
      %v2363 = vrot.slane %v2357, 2
      %v2364 = vrot.slane %v2358, 2
      %2365 = vrot.lane.b32.xlu0 %v2362, 120
      %v2366 = vpop.permute.xlu0 %2365
      %2367 = vrot.lane.b32.xlu0 %v2363, 120
      %v2368 = vpop.permute.xlu0 %2367
      %2369 = vrot.lane.b32.xlu0 %v2364, 120
      %v2370 = vpop.permute.xlu0 %2369
      %vm2371 = vcmask 982016
      %v2372 = vsel %vm2371, %v2366, %v2368
      %v2373 = vsel %vm2371, %v2368, %v2370
      %v2377 = vadd.f32 %v2353, %v2372
      %v2378 = vadd.f32 %v2354, %v2373
      %v2379 = vadd.f32 %v2355, %v2370
      %v2380 = vld [vmem:[#allocation2 + $0x228] sm:$0xe0]
      %v2381 = vld [vmem:[#allocation2 + $0x230] sm:$0xe0]
      %v2382 = vld [vmem:[#allocation2 + $0x238] sm:$0xe0]
      %v2386 = vrot.slane %v2380, 5
      %v2387 = vrot.slane %v2381, 5
      %v2388 = vrot.slane %v2382, 5
      %2389 = vrot.lane.b32.xlu0 %v2386, 119
      %v2390 = vpop.permute.xlu0 %2389
      %2391 = vrot.lane.b32.xlu0 %v2387, 119
      %v2392 = vpop.permute.xlu0 %2391
      %2393 = vrot.lane.b32.xlu0 %v2388, 119
      %v2394 = vpop.permute.xlu0 %2393
      %vm2395 = vcmask 973824
      %v2396 = vsel %vm2395, %v2390, %v2392
      %v2397 = vsel %vm2395, %v2392, %v2394
      %v2401 = vadd.f32 %v2377, %v2396
      %v2402 = vadd.f32 %v2378, %v2397
      %v2403 = vadd.f32 %v2379, %v2394
      %v2404 = vld [vmem:[#allocation2 + $0x248] sm:$0x7]
      %v2405 = vld [vmem:[#allocation2 + $0x250] sm:$0x7]
      %v2406 = vld [vmem:[#allocation2 + $0x258] sm:$0x7]
      %2410 = vrot.lane.b32.xlu0 %v2404, 118
      %v2411 = vpop.permute.xlu0 %2410
      %2412 = vrot.lane.b32.xlu0 %v2405, 118
      %v2413 = vpop.permute.xlu0 %2412
      %2414 = vrot.lane.b32.xlu0 %v2406, 118
      %v2415 = vpop.permute.xlu0 %2414
      %vm2416 = vcmask 965632
      %v2417 = vsel %vm2416, %v2411, %v2413
      %v2418 = vsel %vm2416, %v2413, %v2415
      %v2422 = vadd.f32 %v2401, %v2417
      %v2423 = vadd.f32 %v2402, %v2418
      %v2424 = vadd.f32 %v2403, %v2415
      %v2425 = vld [vmem:[%s4] sm:$0xff]
      %v2426 = vld [vmem:[%s4 + $0x8] sm:$0xff]
      %v2427 = vld [vmem:[%s4 + $0x10] sm:$0xff]
      %v2428 = vld [vmem:[%s4 + $0x18] sm:$0xff]
      %v2429 = vld [vmem:[%s4 + $0x20] sm:$0xff]
      %v2430 = vld [vmem:[%s4 + $0x28] sm:$0xff]
      %v2431 = vld [vmem:[%s4 + $0x30] sm:$0xff]
      %v2432 = vld [vmem:[%s4 + $0x38] sm:$0xff]
      %v2433 = vld [vmem:[%s4 + $0x40] sm:$0xff]
      %v2434 = vld [vmem:[%s4 + $0x48] sm:$0x7]
      %v2435 = vld [vmem:[%s384] sm:$0xff]
      %v2436 = vld [vmem:[%s384 + $0x8] sm:$0xff]
      %v2437 = vld [vmem:[%s384 + $0x10] sm:$0xff]
      %v2438 = vld [vmem:[%s384 + $0x18] sm:$0xff]
      %v2439 = vld [vmem:[%s384 + $0x20] sm:$0xff]
      %v2440 = vld [vmem:[%s384 + $0x28] sm:$0xff]
      %v2441 = vld [vmem:[%s384 + $0x30] sm:$0xff]
      %v2442 = vld [vmem:[%s384 + $0x38] sm:$0xff]
      %v2443 = vld [vmem:[%s384 + $0x40] sm:$0xff]
      %v2444 = vld [vmem:[%s384 + $0x48] sm:$0xff]
      %v2445 = vld [vmem:[%s384 + $0x50] sm:$0xff]
      %v2446 = vld [vmem:[%s384 + $0x58] sm:$0xff]
      %v2447 = vld [vmem:[%s384 + $0x60] sm:$0xff]
      %v2448 = vld [vmem:[%s384 + $0x68] sm:$0xff]
      %v2449 = vld [vmem:[%s384 + $0x70] sm:$0xff]
      %v2450 = vld [vmem:[%s384 + $0x78] sm:$0xff]
      %v2451 = vld [vmem:[%s384 + $0x80] sm:$0xff]
      %v2452 = vld [vmem:[%s384 + $0x88] sm:$0xff]
      %v2453 = vld [vmem:[%s384 + $0x90] sm:$0xff]
      %v2454 = vld [vmem:[%s384 + $0x98] sm:$0xff]
      %v2455 = vld [vmem:[%s384 + $0xa0] sm:$0xff]
      %v2456 = vld [vmem:[%s384 + $0xa8] sm:$0xff]
      %v2457 = vld [vmem:[%s384 + $0xb0] sm:$0xff]
      %v2458 = vld [vmem:[%s384 + $0xb8] sm:$0xff]
      %v2459 = vld [vmem:[%s384 + $0xc0] sm:$0xff]
      %v2460 = vld [vmem:[%s384 + $0xc8] sm:$0xff]
      %v2461 = vld [vmem:[%s384 + $0xd0] sm:$0xff]
      %v2462 = vld [vmem:[%s384 + $0xd8] sm:$0xff]
      %v2463 = vld [vmem:[%s384 + $0xe0] sm:$0xff]
      %v2464 = vld [vmem:[%s384 + $0xe8] sm:$0xff]
      %v2465 = vld [vmem:[%s384 + $0xf0] sm:$0xff]
      %v2466 = vld [vmem:[%s384 + $0xf8] sm:$0xff]
      %v2468 = vsel %vm461, %v2425, 0
      %v2471 = vsel %vm461, %v2426, 0
      %v2474 = vsel %vm461, %v2427, 0
      %v2477 = vsel %vm461, %v2428, 0
      %v2480 = vsel %vm461, %v2429, 0
      %v2483 = vsel %vm461, %v2430, 0
      %v2486 = vsel %vm461, %v2431, 0
      %v2489 = vsel %vm461, %v2432, 0
      %v2492 = vsel %vm461, %v2433, 0
      %v2495 = vsel %vm461, %v2434, 0
      %2497 = vmatprep.subr.mxu0 %v2436
      %2498 = vmatpush1.msra.mxu0 %v2435
      %2499 = vmatprep.subr.mxu0 %v2440
      %2500 = vmatpush1.msra.mxu0 %v2439
      %2501 = vmatprep.subr.mxu0 %v2444
      %2502 = vmatpush1.msra.mxu0 %v2443
      %2503 = vmatprep.subr.mxu0 %v2448
      %2504 = vmatpush1.msra.mxu0 %v2447
      %2505 = vmatprep.subr.mxu0 %v2452
      %2506 = vmatpush1.msra.mxu0 %v2451
      %2507 = vmatprep.subr.mxu0 %v2456
      %2508 = vmatpush1.msra.mxu0 %v2455
      %2509 = vmatprep.subr.mxu0 %v2460
      %2510 = vmatpush1.msra.mxu0 %v2459
      %2511 = vmatprep.subr.mxu0 %v2464
      %2512 = vmatpush1.msra.mxu0 %v2463
      %2513 = vmatprep.subr.mxu0 0.0
      %2514 = vmatpush1.msra.mxu0 0.0
      %2515 = vmatprep.subr.mxu0 0.0
      %2516 = vmatpush1.msra.mxu0 0.0
      %2517 = vmatprep.subr.mxu0 0.0
      %2518 = vmatpush1.msra.mxu0 0.0
      %2519 = vmatprep.subr.mxu0 0.0
      %2520 = vmatpush1.msra.mxu0 0.0
      %2521 = vmatprep.subr.mxu0 0.0
      %2522 = vmatpush1.msra.mxu0 0.0
      %2523 = vmatprep.subr.mxu0 0.0
      %2524 = vmatpush1.msra.mxu0 0.0
      %2525 = vmatprep.subr.mxu0 0.0
      %2526 = vmatpush1.msra.mxu0 0.0
      %2527 = vmatprep.subr.mxu0 0.0
      %2528 = vmatpush1.msra.mxu0 0.0
      %2529 = vmatprep.subr.mxu0 0.0
      %2530 = vmatpush1.msra.mxu0 0.0
      %2531 = vmatprep.subr.mxu0 0.0
      %2532 = vmatpush1.msra.mxu0 0.0
      %2533 = vmatprep.subr.mxu0 0.0
      %2534 = vmatpush1.msra.mxu0 0.0
      %2535 = vmatprep.subr.mxu0 0.0
      %2536 = vmatpush1.msra.mxu0 0.0
      %2537 = vmatprep.subr.mxu0 0.0
      %2538 = vmatpush1.msra.mxu0 0.0
      %2539 = vmatprep.subr.mxu0 0.0
      %2540 = vmatpush1.msra.mxu0 0.0
      %2541 = vmatprep.subr.mxu0 0.0
      %2542 = vmatpush1.msra.mxu0 0.0
      %2543 = vmatprep.subr.mxu0 0.0
      %2544 = vmatpush1.msra.mxu0 0.0
      %2545 = vmatprep.subr.mxu0 0.0
      %2546 = vmatpush1.msra.mxu0 0.0
      %2547 = vmatprep.subr.mxu0 0.0
      %2548 = vmatpush1.msra.mxu0 0.0
      %2549 = vmatprep.subr.mxu0 0.0
      %2550 = vmatpush1.msra.mxu0 0.0
      %2551 = vmatprep.subr.mxu0 0.0
      %2552 = vmatpush1.msra.mxu0 0.0
      %2553 = vmatprep.subr.mxu0 0.0
      %2554 = vmatpush1.msra.mxu0 0.0
      %2555 = vmatprep.subr.mxu0 0.0
      %2556 = vmatpush1.msra.mxu0 0.0
      %2557 = vmatprep.subr.mxu0 0.0
      %2558 = vmatpush1.msra.mxu0 0.0
      %2559 = vmatprep.subr.mxu0 0.0
      %2560 = vmatpush1.msra.mxu0 0.0
      %2561 = vmatprep.mubr.f32.mxu0 0.0
      %2562 = vmatmul.mubr.f32.gmra.mrb[0].mxu0 %v2468
      %v2563 = vpop.f32.mrb[0].mxu0
      %v2564 = vadd.f32 0.0, %v2563
      %v2565 = vpop.f32.mrb[0].mxu0
      %v2566 = vadd.f32 0.0, %v2565
      %2567 = vmatprep.mubr.f32.mxu0 0.0
      %2568 = vmatmul.mubr.f32.gmra.mrb[0].mxu0 %v2471
      %v2569 = vpop.f32.mrb[0].mxu0
      %v2570 = vadd.f32 0.0, %v2569
      %v2571 = vpop.f32.mrb[0].mxu0
      %v2572 = vadd.f32 0.0, %v2571
      %2573 = vmatprep.mubr.f32.mxu0 0.0
      %2574 = vmatmul.mubr.f32.gmra.mrb[0].mxu0 %v2474
      %v2575 = vpop.f32.mrb[0].mxu0
      %v2576 = vadd.f32 0.0, %v2575
      %v2577 = vpop.f32.mrb[0].mxu0
      %v2578 = vadd.f32 0.0, %v2577
      %2579 = vmatprep.mubr.f32.mxu0 0.0
      %2580 = vmatmul.mubr.f32.gmra.mrb[0].mxu0 %v2477
      %v2581 = vpop.f32.mrb[0].mxu0
      %v2582 = vadd.f32 0.0, %v2581
      %v2583 = vpop.f32.mrb[0].mxu0
      %v2584 = vadd.f32 0.0, %v2583
      %2585 = vmatprep.mubr.f32.mxu0 0.0
      %2586 = vmatmul.mubr.f32.gmra.mrb[0].mxu0 %v2480
      %v2587 = vpop.f32.mrb[0].mxu0
      %v2588 = vadd.f32 0.0, %v2587
      %v2589 = vpop.f32.mrb[0].mxu0
      %v2590 = vadd.f32 0.0, %v2589
      %2591 = vmatprep.mubr.f32.mxu0 0.0
      %2592 = vmatmul.mubr.f32.gmra.mrb[0].mxu0 %v2483
      %v2593 = vpop.f32.mrb[0].mxu0
      %v2594 = vadd.f32 0.0, %v2593
      %v2595 = vpop.f32.mrb[0].mxu0
      %v2596 = vadd.f32 0.0, %v2595
      %2597 = vmatprep.mubr.f32.mxu0 0.0
      %2598 = vmatmul.mubr.f32.gmra.mrb[0].mxu0 %v2486
      %v2599 = vpop.f32.mrb[0].mxu0
      %v2600 = vadd.f32 0.0, %v2599
      %v2601 = vpop.f32.mrb[0].mxu0
      %v2602 = vadd.f32 0.0, %v2601
      %2603 = vmatprep.mubr.f32.mxu0 0.0
      %2604 = vmatmul.mubr.f32.gmra.mrb[0].mxu0 %v2489
      %v2605 = vpop.f32.mrb[0].mxu0
      %v2606 = vadd.f32 0.0, %v2605
      %v2607 = vpop.f32.mrb[0].mxu0
      %v2608 = vadd.f32 0.0, %v2607
      %2609 = vmatprep.mubr.f32.mxu0 0.0
      %2610 = vmatmul.mubr.f32.gmra.mrb[0].mxu0 %v2492
      %v2611 = vpop.f32.mrb[0].mxu0
      %v2612 = vadd.f32 0.0, %v2611
      %v2613 = vpop.f32.mrb[0].mxu0
      %v2614 = vadd.f32 0.0, %v2613
      %2615 = vmatprep.mubr.f32.mxu0 0.0
      %2616 = vmatmul.mubr.f32.gmra.mrb[0].mxu0 %v2495
      %v2617 = vpop.f32.mrb[0].mxu0
      %v2618 = vadd.f32 0.0, %v2617
      %v2619 = vpop.f32.mrb[0].mxu0
      %v2620 = vadd.f32 0.0, %v2619
      %2621 = vdwg.mxu0
      %2622 = vmatprep.subr.mxu0 %v2438
      %2623 = vmatpush1.msra.mxu0 %v2437
      %2624 = vmatprep.subr.mxu0 %v2442
      %2625 = vmatpush1.msra.mxu0 %v2441
      %2626 = vmatprep.subr.mxu0 %v2446
      %2627 = vmatpush1.msra.mxu0 %v2445
      %2628 = vmatprep.subr.mxu0 %v2450
      %2629 = vmatpush1.msra.mxu0 %v2449
      %2630 = vmatprep.subr.mxu0 %v2454
      %2631 = vmatpush1.msra.mxu0 %v2453
      %2632 = vmatprep.subr.mxu0 %v2458
      %2633 = vmatpush1.msra.mxu0 %v2457
      %2634 = vmatprep.subr.mxu0 %v2462
      %2635 = vmatpush1.msra.mxu0 %v2461
      %2636 = vmatprep.subr.mxu0 %v2466
      %2637 = vmatpush1.msra.mxu0 %v2465
      %2638 = vmatprep.subr.mxu0 0.0
      %2639 = vmatpush1.msra.mxu0 0.0
      %2640 = vmatprep.subr.mxu0 0.0
      %2641 = vmatpush1.msra.mxu0 0.0
      %2642 = vmatprep.subr.mxu0 0.0
      %2643 = vmatpush1.msra.mxu0 0.0
      %2644 = vmatprep.subr.mxu0 0.0
      %2645 = vmatpush1.msra.mxu0 0.0
      %2646 = vmatprep.subr.mxu0 0.0
      %2647 = vmatpush1.msra.mxu0 0.0
      %2648 = vmatprep.subr.mxu0 0.0
      %2649 = vmatpush1.msra.mxu0 0.0
      %2650 = vmatprep.subr.mxu0 0.0
      %2651 = vmatpush1.msra.mxu0 0.0
      %2652 = vmatprep.subr.mxu0 0.0
      %2653 = vmatpush1.msra.mxu0 0.0
      %2654 = vmatprep.subr.mxu0 0.0
      %2655 = vmatpush1.msra.mxu0 0.0
      %2656 = vmatprep.subr.mxu0 0.0
      %2657 = vmatpush1.msra.mxu0 0.0
      %2658 = vmatprep.subr.mxu0 0.0
      %2659 = vmatpush1.msra.mxu0 0.0
      %2660 = vmatprep.subr.mxu0 0.0
      %2661 = vmatpush1.msra.mxu0 0.0
      %2662 = vmatprep.subr.mxu0 0.0
      %2663 = vmatpush1.msra.mxu0 0.0
      %2664 = vmatprep.subr.mxu0 0.0
      %2665 = vmatpush1.msra.mxu0 0.0
      %2666 = vmatprep.subr.mxu0 0.0
      %2667 = vmatpush1.msra.mxu0 0.0
      %2668 = vmatprep.subr.mxu0 0.0
      %2669 = vmatpush1.msra.mxu0 0.0
      %2670 = vmatprep.subr.mxu0 0.0
      %2671 = vmatpush1.msra.mxu0 0.0
      %2672 = vmatprep.subr.mxu0 0.0
      %2673 = vmatpush1.msra.mxu0 0.0
      %2674 = vmatprep.subr.mxu0 0.0
      %2675 = vmatpush1.msra.mxu0 0.0
      %2676 = vmatprep.subr.mxu0 0.0
      %2677 = vmatpush1.msra.mxu0 0.0
      %2678 = vmatprep.subr.mxu0 0.0
      %2679 = vmatpush1.msra.mxu0 0.0
      %2680 = vmatprep.subr.mxu0 0.0
      %2681 = vmatpush1.msra.mxu0 0.0
      %2682 = vmatprep.subr.mxu0 0.0
      %2683 = vmatpush1.msra.mxu0 0.0
      %2684 = vmatprep.subr.mxu0 0.0
      %2685 = vmatpush1.msra.mxu0 0.0
      %2686 = vmatprep.mubr.f32.mxu0 0.0
      %2687 = vmatmul.mubr.f32.gmra.mrb[0].mxu0 %v2468
      %v2688 = vpop.f32.mrb[0].mxu0
      %v2689 = vadd.f32 0.0, %v2688
      %v2690 = vpop.f32.mrb[0].mxu0
      %v2691 = vadd.f32 0.0, %v2690
      %2692 = vmatprep.mubr.f32.mxu0 0.0
      %2693 = vmatmul.mubr.f32.gmra.mrb[0].mxu0 %v2471
      %v2694 = vpop.f32.mrb[0].mxu0
      %v2695 = vadd.f32 0.0, %v2694
      %v2696 = vpop.f32.mrb[0].mxu0
      %v2697 = vadd.f32 0.0, %v2696
      %2698 = vmatprep.mubr.f32.mxu0 0.0
      %2699 = vmatmul.mubr.f32.gmra.mrb[0].mxu0 %v2474
      %v2700 = vpop.f32.mrb[0].mxu0
      %v2701 = vadd.f32 0.0, %v2700
      %v2702 = vpop.f32.mrb[0].mxu0
      %v2703 = vadd.f32 0.0, %v2702
      %2704 = vmatprep.mubr.f32.mxu0 0.0
      %2705 = vmatmul.mubr.f32.gmra.mrb[0].mxu0 %v2477
      %v2706 = vpop.f32.mrb[0].mxu0
      %v2707 = vadd.f32 0.0, %v2706
      %v2708 = vpop.f32.mrb[0].mxu0
      %v2709 = vadd.f32 0.0, %v2708
      %2710 = vmatprep.mubr.f32.mxu0 0.0
      %2711 = vmatmul.mubr.f32.gmra.mrb[0].mxu0 %v2480
      %v2712 = vpop.f32.mrb[0].mxu0
      %v2713 = vadd.f32 0.0, %v2712
      %v2714 = vpop.f32.mrb[0].mxu0
      %v2715 = vadd.f32 0.0, %v2714
      %2716 = vmatprep.mubr.f32.mxu0 0.0
      %2717 = vmatmul.mubr.f32.gmra.mrb[0].mxu0 %v2483
      %v2718 = vpop.f32.mrb[0].mxu0
      %v2719 = vadd.f32 0.0, %v2718
      %v2720 = vpop.f32.mrb[0].mxu0
      %v2721 = vadd.f32 0.0, %v2720
      %2722 = vmatprep.mubr.f32.mxu0 0.0
      %2723 = vmatmul.mubr.f32.gmra.mrb[0].mxu0 %v2486
      %v2724 = vpop.f32.mrb[0].mxu0
      %v2725 = vadd.f32 0.0, %v2724
      %v2726 = vpop.f32.mrb[0].mxu0
      %v2727 = vadd.f32 0.0, %v2726
      %2728 = vmatprep.mubr.f32.mxu0 0.0
      %2729 = vmatmul.mubr.f32.gmra.mrb[0].mxu0 %v2489
      %v2730 = vpop.f32.mrb[0].mxu0
      %v2731 = vadd.f32 0.0, %v2730
      %v2732 = vpop.f32.mrb[0].mxu0
      %v2733 = vadd.f32 0.0, %v2732
      %2734 = vmatprep.mubr.f32.mxu0 0.0
      %2735 = vmatmul.mubr.f32.gmra.mrb[0].mxu0 %v2492
      %v2736 = vpop.f32.mrb[0].mxu0
      %v2737 = vadd.f32 0.0, %v2736
      %v2738 = vpop.f32.mrb[0].mxu0
      %v2739 = vadd.f32 0.0, %v2738
      %2740 = vmatprep.mubr.f32.mxu0 0.0
      %2741 = vmatmul.mubr.f32.gmra.mrb[0].mxu0 %v2495
      %v2742 = vpop.f32.mrb[0].mxu0
      %v2743 = vadd.f32 0.0, %v2742
      %v2744 = vpop.f32.mrb[0].mxu0
      %v2745 = vadd.f32 0.0, %v2744
      %2746 = vdwg.mxu0
      %2747 = vst [vmem:[#allocation3] sm:$0xff] %v2564
      %2748 = vst [vmem:[#allocation3 + $0x8] sm:$0xff] %v2566
      %2749 = vst [vmem:[#allocation3 + $0x10] sm:$0xff] %v2689
      %2750 = vst.msk [vmem:[#allocation3 + $0x18] sm:$0xff] %vm880, %v2691
      %2751 = vst [vmem:[#allocation3 + $0x20] sm:$0xff] %v2570
      %2752 = vst [vmem:[#allocation3 + $0x28] sm:$0xff] %v2572
      %2753 = vst [vmem:[#allocation3 + $0x30] sm:$0xff] %v2695
      %2754 = vst.msk [vmem:[#allocation3 + $0x38] sm:$0xff] %vm880, %v2697
      %2755 = vst [vmem:[#allocation3 + $0x40] sm:$0xff] %v2576
      %2756 = vst [vmem:[#allocation3 + $0x48] sm:$0xff] %v2578
      %2757 = vst [vmem:[#allocation3 + $0x50] sm:$0xff] %v2701
      %2758 = vst.msk [vmem:[#allocation3 + $0x58] sm:$0xff] %vm880, %v2703
      %2759 = vst [vmem:[#allocation3 + $0x60] sm:$0xff] %v2582
      %2760 = vst [vmem:[#allocation3 + $0x68] sm:$0xff] %v2584
      %2761 = vst [vmem:[#allocation3 + $0x70] sm:$0xff] %v2707
      %2762 = vst.msk [vmem:[#allocation3 + $0x78] sm:$0xff] %vm880, %v2709
      %2763 = vst [vmem:[#allocation3 + $0x80] sm:$0xff] %v2588
      %2764 = vst [vmem:[#allocation3 + $0x88] sm:$0xff] %v2590
      %2765 = vst [vmem:[#allocation3 + $0x90] sm:$0xff] %v2713
      %2766 = vst.msk [vmem:[#allocation3 + $0x98] sm:$0xff] %vm880, %v2715
      %2767 = vst [vmem:[#allocation3 + $0xa0] sm:$0xff] %v2594
      %2768 = vst [vmem:[#allocation3 + $0xa8] sm:$0xff] %v2596
      %2769 = vst [vmem:[#allocation3 + $0xb0] sm:$0xff] %v2719
      %2770 = vst.msk [vmem:[#allocation3 + $0xb8] sm:$0xff] %vm880, %v2721
      %2771 = vst [vmem:[#allocation3 + $0xc0] sm:$0xff] %v2600
      %2772 = vst [vmem:[#allocation3 + $0xc8] sm:$0xff] %v2602
      %2773 = vst [vmem:[#allocation3 + $0xd0] sm:$0xff] %v2725
      %2774 = vst.msk [vmem:[#allocation3 + $0xd8] sm:$0xff] %vm880, %v2727
      %2775 = vst [vmem:[#allocation3 + $0xe0] sm:$0xff] %v2606
      %2776 = vst [vmem:[#allocation3 + $0xe8] sm:$0xff] %v2608
      %2777 = vst [vmem:[#allocation3 + $0xf0] sm:$0xff] %v2731
      %2778 = vst.msk [vmem:[#allocation3 + $0xf8] sm:$0xff] %vm880, %v2733
      %2779 = vst [vmem:[#allocation3 + $0x100] sm:$0xff] %v2612
      %2780 = vst [vmem:[#allocation3 + $0x108] sm:$0xff] %v2614
      %2781 = vst [vmem:[#allocation3 + $0x110] sm:$0xff] %v2737
      %2782 = vst.msk [vmem:[#allocation3 + $0x118] sm:$0xff] %vm880, %v2739
      %2783 = vst [vmem:[#allocation3 + $0x120] sm:$0x7] %v2618
      %2784 = vst [vmem:[#allocation3 + $0x128] sm:$0x7] %v2620
      %2785 = vst [vmem:[#allocation3 + $0x130] sm:$0x7] %v2743
      %2786 = vst.msk [vmem:[#allocation3 + $0x138] sm:$0x7] %vm953, %v2745
      %v2787 = vld [vmem:[#allocation3] sm:$0x7]
      %v2788 = vld [vmem:[#allocation3 + $0x8] sm:$0x7]
      %v2789 = vld [vmem:[#allocation3 + $0x10] sm:$0x7]
      %v2790 = vadd.f32 %v2787, 0.0
      %v2791 = vadd.f32 %v2788, 0.0
      %v2792 = vadd.f32 %v2789, 0.0
      %v2793 = vld [vmem:[#allocation3] sm:$0x38]
      %v2794 = vld [vmem:[#allocation3 + $0x8] sm:$0x38]
      %v2795 = vld [vmem:[#allocation3 + $0x10] sm:$0x38]
      %v2799 = vrot.slane %v2793, 3
      %v2800 = vrot.slane %v2794, 3
      %v2801 = vrot.slane %v2795, 3
      %2802 = vrot.lane.b32.xlu0 %v2799, 127
      %v2803 = vpop.permute.xlu0 %2802
      %2804 = vrot.lane.b32.xlu0 %v2800, 127
      %v2805 = vpop.permute.xlu0 %2804
      %2806 = vrot.lane.b32.xlu0 %v2801, 127
      %v2807 = vpop.permute.xlu0 %2806
      %v2808 = vsel %vm976, %v2803, %v2805
      %v2809 = vsel %vm976, %v2805, %v2807
      %v2813 = vadd.f32 %v2790, %v2808
      %v2814 = vadd.f32 %v2791, %v2809
      %v2815 = vadd.f32 %v2792, %v2807
      %v2816 = vld [vmem:[#allocation3] sm:$0xc0]
      %v2817 = vld [vmem:[#allocation3 + $0x8] sm:$0xc0]
      %v2818 = vld [vmem:[#allocation3 + $0x10] sm:$0xc0]
      %v2819 = vld [vmem:[#allocation3 + $0x20] sm:$0x1]
      %v2820 = vld [vmem:[#allocation3 + $0x28] sm:$0x1]
      %v2821 = vld [vmem:[#allocation3 + $0x30] sm:$0x1]
      %v2828 = vrot.slane %v2816, 6
      %v2829 = vrot.slane %v2819, 6
      %v2830 = vsel %vm997, %v2828, %v2829
      %v2831 = vrot.slane %v2817, 6
      %v2832 = vrot.slane %v2820, 6
      %v2833 = vsel %vm997, %v2831, %v2832
      %v2834 = vrot.slane %v2818, 6
      %v2835 = vrot.slane %v2821, 6
      %v2836 = vsel %vm997, %v2834, %v2835
      %2837 = vrot.lane.b32.xlu0 %v2830, 126
      %v2838 = vpop.permute.xlu0 %2837
      %2839 = vrot.lane.b32.xlu0 %v2833, 126
      %v2840 = vpop.permute.xlu0 %2839
      %2841 = vrot.lane.b32.xlu0 %v2836, 126
      %v2842 = vpop.permute.xlu0 %2841
      %v2843 = vsel %vm1013, %v2838, %v2840
      %v2844 = vsel %vm1013, %v2840, %v2842
      %v2848 = vadd.f32 %v2813, %v2843
      %v2849 = vadd.f32 %v2814, %v2844
      %v2850 = vadd.f32 %v2815, %v2842
      %v2851 = vld [vmem:[#allocation3 + $0x20] sm:$0xe]
      %v2852 = vld [vmem:[#allocation3 + $0x28] sm:$0xe]
      %v2853 = vld [vmem:[#allocation3 + $0x30] sm:$0xe]
      %v2857 = vrot.slane %v2851, 1
      %v2858 = vrot.slane %v2852, 1
      %v2859 = vrot.slane %v2853, 1
      %2860 = vrot.lane.b32.xlu0 %v2857, 125
      %v2861 = vpop.permute.xlu0 %2860
      %2862 = vrot.lane.b32.xlu0 %v2858, 125
      %v2863 = vpop.permute.xlu0 %2862
      %2864 = vrot.lane.b32.xlu0 %v2859, 125
      %v2865 = vpop.permute.xlu0 %2864
      %v2866 = vsel %vm1037, %v2861, %v2863
      %v2867 = vsel %vm1037, %v2863, %v2865
      %v2871 = vadd.f32 %v2848, %v2866
      %v2872 = vadd.f32 %v2849, %v2867
      %v2873 = vadd.f32 %v2850, %v2865
      %v2874 = vld [vmem:[#allocation3 + $0x20] sm:$0x70]
      %v2875 = vld [vmem:[#allocation3 + $0x28] sm:$0x70]
      %v2876 = vld [vmem:[#allocation3 + $0x30] sm:$0x70]
      %v2880 = vrot.slane %v2874, 4
      %v2881 = vrot.slane %v2875, 4
      %v2882 = vrot.slane %v2876, 4
      %2883 = vrot.lane.b32.xlu0 %v2880, 124
      %v2884 = vpop.permute.xlu0 %2883
      %2885 = vrot.lane.b32.xlu0 %v2881, 124
      %v2886 = vpop.permute.xlu0 %2885
      %2887 = vrot.lane.b32.xlu0 %v2882, 124
      %v2888 = vpop.permute.xlu0 %2887
      %v2889 = vsel %vm1061, %v2884, %v2886
      %v2890 = vsel %vm1061, %v2886, %v2888
      %v2894 = vadd.f32 %v2871, %v2889
      %v2895 = vadd.f32 %v2872, %v2890
      %v2896 = vadd.f32 %v2873, %v2888
      %v2897 = vld [vmem:[#allocation3 + $0x20] sm:$0x80]
      %v2898 = vld [vmem:[#allocation3 + $0x28] sm:$0x80]
      %v2899 = vld [vmem:[#allocation3 + $0x30] sm:$0x80]
      %v2900 = vld [vmem:[#allocation3 + $0x38] sm:$0x80]
      %v2901 = vld [vmem:[#allocation3 + $0x40] sm:$0x3]
      %v2902 = vld [vmem:[#allocation3 + $0x48] sm:$0x3]
      %v2903 = vld [vmem:[#allocation3 + $0x50] sm:$0x3]
      %v2904 = vld [vmem:[#allocation3 + $0x58] sm:$0x3]
      %v2913 = vrot.slane %v2897, 7
      %v2914 = vrot.slane %v2901, 7
      %v2915 = vsel %vm1082, %v2913, %v2914
      %v2916 = vrot.slane %v2898, 7
      %v2917 = vrot.slane %v2902, 7
      %v2918 = vsel %vm1082, %v2916, %v2917
      %v2919 = vrot.slane %v2899, 7
      %v2920 = vrot.slane %v2903, 7
      %v2921 = vsel %vm1082, %v2919, %v2920
      %v2922 = vrot.slane %v2900, 7
      %v2923 = vrot.slane %v2904, 7
      %v2924 = vsel %vm1082, %v2922, %v2923
      %2925 = vrot.lane.b32.xlu0 %v2915, 106
      %v2926 = vpop.permute.xlu0 %2925
      %2927 = vrot.lane.b32.xlu0 %v2918, 106
      %v2928 = vpop.permute.xlu0 %2927
      %2929 = vrot.lane.b32.xlu0 %v2921, 106
      %v2930 = vpop.permute.xlu0 %2929
      %2931 = vrot.lane.b32.xlu0 %v2924, 106
      %v2932 = vpop.permute.xlu0 %2931
      %v2933 = vsel %vm1145, %v2926, %v2928
      %v2934 = vsel %vm1145, %v2928, %v2930
      %v2935 = vsel %vm1145, %v2930, %v2932
      %v2939 = vadd.f32 %v2894, %v2933
      %v2940 = vadd.f32 %v2895, %v2934
      %v2941 = vadd.f32 %v2896, %v2935
      %v2942 = vld [vmem:[#allocation3 + $0x40] sm:$0x1c]
      %v2943 = vld [vmem:[#allocation3 + $0x48] sm:$0x1c]
      %v2944 = vld [vmem:[#allocation3 + $0x50] sm:$0x1c]
      %v2945 = vld [vmem:[#allocation3 + $0x58] sm:$0x1c]
      %v2950 = vrot.slane %v2942, 2
      %v2951 = vrot.slane %v2943, 2
      %v2952 = vrot.slane %v2944, 2
      %v2953 = vrot.slane %v2945, 2
      %2954 = vrot.lane.b32.xlu0 %v2950, 105
      %v2955 = vpop.permute.xlu0 %2954
      %2956 = vrot.lane.b32.xlu0 %v2951, 105
      %v2957 = vpop.permute.xlu0 %2956
      %2958 = vrot.lane.b32.xlu0 %v2952, 105
      %v2959 = vpop.permute.xlu0 %2958
      %2960 = vrot.lane.b32.xlu0 %v2953, 105
      %v2961 = vpop.permute.xlu0 %2960
      %v2962 = vsel %vm1166, %v2955, %v2957
      %v2963 = vsel %vm1166, %v2957, %v2959
      %v2964 = vsel %vm1166, %v2959, %v2961
      %v2968 = vadd.f32 %v2939, %v2962
      %v2969 = vadd.f32 %v2940, %v2963
      %v2970 = vadd.f32 %v2941, %v2964
      %v2971 = vld [vmem:[#allocation3 + $0x40] sm:$0xe0]
      %v2972 = vld [vmem:[#allocation3 + $0x48] sm:$0xe0]
      %v2973 = vld [vmem:[#allocation3 + $0x50] sm:$0xe0]
      %v2974 = vld [vmem:[#allocation3 + $0x58] sm:$0xe0]
      %v2979 = vrot.slane %v2971, 5
      %v2980 = vrot.slane %v2972, 5
      %v2981 = vrot.slane %v2973, 5
      %v2982 = vrot.slane %v2974, 5
      %2983 = vrot.lane.b32.xlu0 %v2979, 104
      %v2984 = vpop.permute.xlu0 %2983
      %2985 = vrot.lane.b32.xlu0 %v2980, 104
      %v2986 = vpop.permute.xlu0 %2985
      %2987 = vrot.lane.b32.xlu0 %v2981, 104
      %v2988 = vpop.permute.xlu0 %2987
      %2989 = vrot.lane.b32.xlu0 %v2982, 104
      %v2990 = vpop.permute.xlu0 %2989
      %v2991 = vsel %vm1190, %v2984, %v2986
      %v2992 = vsel %vm1190, %v2986, %v2988
      %v2993 = vsel %vm1190, %v2988, %v2990
      %v2997 = vadd.f32 %v2968, %v2991
      %v2998 = vadd.f32 %v2969, %v2992
      %v2999 = vadd.f32 %v2970, %v2993
      %v3000 = vld [vmem:[#allocation3 + $0x60] sm:$0x7]
      %v3001 = vld [vmem:[#allocation3 + $0x68] sm:$0x7]
      %v3002 = vld [vmem:[#allocation3 + $0x70] sm:$0x7]
      %v3003 = vld [vmem:[#allocation3 + $0x78] sm:$0x7]
      %3008 = vrot.lane.b32.xlu0 %v3000, 103
      %v3009 = vpop.permute.xlu0 %3008
      %3010 = vrot.lane.b32.xlu0 %v3001, 103
      %v3011 = vpop.permute.xlu0 %3010
      %3012 = vrot.lane.b32.xlu0 %v3002, 103
      %v3013 = vpop.permute.xlu0 %3012
      %3014 = vrot.lane.b32.xlu0 %v3003, 103
      %v3015 = vpop.permute.xlu0 %3014
      %v3016 = vsel %vm1226, %v3009, %v3011
      %v3017 = vsel %vm1226, %v3011, %v3013
      %v3018 = vsel %vm1226, %v3013, %v3015
      %v3022 = vadd.f32 %v2997, %v3016
      %v3023 = vadd.f32 %v2998, %v3017
      %v3024 = vadd.f32 %v2999, %v3018
      %v3025 = vld [vmem:[#allocation3 + $0x60] sm:$0x38]
      %v3026 = vld [vmem:[#allocation3 + $0x68] sm:$0x38]
      %v3027 = vld [vmem:[#allocation3 + $0x70] sm:$0x38]
      %v3028 = vld [vmem:[#allocation3 + $0x78] sm:$0x38]
      %v3033 = vrot.slane %v3025, 3
      %v3034 = vrot.slane %v3026, 3
      %v3035 = vrot.slane %v3027, 3
      %v3036 = vrot.slane %v3028, 3
      %3037 = vrot.lane.b32.xlu0 %v3033, 102
      %v3038 = vpop.permute.xlu0 %3037
      %3039 = vrot.lane.b32.xlu0 %v3034, 102
      %v3040 = vpop.permute.xlu0 %3039
      %3041 = vrot.lane.b32.xlu0 %v3035, 102
      %v3042 = vpop.permute.xlu0 %3041
      %3043 = vrot.lane.b32.xlu0 %v3036, 102
      %v3044 = vpop.permute.xlu0 %3043
      %v3045 = vsel %vm1250, %v3038, %v3040
      %v3046 = vsel %vm1250, %v3040, %v3042
      %v3047 = vsel %vm1250, %v3042, %v3044
      %v3051 = vadd.f32 %v3022, %v3045
      %v3052 = vadd.f32 %v3023, %v3046
      %v3053 = vadd.f32 %v3024, %v3047
      %v3054 = vld [vmem:[#allocation3 + $0x60] sm:$0xc0]
      %v3055 = vld [vmem:[#allocation3 + $0x68] sm:$0xc0]
      %v3056 = vld [vmem:[#allocation3 + $0x70] sm:$0xc0]
      %v3057 = vld [vmem:[#allocation3 + $0x78] sm:$0xc0]
      %v3058 = vld [vmem:[#allocation3 + $0x80] sm:$0x1]
      %v3059 = vld [vmem:[#allocation3 + $0x88] sm:$0x1]
      %v3060 = vld [vmem:[#allocation3 + $0x90] sm:$0x1]
      %v3061 = vld [vmem:[#allocation3 + $0x98] sm:$0x1]
      %v3070 = vrot.slane %v3054, 6
      %v3071 = vrot.slane %v3058, 6
      %v3072 = vsel %vm997, %v3070, %v3071
      %v3073 = vrot.slane %v3055, 6
      %v3074 = vrot.slane %v3059, 6
      %v3075 = vsel %vm997, %v3073, %v3074
      %v3076 = vrot.slane %v3056, 6
      %v3077 = vrot.slane %v3060, 6
      %v3078 = vsel %vm997, %v3076, %v3077
      %v3079 = vrot.slane %v3057, 6
      %v3080 = vrot.slane %v3061, 6
      %v3081 = vsel %vm997, %v3079, %v3080
      %3082 = vrot.lane.b32.xlu0 %v3072, 84
      %v3083 = vpop.permute.xlu0 %3082
      %3084 = vrot.lane.b32.xlu0 %v3075, 84
      %v3085 = vpop.permute.xlu0 %3084
      %3086 = vrot.lane.b32.xlu0 %v3078, 84
      %v3087 = vpop.permute.xlu0 %3086
      %3088 = vrot.lane.b32.xlu0 %v3081, 84
      %v3089 = vpop.permute.xlu0 %3088
      %v3090 = vsel %vm1339, %v3083, %v3085
      %v3091 = vsel %vm1339, %v3085, %v3087
      %v3092 = vsel %vm1339, %v3087, %v3089
      %v3096 = vadd.f32 %v3051, %v3090
      %v3097 = vadd.f32 %v3052, %v3091
      %v3098 = vadd.f32 %v3053, %v3092
      %v3099 = vld [vmem:[#allocation3 + $0x80] sm:$0xe]
      %v3100 = vld [vmem:[#allocation3 + $0x88] sm:$0xe]
      %v3101 = vld [vmem:[#allocation3 + $0x90] sm:$0xe]
      %v3102 = vld [vmem:[#allocation3 + $0x98] sm:$0xe]
      %v3107 = vrot.slane %v3099, 1
      %v3108 = vrot.slane %v3100, 1
      %v3109 = vrot.slane %v3101, 1
      %v3110 = vrot.slane %v3102, 1
      %3111 = vrot.lane.b32.xlu0 %v3107, 83
      %v3112 = vpop.permute.xlu0 %3111
      %3113 = vrot.lane.b32.xlu0 %v3108, 83
      %v3114 = vpop.permute.xlu0 %3113
      %3115 = vrot.lane.b32.xlu0 %v3109, 83
      %v3116 = vpop.permute.xlu0 %3115
      %3117 = vrot.lane.b32.xlu0 %v3110, 83
      %v3118 = vpop.permute.xlu0 %3117
      %v3119 = vsel %vm1369, %v3112, %v3114
      %v3120 = vsel %vm1369, %v3114, %v3116
      %v3121 = vsel %vm1369, %v3116, %v3118
      %v3125 = vadd.f32 %v3096, %v3119
      %v3126 = vadd.f32 %v3097, %v3120
      %v3127 = vadd.f32 %v3098, %v3121
      %v3128 = vld [vmem:[#allocation3 + $0x80] sm:$0x70]
      %v3129 = vld [vmem:[#allocation3 + $0x88] sm:$0x70]
      %v3130 = vld [vmem:[#allocation3 + $0x90] sm:$0x70]
      %v3131 = vld [vmem:[#allocation3 + $0x98] sm:$0x70]
      %v3136 = vrot.slane %v3128, 4
      %v3137 = vrot.slane %v3129, 4
      %v3138 = vrot.slane %v3130, 4
      %v3139 = vrot.slane %v3131, 4
      %3140 = vrot.lane.b32.xlu0 %v3136, 82
      %v3141 = vpop.permute.xlu0 %3140
      %3142 = vrot.lane.b32.xlu0 %v3137, 82
      %v3143 = vpop.permute.xlu0 %3142
      %3144 = vrot.lane.b32.xlu0 %v3138, 82
      %v3145 = vpop.permute.xlu0 %3144
      %3146 = vrot.lane.b32.xlu0 %v3139, 82
      %v3147 = vpop.permute.xlu0 %3146
      %v3148 = vsel %vm1395, %v3141, %v3143
      %v3149 = vsel %vm1395, %v3143, %v3145
      %v3150 = vsel %vm1395, %v3145, %v3147
      %v3154 = vadd.f32 %v3125, %v3148
      %v3155 = vadd.f32 %v3126, %v3149
      %v3156 = vadd.f32 %v3127, %v3150
      %v3157 = vld [vmem:[#allocation3 + $0x80] sm:$0x80]
      %v3158 = vld [vmem:[#allocation3 + $0x88] sm:$0x80]
      %v3159 = vld [vmem:[#allocation3 + $0x90] sm:$0x80]
      %v3160 = vld [vmem:[#allocation3 + $0x98] sm:$0x80]
      %v3161 = vld [vmem:[#allocation3 + $0xa0] sm:$0x3]
      %v3162 = vld [vmem:[#allocation3 + $0xa8] sm:$0x3]
      %v3163 = vld [vmem:[#allocation3 + $0xb0] sm:$0x3]
      %v3164 = vld [vmem:[#allocation3 + $0xb8] sm:$0x3]
      %v3173 = vrot.slane %v3157, 7
      %v3174 = vrot.slane %v3161, 7
      %v3175 = vsel %vm1082, %v3173, %v3174
      %v3176 = vrot.slane %v3158, 7
      %v3177 = vrot.slane %v3162, 7
      %v3178 = vsel %vm1082, %v3176, %v3177
      %v3179 = vrot.slane %v3159, 7
      %v3180 = vrot.slane %v3163, 7
      %v3181 = vsel %vm1082, %v3179, %v3180
      %v3182 = vrot.slane %v3160, 7
      %v3183 = vrot.slane %v3164, 7
      %v3184 = vsel %vm1082, %v3182, %v3183
      %3185 = vrot.lane.b32.xlu0 %v3175, 81
      %v3186 = vpop.permute.xlu0 %3185
      %3187 = vrot.lane.b32.xlu0 %v3178, 81
      %v3188 = vpop.permute.xlu0 %3187
      %3189 = vrot.lane.b32.xlu0 %v3181, 81
      %v3190 = vpop.permute.xlu0 %3189
      %3191 = vrot.lane.b32.xlu0 %v3184, 81
      %v3192 = vpop.permute.xlu0 %3191
      %v3193 = vsel %vm1425, %v3186, %v3188
      %v3194 = vsel %vm1425, %v3188, %v3190
      %v3195 = vsel %vm1425, %v3190, %v3192
      %v3199 = vadd.f32 %v3154, %v3193
      %v3200 = vadd.f32 %v3155, %v3194
      %v3201 = vadd.f32 %v3156, %v3195
      %v3202 = vld [vmem:[#allocation3 + $0xa0] sm:$0x1c]
      %v3203 = vld [vmem:[#allocation3 + $0xa8] sm:$0x1c]
      %v3204 = vld [vmem:[#allocation3 + $0xb0] sm:$0x1c]
      %v3205 = vld [vmem:[#allocation3 + $0xb8] sm:$0x1c]
      %v3210 = vrot.slane %v3202, 2
      %v3211 = vrot.slane %v3203, 2
      %v3212 = vrot.slane %v3204, 2
      %v3213 = vrot.slane %v3205, 2
      %3214 = vrot.lane.b32.xlu0 %v3210, 80
      %v3215 = vpop.permute.xlu0 %3214
      %3216 = vrot.lane.b32.xlu0 %v3211, 80
      %v3217 = vpop.permute.xlu0 %3216
      %3218 = vrot.lane.b32.xlu0 %v3212, 80
      %v3219 = vpop.permute.xlu0 %3218
      %3220 = vrot.lane.b32.xlu0 %v3213, 80
      %v3221 = vpop.permute.xlu0 %3220
      %v3222 = vsel %vm1471, %v3215, %v3217
      %v3223 = vsel %vm1471, %v3217, %v3219
      %v3224 = vsel %vm1471, %v3219, %v3221
      %v3228 = vadd.f32 %v3199, %v3222
      %v3229 = vadd.f32 %v3200, %v3223
      %v3230 = vadd.f32 %v3201, %v3224
      %v3231 = vld [vmem:[#allocation3 + $0xa0] sm:$0xe0]
      %v3232 = vld [vmem:[#allocation3 + $0xa8] sm:$0xe0]
      %v3233 = vld [vmem:[#allocation3 + $0xb0] sm:$0xe0]
      %v3234 = vld [vmem:[#allocation3 + $0xb8] sm:$0xe0]
      %v3239 = vrot.slane %v3231, 5
      %v3240 = vrot.slane %v3232, 5
      %v3241 = vrot.slane %v3233, 5
      %v3242 = vrot.slane %v3234, 5
      %3243 = vrot.lane.b32.xlu0 %v3239, 62
      %v3244 = vpop.permute.xlu0 %3243
      %3245 = vrot.lane.b32.xlu0 %v3240, 62
      %v3246 = vpop.permute.xlu0 %3245
      %3247 = vrot.lane.b32.xlu0 %v3241, 62
      %v3248 = vpop.permute.xlu0 %3247
      %3249 = vrot.lane.b32.xlu0 %v3242, 62
      %v3250 = vpop.permute.xlu0 %3249
      %v3251 = vsel %vm1577, %v3244, %v3246
      %v3252 = vsel %vm1577, %v3246, %v3248
      %v3253 = vsel %vm1577, %v3248, %v3250
      %v3257 = vadd.f32 %v3228, %v3251
      %v3258 = vadd.f32 %v3229, %v3252
      %v3259 = vadd.f32 %v3230, %v3253
      %v3260 = vld [vmem:[#allocation3 + $0xc0] sm:$0x7]
      %v3261 = vld [vmem:[#allocation3 + $0xc8] sm:$0x7]
      %v3262 = vld [vmem:[#allocation3 + $0xd0] sm:$0x7]
      %v3263 = vld [vmem:[#allocation3 + $0xd8] sm:$0x7]
      %3268 = vrot.lane.b32.xlu0 %v3260, 61
      %v3269 = vpop.permute.xlu0 %3268
      %3270 = vrot.lane.b32.xlu0 %v3261, 61
      %v3271 = vpop.permute.xlu0 %3270
      %3272 = vrot.lane.b32.xlu0 %v3262, 61
      %v3273 = vpop.permute.xlu0 %3272
      %3274 = vrot.lane.b32.xlu0 %v3263, 61
      %v3275 = vpop.permute.xlu0 %3274
      %v3276 = vsel %vm1607, %v3269, %v3271
      %v3277 = vsel %vm1607, %v3271, %v3273
      %v3278 = vsel %vm1607, %v3273, %v3275
      %v3282 = vadd.f32 %v3257, %v3276
      %v3283 = vadd.f32 %v3258, %v3277
      %v3284 = vadd.f32 %v3259, %v3278
      %v3285 = vld [vmem:[#allocation3 + $0xc0] sm:$0x38]
      %v3286 = vld [vmem:[#allocation3 + $0xc8] sm:$0x38]
      %v3287 = vld [vmem:[#allocation3 + $0xd0] sm:$0x38]
      %v3288 = vld [vmem:[#allocation3 + $0xd8] sm:$0x38]
      %v3293 = vrot.slane %v3285, 3
      %v3294 = vrot.slane %v3286, 3
      %v3295 = vrot.slane %v3287, 3
      %v3296 = vrot.slane %v3288, 3
      %3297 = vrot.lane.b32.xlu0 %v3293, 60
      %v3298 = vpop.permute.xlu0 %3297
      %3299 = vrot.lane.b32.xlu0 %v3294, 60
      %v3300 = vpop.permute.xlu0 %3299
      %3301 = vrot.lane.b32.xlu0 %v3295, 60
      %v3302 = vpop.permute.xlu0 %3301
      %3303 = vrot.lane.b32.xlu0 %v3296, 60
      %v3304 = vpop.permute.xlu0 %3303
      %v3305 = vsel %vm1637, %v3298, %v3300
      %v3306 = vsel %vm1637, %v3300, %v3302
      %v3307 = vsel %vm1637, %v3302, %v3304
      %v3311 = vadd.f32 %v3282, %v3305
      %v3312 = vadd.f32 %v3283, %v3306
      %v3313 = vadd.f32 %v3284, %v3307
      %v3314 = vld [vmem:[#allocation3 + $0xc0] sm:$0xc0]
      %v3315 = vld [vmem:[#allocation3 + $0xc8] sm:$0xc0]
      %v3316 = vld [vmem:[#allocation3 + $0xd0] sm:$0xc0]
      %v3317 = vld [vmem:[#allocation3 + $0xd8] sm:$0xc0]
      %v3318 = vld [vmem:[#allocation3 + $0xe0] sm:$0x1]
      %v3319 = vld [vmem:[#allocation3 + $0xe8] sm:$0x1]
      %v3320 = vld [vmem:[#allocation3 + $0xf0] sm:$0x1]
      %v3321 = vld [vmem:[#allocation3 + $0xf8] sm:$0x1]
      %v3330 = vrot.slane %v3314, 6
      %v3331 = vrot.slane %v3318, 6
      %v3332 = vsel %vm997, %v3330, %v3331
      %v3333 = vrot.slane %v3315, 6
      %v3334 = vrot.slane %v3319, 6
      %v3335 = vsel %vm997, %v3333, %v3334
      %v3336 = vrot.slane %v3316, 6
      %v3337 = vrot.slane %v3320, 6
      %v3338 = vsel %vm997, %v3336, %v3337
      %v3339 = vrot.slane %v3317, 6
      %v3340 = vrot.slane %v3321, 6
      %v3341 = vsel %vm997, %v3339, %v3340
      %3342 = vrot.lane.b32.xlu0 %v3332, 59
      %v3343 = vpop.permute.xlu0 %3342
      %3344 = vrot.lane.b32.xlu0 %v3335, 59
      %v3345 = vpop.permute.xlu0 %3344
      %3346 = vrot.lane.b32.xlu0 %v3338, 59
      %v3347 = vpop.permute.xlu0 %3346
      %3348 = vrot.lane.b32.xlu0 %v3341, 59
      %v3349 = vpop.permute.xlu0 %3348
      %v3350 = vsel %vm1663, %v3343, %v3345
      %v3351 = vsel %vm1663, %v3345, %v3347
      %v3352 = vsel %vm1663, %v3347, %v3349
      %v3356 = vadd.f32 %v3311, %v3350
      %v3357 = vadd.f32 %v3312, %v3351
      %v3358 = vadd.f32 %v3313, %v3352
      %v3359 = vld [vmem:[#allocation3 + $0xe0] sm:$0xe]
      %v3360 = vld [vmem:[#allocation3 + $0xe8] sm:$0xe]
      %v3361 = vld [vmem:[#allocation3 + $0xf0] sm:$0xe]
      %v3362 = vld [vmem:[#allocation3 + $0xf8] sm:$0xe]
      %v3367 = vrot.slane %v3359, 1
      %v3368 = vrot.slane %v3360, 1
      %v3369 = vrot.slane %v3361, 1
      %v3370 = vrot.slane %v3362, 1
      %3371 = vrot.lane.b32.xlu0 %v3367, 58
      %v3372 = vpop.permute.xlu0 %3371
      %3373 = vrot.lane.b32.xlu0 %v3368, 58
      %v3374 = vpop.permute.xlu0 %3373
      %3375 = vrot.lane.b32.xlu0 %v3369, 58
      %v3376 = vpop.permute.xlu0 %3375
      %3377 = vrot.lane.b32.xlu0 %v3370, 58
      %v3378 = vpop.permute.xlu0 %3377
      %v3379 = vsel %vm1693, %v3372, %v3374
      %v3380 = vsel %vm1693, %v3374, %v3376
      %v3381 = vsel %vm1693, %v3376, %v3378
      %v3385 = vadd.f32 %v3356, %v3379
      %v3386 = vadd.f32 %v3357, %v3380
      %v3387 = vadd.f32 %v3358, %v3381
      %v3388 = vld [vmem:[#allocation3 + $0xe0] sm:$0x70]
      %v3389 = vld [vmem:[#allocation3 + $0xe8] sm:$0x70]
      %v3390 = vld [vmem:[#allocation3 + $0xf0] sm:$0x70]
      %v3391 = vld [vmem:[#allocation3 + $0xf8] sm:$0x70]
      %v3396 = vrot.slane %v3388, 4
      %v3397 = vrot.slane %v3389, 4
      %v3398 = vrot.slane %v3390, 4
      %v3399 = vrot.slane %v3391, 4
      %3400 = vrot.lane.b32.xlu0 %v3396, 40
      %v3401 = vpop.permute.xlu0 %3400
      %3402 = vrot.lane.b32.xlu0 %v3397, 40
      %v3403 = vpop.permute.xlu0 %3402
      %3404 = vrot.lane.b32.xlu0 %v3398, 40
      %v3405 = vpop.permute.xlu0 %3404
      %3406 = vrot.lane.b32.xlu0 %v3399, 40
      %v3407 = vpop.permute.xlu0 %3406
      %v3408 = vsel %vm1799, %v3401, %v3403
      %v3409 = vsel %vm1799, %v3403, %v3405
      %v3410 = vsel %vm1799, %v3405, %v3407
      %v3414 = vadd.f32 %v3385, %v3408
      %v3415 = vadd.f32 %v3386, %v3409
      %v3416 = vadd.f32 %v3387, %v3410
      %v3417 = vld [vmem:[#allocation3 + $0xe0] sm:$0x80]
      %v3418 = vld [vmem:[#allocation3 + $0xe8] sm:$0x80]
      %v3419 = vld [vmem:[#allocation3 + $0xf0] sm:$0x80]
      %v3420 = vld [vmem:[#allocation3 + $0xf8] sm:$0x80]
      %v3421 = vld [vmem:[#allocation3 + $0x100] sm:$0x3]
      %v3422 = vld [vmem:[#allocation3 + $0x108] sm:$0x3]
      %v3423 = vld [vmem:[#allocation3 + $0x110] sm:$0x3]
      %v3424 = vld [vmem:[#allocation3 + $0x118] sm:$0x3]
      %v3433 = vrot.slane %v3417, 7
      %v3434 = vrot.slane %v3421, 7
      %v3435 = vsel %vm1082, %v3433, %v3434
      %v3436 = vrot.slane %v3418, 7
      %v3437 = vrot.slane %v3422, 7
      %v3438 = vsel %vm1082, %v3436, %v3437
      %v3439 = vrot.slane %v3419, 7
      %v3440 = vrot.slane %v3423, 7
      %v3441 = vsel %vm1082, %v3439, %v3440
      %v3442 = vrot.slane %v3420, 7
      %v3443 = vrot.slane %v3424, 7
      %v3444 = vsel %vm1082, %v3442, %v3443
      %3445 = vrot.lane.b32.xlu0 %v3435, 39
      %v3446 = vpop.permute.xlu0 %3445
      %3447 = vrot.lane.b32.xlu0 %v3438, 39
      %v3448 = vpop.permute.xlu0 %3447
      %3449 = vrot.lane.b32.xlu0 %v3441, 39
      %v3450 = vpop.permute.xlu0 %3449
      %3451 = vrot.lane.b32.xlu0 %v3444, 39
      %v3452 = vpop.permute.xlu0 %3451
      %v3453 = vsel %vm1845, %v3446, %v3448
      %v3454 = vsel %vm1845, %v3448, %v3450
      %v3455 = vsel %vm1845, %v3450, %v3452
      %v3459 = vadd.f32 %v3414, %v3453
      %v3460 = vadd.f32 %v3415, %v3454
      %v3461 = vadd.f32 %v3416, %v3455
      %v3462 = vld [vmem:[#allocation3 + $0x100] sm:$0x1c]
      %v3463 = vld [vmem:[#allocation3 + $0x108] sm:$0x1c]
      %v3464 = vld [vmem:[#allocation3 + $0x110] sm:$0x1c]
      %v3465 = vld [vmem:[#allocation3 + $0x118] sm:$0x1c]
      %v3470 = vrot.slane %v3462, 2
      %v3471 = vrot.slane %v3463, 2
      %v3472 = vrot.slane %v3464, 2
      %v3473 = vrot.slane %v3465, 2
      %3474 = vrot.lane.b32.xlu0 %v3470, 38
      %v3475 = vpop.permute.xlu0 %3474
      %3476 = vrot.lane.b32.xlu0 %v3471, 38
      %v3477 = vpop.permute.xlu0 %3476
      %3478 = vrot.lane.b32.xlu0 %v3472, 38
      %v3479 = vpop.permute.xlu0 %3478
      %3480 = vrot.lane.b32.xlu0 %v3473, 38
      %v3481 = vpop.permute.xlu0 %3480
      %v3482 = vsel %vm1875, %v3475, %v3477
      %v3483 = vsel %vm1875, %v3477, %v3479
      %v3484 = vsel %vm1875, %v3479, %v3481
      %v3488 = vadd.f32 %v3459, %v3482
      %v3489 = vadd.f32 %v3460, %v3483
      %v3490 = vadd.f32 %v3461, %v3484
      %v3491 = vld [vmem:[#allocation3 + $0x100] sm:$0xe0]
      %v3492 = vld [vmem:[#allocation3 + $0x108] sm:$0xe0]
      %v3493 = vld [vmem:[#allocation3 + $0x110] sm:$0xe0]
      %v3494 = vld [vmem:[#allocation3 + $0x118] sm:$0xe0]
      %v3499 = vrot.slane %v3491, 5
      %v3500 = vrot.slane %v3492, 5
      %v3501 = vrot.slane %v3493, 5
      %v3502 = vrot.slane %v3494, 5
      %3503 = vrot.lane.b32.xlu0 %v3499, 37
      %v3504 = vpop.permute.xlu0 %3503
      %3505 = vrot.lane.b32.xlu0 %v3500, 37
      %v3506 = vpop.permute.xlu0 %3505
      %3507 = vrot.lane.b32.xlu0 %v3501, 37
      %v3508 = vpop.permute.xlu0 %3507
      %3509 = vrot.lane.b32.xlu0 %v3502, 37
      %v3510 = vpop.permute.xlu0 %3509
      %v3511 = vsel %vm1905, %v3504, %v3506
      %v3512 = vsel %vm1905, %v3506, %v3508
      %v3513 = vsel %vm1905, %v3508, %v3510
      %v3517 = vadd.f32 %v3488, %v3511
      %v3518 = vadd.f32 %v3489, %v3512
      %v3519 = vadd.f32 %v3490, %v3513
      %v3520 = vld [vmem:[#allocation3 + $0x120] sm:$0x7]
      %v3521 = vld [vmem:[#allocation3 + $0x128] sm:$0x7]
      %v3522 = vld [vmem:[#allocation3 + $0x130] sm:$0x7]
      %v3523 = vld [vmem:[#allocation3 + $0x138] sm:$0x7]
      %3528 = vrot.lane.b32.xlu0 %v3520, 36
      %v3529 = vpop.permute.xlu0 %3528
      %3530 = vrot.lane.b32.xlu0 %v3521, 36
      %v3531 = vpop.permute.xlu0 %3530
      %3532 = vrot.lane.b32.xlu0 %v3522, 36
      %v3533 = vpop.permute.xlu0 %3532
      %3534 = vrot.lane.b32.xlu0 %v3523, 36
      %v3535 = vpop.permute.xlu0 %3534
      %v3536 = vsel %vm1931, %v3529, %v3531
      %v3537 = vsel %vm1931, %v3531, %v3533
      %v3538 = vsel %vm1931, %v3533, %v3535
      %v3542 = vadd.f32 %v3517, %v3536
      %v3543 = vadd.f32 %v3518, %v3537
      %v3544 = vadd.f32 %v3519, %v3538
      %v3545 = vld [vmem:[%s5] sm:$0xff]
      %v3546 = vld [vmem:[%s5 + $0x8] sm:$0xff]
      %v3547 = vld [vmem:[%s5 + $0x10] sm:$0xff]
      %v3548 = vld [vmem:[%s5 + $0x18] sm:$0x7]
      %v3549 = vld [vmem:[%s389] sm:$0xff]
      %v3550 = vld [vmem:[%s389 + $0x8] sm:$0xff]
      %v3551 = vld [vmem:[%s389 + $0x10] sm:$0xff]
      %v3552 = vld [vmem:[%s389 + $0x18] sm:$0xff]
      %v3553 = vld [vmem:[%s389 + $0x20] sm:$0xff]
      %v3554 = vld [vmem:[%s389 + $0x28] sm:$0xff]
      %v3555 = vld [vmem:[%s389 + $0x30] sm:$0xff]
      %v3556 = vld [vmem:[%s389 + $0x38] sm:$0xff]
      %v3557 = vld [vmem:[%s389 + $0x40] sm:$0xff]
      %v3558 = vld [vmem:[%s389 + $0x48] sm:$0xff]
      %v3559 = vld [vmem:[%s389 + $0x50] sm:$0xff]
      %v3560 = vld [vmem:[%s389 + $0x58] sm:$0xff]
      %v3561 = vld [vmem:[%s389 + $0x60] sm:$0xff]
      %v3562 = vld [vmem:[%s389 + $0x68] sm:$0xff]
      %v3563 = vld [vmem:[%s389 + $0x70] sm:$0xff]
      %v3564 = vld [vmem:[%s389 + $0x78] sm:$0xff]
      %v3565 = vld [vmem:[%s389 + $0x80] sm:$0xff]
      %v3566 = vld [vmem:[%s389 + $0x88] sm:$0xff]
      %v3567 = vld [vmem:[%s389 + $0x90] sm:$0xff]
      %v3568 = vld [vmem:[%s389 + $0x98] sm:$0xff]
      %v3569 = vld [vmem:[%s389 + $0xa0] sm:$0xff]
      %v3570 = vld [vmem:[%s389 + $0xa8] sm:$0xff]
      %v3571 = vld [vmem:[%s389 + $0xb0] sm:$0xff]
      %v3572 = vld [vmem:[%s389 + $0xb8] sm:$0xff]
      %v3573 = vld [vmem:[%s389 + $0xc0] sm:$0xff]
      %v3574 = vld [vmem:[%s389 + $0xc8] sm:$0xff]
      %v3575 = vld [vmem:[%s389 + $0xd0] sm:$0xff]
      %v3576 = vld [vmem:[%s389 + $0xd8] sm:$0xff]
      %v3577 = vld [vmem:[%s389 + $0xe0] sm:$0xff]
      %v3578 = vld [vmem:[%s389 + $0xe8] sm:$0xff]
      %v3579 = vld [vmem:[%s389 + $0xf0] sm:$0xff]
      %v3580 = vld [vmem:[%s389 + $0xf8] sm:$0xff]
      %v3582 = vsel %vm461, %v3545, 0
      %v3585 = vsel %vm461, %v3546, 0
      %v3588 = vsel %vm461, %v3547, 0
      %v3591 = vsel %vm461, %v3548, 0
      %3593 = vmatprep.subr.mxu0 %v3550
      %3594 = vmatpush1.msra.mxu0 %v3549
      %3595 = vmatprep.subr.mxu0 %v3554
      %3596 = vmatpush1.msra.mxu0 %v3553
      %3597 = vmatprep.subr.mxu0 %v3558
      %3598 = vmatpush1.msra.mxu0 %v3557
      %3599 = vmatprep.subr.mxu0 %v3562
      %3600 = vmatpush1.msra.mxu0 %v3561
      %3601 = vmatprep.subr.mxu0 %v3566
      %3602 = vmatpush1.msra.mxu0 %v3565
      %3603 = vmatprep.subr.mxu0 %v3570
      %3604 = vmatpush1.msra.mxu0 %v3569
      %3605 = vmatprep.subr.mxu0 %v3574
      %3606 = vmatpush1.msra.mxu0 %v3573
      %3607 = vmatprep.subr.mxu0 %v3578
      %3608 = vmatpush1.msra.mxu0 %v3577
      %3609 = vmatprep.subr.mxu0 0.0
      %3610 = vmatpush1.msra.mxu0 0.0
      %3611 = vmatprep.subr.mxu0 0.0
      %3612 = vmatpush1.msra.mxu0 0.0
      %3613 = vmatprep.subr.mxu0 0.0
      %3614 = vmatpush1.msra.mxu0 0.0
      %3615 = vmatprep.subr.mxu0 0.0
      %3616 = vmatpush1.msra.mxu0 0.0
      %3617 = vmatprep.subr.mxu0 0.0
      %3618 = vmatpush1.msra.mxu0 0.0
      %3619 = vmatprep.subr.mxu0 0.0
      %3620 = vmatpush1.msra.mxu0 0.0
      %3621 = vmatprep.subr.mxu0 0.0
      %3622 = vmatpush1.msra.mxu0 0.0
      %3623 = vmatprep.subr.mxu0 0.0
      %3624 = vmatpush1.msra.mxu0 0.0
      %3625 = vmatprep.subr.mxu0 0.0
      %3626 = vmatpush1.msra.mxu0 0.0
      %3627 = vmatprep.subr.mxu0 0.0
      %3628 = vmatpush1.msra.mxu0 0.0
      %3629 = vmatprep.subr.mxu0 0.0
      %3630 = vmatpush1.msra.mxu0 0.0
      %3631 = vmatprep.subr.mxu0 0.0
      %3632 = vmatpush1.msra.mxu0 0.0
      %3633 = vmatprep.subr.mxu0 0.0
      %3634 = vmatpush1.msra.mxu0 0.0
      %3635 = vmatprep.subr.mxu0 0.0
      %3636 = vmatpush1.msra.mxu0 0.0
      %3637 = vmatprep.subr.mxu0 0.0
      %3638 = vmatpush1.msra.mxu0 0.0
      %3639 = vmatprep.subr.mxu0 0.0
      %3640 = vmatpush1.msra.mxu0 0.0
      %3641 = vmatprep.subr.mxu0 0.0
      %3642 = vmatpush1.msra.mxu0 0.0
      %3643 = vmatprep.subr.mxu0 0.0
      %3644 = vmatpush1.msra.mxu0 0.0
      %3645 = vmatprep.subr.mxu0 0.0
      %3646 = vmatpush1.msra.mxu0 0.0
      %3647 = vmatprep.subr.mxu0 0.0
      %3648 = vmatpush1.msra.mxu0 0.0
      %3649 = vmatprep.subr.mxu0 0.0
      %3650 = vmatpush1.msra.mxu0 0.0
      %3651 = vmatprep.subr.mxu0 0.0
      %3652 = vmatpush1.msra.mxu0 0.0
      %3653 = vmatprep.subr.mxu0 0.0
      %3654 = vmatpush1.msra.mxu0 0.0
      %3655 = vmatprep.subr.mxu0 0.0
      %3656 = vmatpush1.msra.mxu0 0.0
      %3657 = vmatprep.mubr.f32.mxu0 0.0
      %3658 = vmatmul.mubr.f32.gmra.mrb[0].mxu0 %v3582
      %v3659 = vpop.f32.mrb[0].mxu0
      %v3660 = vadd.f32 0.0, %v3659
      %v3661 = vpop.f32.mrb[0].mxu0
      %v3662 = vadd.f32 0.0, %v3661
      %3663 = vmatprep.mubr.f32.mxu0 0.0
      %3664 = vmatmul.mubr.f32.gmra.mrb[0].mxu0 %v3585
      %v3665 = vpop.f32.mrb[0].mxu0
      %v3666 = vadd.f32 0.0, %v3665
      %v3667 = vpop.f32.mrb[0].mxu0
      %v3668 = vadd.f32 0.0, %v3667
      %3669 = vmatprep.mubr.f32.mxu0 0.0
      %3670 = vmatmul.mubr.f32.gmra.mrb[0].mxu0 %v3588
      %v3671 = vpop.f32.mrb[0].mxu0
      %v3672 = vadd.f32 0.0, %v3671
      %v3673 = vpop.f32.mrb[0].mxu0
      %v3674 = vadd.f32 0.0, %v3673
      %3675 = vmatprep.mubr.f32.mxu0 0.0
      %3676 = vmatmul.mubr.f32.gmra.mrb[0].mxu0 %v3591
      %v3677 = vpop.f32.mrb[0].mxu0
      %v3678 = vadd.f32 0.0, %v3677
      %v3679 = vpop.f32.mrb[0].mxu0
      %v3680 = vadd.f32 0.0, %v3679
      %3681 = vdwg.mxu0
      %3682 = vmatprep.subr.mxu0 %v3552
      %3683 = vmatpush1.msra.mxu0 %v3551
      %3684 = vmatprep.subr.mxu0 %v3556
      %3685 = vmatpush1.msra.mxu0 %v3555
      %3686 = vmatprep.subr.mxu0 %v3560
      %3687 = vmatpush1.msra.mxu0 %v3559
      %3688 = vmatprep.subr.mxu0 %v3564
      %3689 = vmatpush1.msra.mxu0 %v3563
      %3690 = vmatprep.subr.mxu0 %v3568
      %3691 = vmatpush1.msra.mxu0 %v3567
      %3692 = vmatprep.subr.mxu0 %v3572
      %3693 = vmatpush1.msra.mxu0 %v3571
      %3694 = vmatprep.subr.mxu0 %v3576
      %3695 = vmatpush1.msra.mxu0 %v3575
      %3696 = vmatprep.subr.mxu0 %v3580
      %3697 = vmatpush1.msra.mxu0 %v3579
      %3698 = vmatprep.subr.mxu0 0.0
      %3699 = vmatpush1.msra.mxu0 0.0
      %3700 = vmatprep.subr.mxu0 0.0
      %3701 = vmatpush1.msra.mxu0 0.0
      %3702 = vmatprep.subr.mxu0 0.0
      %3703 = vmatpush1.msra.mxu0 0.0
      %3704 = vmatprep.subr.mxu0 0.0
      %3705 = vmatpush1.msra.mxu0 0.0
      %3706 = vmatprep.subr.mxu0 0.0
      %3707 = vmatpush1.msra.mxu0 0.0
      %3708 = vmatprep.subr.mxu0 0.0
      %3709 = vmatpush1.msra.mxu0 0.0
      %3710 = vmatprep.subr.mxu0 0.0
      %3711 = vmatpush1.msra.mxu0 0.0
      %3712 = vmatprep.subr.mxu0 0.0
      %3713 = vmatpush1.msra.mxu0 0.0
      %3714 = vmatprep.subr.mxu0 0.0
      %3715 = vmatpush1.msra.mxu0 0.0
      %3716 = vmatprep.subr.mxu0 0.0
      %3717 = vmatpush1.msra.mxu0 0.0
      %3718 = vmatprep.subr.mxu0 0.0
      %3719 = vmatpush1.msra.mxu0 0.0
      %3720 = vmatprep.subr.mxu0 0.0
      %3721 = vmatpush1.msra.mxu0 0.0
      %3722 = vmatprep.subr.mxu0 0.0
      %3723 = vmatpush1.msra.mxu0 0.0
      %3724 = vmatprep.subr.mxu0 0.0
      %3725 = vmatpush1.msra.mxu0 0.0
      %3726 = vmatprep.subr.mxu0 0.0
      %3727 = vmatpush1.msra.mxu0 0.0
      %3728 = vmatprep.subr.mxu0 0.0
      %3729 = vmatpush1.msra.mxu0 0.0
      %3730 = vmatprep.subr.mxu0 0.0
      %3731 = vmatpush1.msra.mxu0 0.0
      %3732 = vmatprep.subr.mxu0 0.0
      %3733 = vmatpush1.msra.mxu0 0.0
      %3734 = vmatprep.subr.mxu0 0.0
      %3735 = vmatpush1.msra.mxu0 0.0
      %3736 = vmatprep.subr.mxu0 0.0
      %3737 = vmatpush1.msra.mxu0 0.0
      %3738 = vmatprep.subr.mxu0 0.0
      %3739 = vmatpush1.msra.mxu0 0.0
      %3740 = vmatprep.subr.mxu0 0.0
      %3741 = vmatpush1.msra.mxu0 0.0
      %3742 = vmatprep.subr.mxu0 0.0
      %3743 = vmatpush1.msra.mxu0 0.0
      %3744 = vmatprep.subr.mxu0 0.0
      %3745 = vmatpush1.msra.mxu0 0.0
      %3746 = vmatprep.mubr.f32.mxu0 0.0
      %3747 = vmatmul.mubr.f32.gmra.mrb[0].mxu0 %v3582
      %v3748 = vpop.f32.mrb[0].mxu0
      %v3749 = vadd.f32 0.0, %v3748
      %v3750 = vpop.f32.mrb[0].mxu0
      %v3751 = vadd.f32 0.0, %v3750
      %3752 = vmatprep.mubr.f32.mxu0 0.0
      %3753 = vmatmul.mubr.f32.gmra.mrb[0].mxu0 %v3585
      %v3754 = vpop.f32.mrb[0].mxu0
      %v3755 = vadd.f32 0.0, %v3754
      %v3756 = vpop.f32.mrb[0].mxu0
      %v3757 = vadd.f32 0.0, %v3756
      %3758 = vmatprep.mubr.f32.mxu0 0.0
      %3759 = vmatmul.mubr.f32.gmra.mrb[0].mxu0 %v3588
      %v3760 = vpop.f32.mrb[0].mxu0
      %v3761 = vadd.f32 0.0, %v3760
      %v3762 = vpop.f32.mrb[0].mxu0
      %v3763 = vadd.f32 0.0, %v3762
      %3764 = vmatprep.mubr.f32.mxu0 0.0
      %3765 = vmatmul.mubr.f32.gmra.mrb[0].mxu0 %v3591
      %v3766 = vpop.f32.mrb[0].mxu0
      %v3767 = vadd.f32 0.0, %v3766
      %v3768 = vpop.f32.mrb[0].mxu0
      %v3769 = vadd.f32 0.0, %v3768
      %3770 = vdwg.mxu0
      %3771 = vst [vmem:[#allocation4] sm:$0xff] %v3660
      %3772 = vst [vmem:[#allocation4 + $0x8] sm:$0xff] %v3662
      %3773 = vst [vmem:[#allocation4 + $0x10] sm:$0xff] %v3749
      %3774 = vst.msk [vmem:[#allocation4 + $0x18] sm:$0xff] %vm880, %v3751
      %3775 = vst [vmem:[#allocation4 + $0x20] sm:$0xff] %v3666
      %3776 = vst [vmem:[#allocation4 + $0x28] sm:$0xff] %v3668
      %3777 = vst [vmem:[#allocation4 + $0x30] sm:$0xff] %v3755
      %3778 = vst.msk [vmem:[#allocation4 + $0x38] sm:$0xff] %vm880, %v3757
      %3779 = vst [vmem:[#allocation4 + $0x40] sm:$0xff] %v3672
      %3780 = vst [vmem:[#allocation4 + $0x48] sm:$0xff] %v3674
      %3781 = vst [vmem:[#allocation4 + $0x50] sm:$0xff] %v3761
      %3782 = vst.msk [vmem:[#allocation4 + $0x58] sm:$0xff] %vm880, %v3763
      %3783 = vst [vmem:[#allocation4 + $0x60] sm:$0x7] %v3678
      %3784 = vst [vmem:[#allocation4 + $0x68] sm:$0x7] %v3680
      %3785 = vst [vmem:[#allocation4 + $0x70] sm:$0x7] %v3767
      %3786 = vst.msk [vmem:[#allocation4 + $0x78] sm:$0x7] %vm953, %v3769
      %v3787 = vld [vmem:[#allocation4] sm:$0x7]
      %v3788 = vld [vmem:[#allocation4 + $0x8] sm:$0x7]
      %v3789 = vld [vmem:[#allocation4 + $0x10] sm:$0x7]
      %v3790 = vld [vmem:[#allocation4 + $0x18] sm:$0x7]
      %v3791 = vadd.f32 %v3787, 0.0
      %v3792 = vadd.f32 %v3788, 0.0
      %v3793 = vadd.f32 %v3789, 0.0
      %v3794 = vadd.f32 %v3790, 0.0
      %v3795 = vld [vmem:[#allocation4] sm:$0x38]
      %v3796 = vld [vmem:[#allocation4 + $0x8] sm:$0x38]
      %v3797 = vld [vmem:[#allocation4 + $0x10] sm:$0x38]
      %v3798 = vld [vmem:[#allocation4 + $0x18] sm:$0x38]
      %v3803 = vrot.slane %v3795, 3
      %v3804 = vrot.slane %v3796, 3
      %v3805 = vrot.slane %v3797, 3
      %v3806 = vrot.slane %v3798, 3
      %3807 = vrot.lane.b32.xlu0 %v3803, 127
      %v3808 = vpop.permute.xlu0 %3807
      %3809 = vrot.lane.b32.xlu0 %v3804, 127
      %v3810 = vpop.permute.xlu0 %3809
      %3811 = vrot.lane.b32.xlu0 %v3805, 127
      %v3812 = vpop.permute.xlu0 %3811
      %3813 = vrot.lane.b32.xlu0 %v3806, 127
      %v3814 = vpop.permute.xlu0 %3813
      %v3815 = vsel %vm976, %v3808, %v3810
      %v3816 = vsel %vm976, %v3810, %v3812
      %v3817 = vsel %vm976, %v3812, %v3814
      %v3822 = vadd.f32 %v3791, %v3815
      %v3823 = vadd.f32 %v3792, %v3816
      %v3824 = vadd.f32 %v3793, %v3817
      %v3825 = vadd.f32 %v3794, %v3814
      %v3826 = vld [vmem:[#allocation4] sm:$0xc0]
      %v3827 = vld [vmem:[#allocation4 + $0x8] sm:$0xc0]
      %v3828 = vld [vmem:[#allocation4 + $0x10] sm:$0xc0]
      %v3829 = vld [vmem:[#allocation4 + $0x18] sm:$0xc0]
      %v3830 = vld [vmem:[#allocation4 + $0x20] sm:$0x1]
      %v3831 = vld [vmem:[#allocation4 + $0x28] sm:$0x1]
      %v3832 = vld [vmem:[#allocation4 + $0x30] sm:$0x1]
      %v3833 = vld [vmem:[#allocation4 + $0x38] sm:$0x1]
      %v3842 = vrot.slane %v3826, 6
      %v3843 = vrot.slane %v3830, 6
      %v3844 = vsel %vm997, %v3842, %v3843
      %v3845 = vrot.slane %v3827, 6
      %v3846 = vrot.slane %v3831, 6
      %v3847 = vsel %vm997, %v3845, %v3846
      %v3848 = vrot.slane %v3828, 6
      %v3849 = vrot.slane %v3832, 6
      %v3850 = vsel %vm997, %v3848, %v3849
      %v3851 = vrot.slane %v3829, 6
      %v3852 = vrot.slane %v3833, 6
      %v3853 = vsel %vm997, %v3851, %v3852
      %3854 = vrot.lane.b32.xlu0 %v3844, 126
      %v3855 = vpop.permute.xlu0 %3854
      %3856 = vrot.lane.b32.xlu0 %v3847, 126
      %v3857 = vpop.permute.xlu0 %3856
      %3858 = vrot.lane.b32.xlu0 %v3850, 126
      %v3859 = vpop.permute.xlu0 %3858
      %3860 = vrot.lane.b32.xlu0 %v3853, 126
      %v3861 = vpop.permute.xlu0 %3860
      %v3862 = vsel %vm1013, %v3855, %v3857
      %v3863 = vsel %vm1013, %v3857, %v3859
      %v3864 = vsel %vm1013, %v3859, %v3861
      %v3869 = vadd.f32 %v3822, %v3862
      %v3870 = vadd.f32 %v3823, %v3863
      %v3871 = vadd.f32 %v3824, %v3864
      %v3872 = vadd.f32 %v3825, %v3861
      %v3873 = vld [vmem:[#allocation4 + $0x20] sm:$0xe]
      %v3874 = vld [vmem:[#allocation4 + $0x28] sm:$0xe]
      %v3875 = vld [vmem:[#allocation4 + $0x30] sm:$0xe]
      %v3876 = vld [vmem:[#allocation4 + $0x38] sm:$0xe]
      %v3881 = vrot.slane %v3873, 1
      %v3882 = vrot.slane %v3874, 1
      %v3883 = vrot.slane %v3875, 1
      %v3884 = vrot.slane %v3876, 1
      %3885 = vrot.lane.b32.xlu0 %v3881, 106
      %v3886 = vpop.permute.xlu0 %3885
      %3887 = vrot.lane.b32.xlu0 %v3882, 106
      %v3888 = vpop.permute.xlu0 %3887
      %3889 = vrot.lane.b32.xlu0 %v3883, 106
      %v3890 = vpop.permute.xlu0 %3889
      %3891 = vrot.lane.b32.xlu0 %v3884, 106
      %v3892 = vpop.permute.xlu0 %3891
      %v3893 = vsel %vm1145, %v3886, %v3888
      %v3894 = vsel %vm1145, %v3888, %v3890
      %v3895 = vsel %vm1145, %v3890, %v3892
      %v3900 = vadd.f32 %v3869, %v3893
      %v3901 = vadd.f32 %v3870, %v3894
      %v3902 = vadd.f32 %v3871, %v3895
      %v3903 = vadd.f32 %v3872, %v3892
      %v3904 = vld [vmem:[#allocation4 + $0x20] sm:$0x70]
      %v3905 = vld [vmem:[#allocation4 + $0x28] sm:$0x70]
      %v3906 = vld [vmem:[#allocation4 + $0x30] sm:$0x70]
      %v3907 = vld [vmem:[#allocation4 + $0x38] sm:$0x70]
      %v3912 = vrot.slane %v3904, 4
      %v3913 = vrot.slane %v3905, 4
      %v3914 = vrot.slane %v3906, 4
      %v3915 = vrot.slane %v3907, 4
      %3916 = vrot.lane.b32.xlu0 %v3912, 105
      %v3917 = vpop.permute.xlu0 %3916
      %3918 = vrot.lane.b32.xlu0 %v3913, 105
      %v3919 = vpop.permute.xlu0 %3918
      %3920 = vrot.lane.b32.xlu0 %v3914, 105
      %v3921 = vpop.permute.xlu0 %3920
      %3922 = vrot.lane.b32.xlu0 %v3915, 105
      %v3923 = vpop.permute.xlu0 %3922
      %v3924 = vsel %vm1166, %v3917, %v3919
      %v3925 = vsel %vm1166, %v3919, %v3921
      %v3926 = vsel %vm1166, %v3921, %v3923
      %v3931 = vadd.f32 %v3900, %v3924
      %v3932 = vadd.f32 %v3901, %v3925
      %v3933 = vadd.f32 %v3902, %v3926
      %v3934 = vadd.f32 %v3903, %v3923
      %v3935 = vld [vmem:[#allocation4 + $0x20] sm:$0x80]
      %v3936 = vld [vmem:[#allocation4 + $0x28] sm:$0x80]
      %v3937 = vld [vmem:[#allocation4 + $0x30] sm:$0x80]
      %v3938 = vld [vmem:[#allocation4 + $0x38] sm:$0x80]
      %v3939 = vld [vmem:[#allocation4 + $0x40] sm:$0x3]
      %v3940 = vld [vmem:[#allocation4 + $0x48] sm:$0x3]
      %v3941 = vld [vmem:[#allocation4 + $0x50] sm:$0x3]
      %v3942 = vld [vmem:[#allocation4 + $0x58] sm:$0x3]
      %v3951 = vrot.slane %v3935, 7
      %v3952 = vrot.slane %v3939, 7
      %v3953 = vsel %vm1082, %v3951, %v3952
      %v3954 = vrot.slane %v3936, 7
      %v3955 = vrot.slane %v3940, 7
      %v3956 = vsel %vm1082, %v3954, %v3955
      %v3957 = vrot.slane %v3937, 7
      %v3958 = vrot.slane %v3941, 7
      %v3959 = vsel %vm1082, %v3957, %v3958
      %v3960 = vrot.slane %v3938, 7
      %v3961 = vrot.slane %v3942, 7
      %v3962 = vsel %vm1082, %v3960, %v3961
      %3963 = vrot.lane.b32.xlu0 %v3953, 104
      %v3964 = vpop.permute.xlu0 %3963
      %3965 = vrot.lane.b32.xlu0 %v3956, 104
      %v3966 = vpop.permute.xlu0 %3965
      %3967 = vrot.lane.b32.xlu0 %v3959, 104
      %v3968 = vpop.permute.xlu0 %3967
      %3969 = vrot.lane.b32.xlu0 %v3962, 104
      %v3970 = vpop.permute.xlu0 %3969
      %v3971 = vsel %vm1190, %v3964, %v3966
      %v3972 = vsel %vm1190, %v3966, %v3968
      %v3973 = vsel %vm1190, %v3968, %v3970
      %v3978 = vadd.f32 %v3931, %v3971
      %v3979 = vadd.f32 %v3932, %v3972
      %v3980 = vadd.f32 %v3933, %v3973
      %v3981 = vadd.f32 %v3934, %v3970
      %v3982 = vld [vmem:[#allocation4 + $0x40] sm:$0x1c]
      %v3983 = vld [vmem:[#allocation4 + $0x48] sm:$0x1c]
      %v3984 = vld [vmem:[#allocation4 + $0x50] sm:$0x1c]
      %v3985 = vld [vmem:[#allocation4 + $0x58] sm:$0x1c]
      %v3990 = vrot.slane %v3982, 2
      %v3991 = vrot.slane %v3983, 2
      %v3992 = vrot.slane %v3984, 2
      %v3993 = vrot.slane %v3985, 2
      %3994 = vrot.lane.b32.xlu0 %v3990, 84
      %v3995 = vpop.permute.xlu0 %3994
      %3996 = vrot.lane.b32.xlu0 %v3991, 84
      %v3997 = vpop.permute.xlu0 %3996
      %3998 = vrot.lane.b32.xlu0 %v3992, 84
      %v3999 = vpop.permute.xlu0 %3998
      %4000 = vrot.lane.b32.xlu0 %v3993, 84
      %v4001 = vpop.permute.xlu0 %4000
      %v4002 = vsel %vm1339, %v3995, %v3997
      %v4003 = vsel %vm1339, %v3997, %v3999
      %v4004 = vsel %vm1339, %v3999, %v4001
      %v4009 = vadd.f32 %v3978, %v4002
      %v4010 = vadd.f32 %v3979, %v4003
      %v4011 = vadd.f32 %v3980, %v4004
      %v4012 = vadd.f32 %v3981, %v4001
      %v4013 = vld [vmem:[#allocation4 + $0x40] sm:$0xe0]
      %v4014 = vld [vmem:[#allocation4 + $0x48] sm:$0xe0]
      %v4015 = vld [vmem:[#allocation4 + $0x50] sm:$0xe0]
      %v4016 = vld [vmem:[#allocation4 + $0x58] sm:$0xe0]
      %v4021 = vrot.slane %v4013, 5
      %v4022 = vrot.slane %v4014, 5
      %v4023 = vrot.slane %v4015, 5
      %v4024 = vrot.slane %v4016, 5
      %4025 = vrot.lane.b32.xlu0 %v4021, 83
      %v4026 = vpop.permute.xlu0 %4025
      %4027 = vrot.lane.b32.xlu0 %v4022, 83
      %v4028 = vpop.permute.xlu0 %4027
      %4029 = vrot.lane.b32.xlu0 %v4023, 83
      %v4030 = vpop.permute.xlu0 %4029
      %4031 = vrot.lane.b32.xlu0 %v4024, 83
      %v4032 = vpop.permute.xlu0 %4031
      %v4033 = vsel %vm1369, %v4026, %v4028
      %v4034 = vsel %vm1369, %v4028, %v4030
      %v4035 = vsel %vm1369, %v4030, %v4032
      %v4040 = vadd.f32 %v4009, %v4033
      %v4041 = vadd.f32 %v4010, %v4034
      %v4042 = vadd.f32 %v4011, %v4035
      %v4043 = vadd.f32 %v4012, %v4032
      %v4044 = vld [vmem:[#allocation4 + $0x60] sm:$0x7]
      %v4045 = vld [vmem:[#allocation4 + $0x68] sm:$0x7]
      %v4046 = vld [vmem:[#allocation4 + $0x70] sm:$0x7]
      %v4047 = vld [vmem:[#allocation4 + $0x78] sm:$0x7]
      %4052 = vrot.lane.b32.xlu0 %v4044, 82
      %v4053 = vpop.permute.xlu0 %4052
      %4054 = vrot.lane.b32.xlu0 %v4045, 82
      %v4055 = vpop.permute.xlu0 %4054
      %4056 = vrot.lane.b32.xlu0 %v4046, 82
      %v4057 = vpop.permute.xlu0 %4056
      %4058 = vrot.lane.b32.xlu0 %v4047, 82
      %v4059 = vpop.permute.xlu0 %4058
      %v4060 = vsel %vm1395, %v4053, %v4055
      %v4061 = vsel %vm1395, %v4055, %v4057
      %v4062 = vsel %vm1395, %v4057, %v4059
      %v4067 = vadd.f32 %v4040, %v4060
      %v4068 = vadd.f32 %v4041, %v4061
      %v4069 = vadd.f32 %v4042, %v4062
      %v4070 = vadd.f32 %v4043, %v4059
      %v4073 = vcombine.low %v2422, %v2423
      %4075 = vst [vmem:[%s399] sm:$0x77] %v4073
      %vm4076 = vcmask 780288
      %4077 = vst.msk [vmem:[%s399 + $0x8] sm:$0x7] %vm4076, %v2424
      %v4081 = vcombine.low %v3542, %v3543
      %4082 = vrot.lane.b32.xlu0 %v4081, 105
      %v4083 = vpop.permute.xlu0 %4082
      %4084 = vrot.lane.b32.xlu0 %v3544, 105
      %v4085 = vpop.permute.xlu0 %4084
      %v4086 = vrot.slane %v4083, 4
      %v4087 = vrot.slane %v4085, 4
      %vm4088 = vcmask 1043456
      %v4089 = vsel %vm4088, %v4086, %v4087
      %v4090 = vsel %vm1166, %v4083, %v4089
      %4093 = vst [vmem:[%s404] sm:$0x77] %v4090
      %4094 = vst.msk [vmem:[%s404 + $0x8] sm:$0x7] %vm4076, %v4085
      %v4099 = vcombine.low %v4067, %v4068
      %v4100 = vcombine.low %v4069, %v4070
      %4101 = vrot.lane.b32.xlu0 %v4099, 82
      %v4102 = vpop.permute.xlu0 %4101
      %4103 = vrot.lane.b32.xlu0 %v4100, 82
      %v4104 = vpop.permute.xlu0 %4103
      %v4105 = vrot.slane %v4102, 4
      %v4106 = vrot.slane %v4104, 4
      %v4107 = vsel %vm4088, %v4105, %v4106
      %v4108 = vsel %vm1395, %v4102, %v4107
      %v4109 = vsel %vm1395, %v4104, %v4106
      %4112 = vst [vmem:[%s409] sm:$0x77] %v4108
      %4113 = vst.msk [vmem:[%s409 + $0x8] sm:$0x7] %vm4076, %v4109
      %4114 = vrot.lane.b32.xlu0 %v3542, 105
      %v4115 = vpop.permute.xlu0 %4114
      %4116 = vrot.lane.b32.xlu0 %v3543, 105
      %v4117 = vpop.permute.xlu0 %4116
      %v4118 = vsel %vm1166, %v4115, %v4117
      %v4119 = vsel %vm1166, %v4117, %v4085
      %v4122 = vadd.f32 %v2422, %v4118
      %v4123 = vadd.f32 %v2423, %v4119
      %v4124 = vadd.f32 %v2424, %v4085
      %4125 = vrot.lane.b32.xlu0 %v4067, 82
      %v4126 = vpop.permute.xlu0 %4125
      %4127 = vrot.lane.b32.xlu0 %v4068, 82
      %v4128 = vpop.permute.xlu0 %4127
      %4129 = vrot.lane.b32.xlu0 %v4069, 82
      %v4130 = vpop.permute.xlu0 %4129
      %4131 = vrot.lane.b32.xlu0 %v4070, 82
      %v4132 = vpop.permute.xlu0 %4131
      %v4133 = vsel %vm1395, %v4126, %v4128
      %v4134 = vsel %vm1395, %v4128, %v4130
      %v4135 = vsel %vm1395, %v4130, %v4132
      %v4139 = vadd.f32 %v4122, %v4133
      %v4140 = vadd.f32 %v4123, %v4134
      %v4141 = vadd.f32 %v4124, %v4135
      %v4144 = vcombine.low %v4139, %v4140
      %4146 = vst [vmem:[%s394] sm:$0x77] %v4144
      %4147 = vst.msk [vmem:[%s394 + $0x8] sm:$0x7] %vm4076, %v4141
      %p4148 = scmp.lt.s32.totalorder %s21, 1
      %s4149 = scalar_select %p4148, %s21, 1
      %s4150 = smul.addr %s4149, 3
      %s4151 = smul.addr %s4150, 4
      %s4152 = scalar_lea.vmem %s6, %s4151
      %p4153 = scmp.lt.s32.totalorder %s21, 1
      %s4154 = scalar_select %p4153, %s21, 1
      %s4155 = smul.addr %s4154, 3
      %s4156 = smul.addr %s4155, 4
      %s4157 = scalar_lea.vmem %s7, %s4156
      %p4158 = scmp.lt.s32.totalorder %s21, 1
      %s4159 = scalar_select %p4158, %s21, 1
      %s4160 = smul.addr %s4159, 3
      %s4161 = smul.addr %s4160, 4
      %s4162 = scalar_lea.vmem %s8, %s4161
      %p4163 = scmp.lt.s32.totalorder %s21, 1
      %s4164 = scalar_select %p4163, %s21, 1
      %s4165 = smul.addr %s4164, 3
      %s4166 = smul.addr %s4165, 4
      %s4167 = scalar_lea.vmem %s9, %s4166
      // Predicated region
      $region45: #{decoder_forward.1} parent=43 // pred_check
        %p4168 = pneg %p180
      $region46: #{decoder_forward.1} parent=43 // pred_check_branch
        %4170 = sbr.rel (%p4168) target = $region48
      $region47: #{decoder_forward.1} parent=43 // pred_region
        _
      $region48: #{decoder_forward.1} parent=43 // pred_fallthru
        _
      // Predicated region
      $region49: #{decoder_forward.1} parent=43 // pred_check
        %p4171 = pneg %p206
      $region50: #{decoder_forward.1} parent=43 // pred_check_branch
        %4173 = sbr.rel (%p4171) target = $region52
      $region51: #{decoder_forward.1} parent=43 // pred_region
        _
      $region52: #{decoder_forward.1} parent=43 // pred_fallthru
        _
      // Predicated region
      $region53: #{decoder_forward.1} parent=43 // pred_check
        %p4174 = pneg %p232
      $region54: #{decoder_forward.1} parent=43 // pred_check_branch
        %4176 = sbr.rel (%p4174) target = $region56
      $region55: #{decoder_forward.1} parent=43 // pred_region
        _
      $region56: #{decoder_forward.1} parent=43 // pred_fallthru
        _
      // Predicated region
      $region57: #{decoder_forward.1} parent=43 // pred_check
        %p4177 = pneg %p258
      $region58: #{decoder_forward.1} parent=43 // pred_check_branch
        %4179 = sbr.rel (%p4177) target = $region60
      $region59: #{decoder_forward.1} parent=43 // pred_region
        _
      $region60: #{decoder_forward.1} parent=43 // pred_fallthru
        _
    $region44: #{decoder_forward.1} parent=5 // pred_fallthru
      _
    %p4180 = scmp.le.s32.totalorder 2, %s16
    // Predicated region
    $region61: #{decoder_forward.1} parent=5 // pred_check
      %p4181 = pneg %p4180
    $region62: #{decoder_forward.1} parent=5 // pred_check_branch
      %4183 = sbr.rel (%p4181) target = $region64
    $region63: #{decoder_forward.1} parent=5 // pred_region
      %s4184 = ssub.s32 %s16, 2
      // Predicated region
      $region65: #{decoder_forward.1} parent=63 // pred_check
        %p4185 = pneg %p186
      $region66: #{decoder_forward.1} parent=63 // pred_check_branch
        %4187 = sbr.rel (%p4185) target = $region68
      $region67: #{decoder_forward.1} parent=63 // pred_region
        %p4188 = scmp.lt.s32.totalorder %s22, 1
        %s4189 = scalar_select %p4188, %s22, 1
        %s4190 = smul.addr %s4189, 3
        %s4191 = smul.addr %s4190, 4
        %s4192 = scalar_lea.vmem %s6, %s4191
      $region68: #{decoder_forward.1} parent=63 // pred_fallthru
        _
      // Predicated region
      $region69: #{decoder_forward.1} parent=63 // pred_check
        %p4193 = pneg %p212
      $region70: #{decoder_forward.1} parent=63 // pred_check_branch
        %4195 = sbr.rel (%p4193) target = $region72
      $region71: #{decoder_forward.1} parent=63 // pred_region
        %p4196 = scmp.lt.s32.totalorder %s22, 1
        %s4197 = scalar_select %p4196, %s22, 1
        %s4198 = smul.addr %s4197, 3
        %s4199 = smul.addr %s4198, 4
        %s4200 = scalar_lea.vmem %s7, %s4199
      $region72: #{decoder_forward.1} parent=63 // pred_fallthru
        _
      // Predicated region
      $region73: #{decoder_forward.1} parent=63 // pred_check
        %p4201 = pneg %p238
      $region74: #{decoder_forward.1} parent=63 // pred_check_branch
        %4203 = sbr.rel (%p4201) target = $region76
      $region75: #{decoder_forward.1} parent=63 // pred_region
        %p4204 = scmp.lt.s32.totalorder %s22, 1
        %s4205 = scalar_select %p4204, %s22, 1
        %s4206 = smul.addr %s4205, 3
        %s4207 = smul.addr %s4206, 4
        %s4208 = scalar_lea.vmem %s8, %s4207
      $region76: #{decoder_forward.1} parent=63 // pred_fallthru
        _
      // Predicated region
      $region77: #{decoder_forward.1} parent=63 // pred_check
        %p4209 = pneg %p264
      $region78: #{decoder_forward.1} parent=63 // pred_check_branch
        %4211 = sbr.rel (%p4209) target = $region80
      $region79: #{decoder_forward.1} parent=63 // pred_region
        %p4212 = scmp.lt.s32.totalorder %s22, 1
        %s4213 = scalar_select %p4212, %s22, 1
        %s4214 = smul.addr %s4213, 3
        %s4215 = smul.addr %s4214, 4
        %s4216 = scalar_lea.vmem %s9, %s4215
      $region80: #{decoder_forward.1} parent=63 // pred_fallthru
        _
    $region64: #{decoder_forward.1} parent=5 // pred_fallthru
      _
  $region6: #{decoder_forward.1} parent=0 // loop_footer
    %s20 = sadd.s32 1, %s16
  $region7: #{decoder_forward.1} parent=0 // loop_footer_branch
    %15 = sbr.rel target = $region3
  $region8: #{decoder_forward.1} parent=0 // loop_exit
    _

</llo_original>
